<compile_context>
chip_gen: v6e
topology: v6e:2x2x1
jax: 0.10.0
libtpu: 0.0.40
codegen_flags: <defaults>
</compile_context>

<pallas_src>
import math

import numpy as np
import jax
import jax.numpy as jnp
from jax.experimental import pallas as pl
from jax.experimental.pallas import tpu as pltpu


# ---------------------------------------------------------------------------
# in-kernel helpers
# ---------------------------------------------------------------------------
def _mm(a, b, cd):
    """2-D matmul a @ b on the MXU: operands cast to compute dtype, f32 accumulate."""
    return jax.lax.dot_general(
        a.astype(cd), b.astype(cd),
        (((1,), (0,)), ((), ())),
        preferred_element_type=jnp.float32)


def _layer_norm(x, gamma, beta, eps=1e-5):
    x = x.astype(jnp.float32)
    mu = jnp.mean(x, axis=-1, keepdims=True)
    xc = x - mu
    var = jnp.mean(xc * xc, axis=-1, keepdims=True)
    return xc * jax.lax.rsqrt(var + eps) * gamma + beta


def _mha_block(q2d, k2d, v2d, wq, bq, wk, bk, wv, bv, wo, bo,
               mask_bias, bb, lq, lk, nhead, cd):
    """PyTorch-style nn.MultiheadAttention over a block of `bb` batch elements.

    q2d: (bb*lq, E)   k2d, v2d: (bb*lk, E)
    wq/wk/wv/wo: (E, E) pre-transposed for x @ W;  biases: (1, E) f32
    mask_bias:  (bb, 1, lk) additive f32 bias (0 / -1e9) or None.
    """
    E = q2d.shape[-1]
    Dh = E // nhead
    scale = 1.0 / math.sqrt(Dh)

    # Projections folded over the whole batch block (M = bb * L).
    qp = (_mm(q2d, wq, cd) + bq).reshape(bb, lq, E)
    kp = (_mm(k2d, wk, cd) + bk).reshape(bb, lk, E)
    vp = (_mm(v2d, wv, cd) + bv).reshape(bb, lk, E)

    ctx = []
    for h in range(nhead):                       # static unroll over heads
        lo = h * Dh
        qh = qp[:, :, lo:lo + Dh].astype(cd)
        kh = kp[:, :, lo:lo + Dh].astype(cd)
        vh = vp[:, :, lo:lo + Dh].astype(cd)
        # scores / softmax in f32, batched over the batch block (leading dim).
        s = jnp.einsum('bqd,bkd->bqk', qh, kh,
                       preferred_element_type=jnp.float32) * scale
        if mask_bias is not None:
            s = s + mask_bias
        s = s - jnp.max(s, axis=-1, keepdims=True)
        p = jnp.exp(s)
        p = p * pl.reciprocal(jnp.sum(p, axis=-1, keepdims=True), approx=True)
        ctx.append(jnp.einsum('bqk,bkd->bqd', p.astype(cd), vh,
                              preferred_element_type=jnp.float32))

    # Single output projection over the concatenated head outputs (K = E).
    ctx = jnp.concatenate(ctx, axis=-1).reshape(bb * lq, E)
    return _mm(ctx, wo, cd) + bo


# ---------------------------------------------------------------------------
# kernel factory (specialized to the set of inputs that actually exist)
# ---------------------------------------------------------------------------
def _make_kernel(names, *, nhead, bb, lq, lt, lv, cd, qv_from_qpos):
    names = tuple(names)

    def kernel(*refs):
        env = dict(zip(names, refs))
        out_ref = refs[-1]
        f32 = jnp.float32

        def attn_w(prefix):
            return tuple(env[prefix + s][...] for s in
                         ('wq', 'bq', 'wk', 'bk', 'wv', 'bv', 'wo', 'bo'))

        # ---- stage 1: attend to text memory --------------------------------
        query = env['q'][...]                              # (bb*lq, E) compute dtype
        q_t = (query + env['qpos'][...]) if 'qpos' in env else query
        tmem = env['tmem'][...]
        k_t = (tmem + env['tpos'][...]) if 'tpos' in env else tmem
        tmask = env['tmask'][...] if 'tmask' in env else None
        text_info = _mha_block(q_t, k_t, tmem, *attn_w('t_'),
                               tmask, bb, lq, lt, nhead, cd)
        inter = _layer_norm(text_info, env['g1'][...], env['be1'][...])  # norm1

        # ---- stage 2: attend to visual memory with the text-informed query -
        if 'qvpos' in env:
            qv = env['qvpos'][...]
        elif qv_from_qpos:
            qv = env['qpos'][...]
        else:
            qv = None
        q_v = (inter + qv.astype(f32)) if qv is not None else inter
        vk = env['vk'][...]
        vv = env['vv'][...] if 'vv' in env else vk
        k_v = (vk + env['vpos'][...]) if 'vpos' in env else vk
        vmask = env['vmask'][...] if 'vmask' in env else None
        visual_info = _mha_block(q_v, k_v, vv, *attn_w('v_'),
                                 vmask, bb, lq, lv, nhead, cd)
        x = _layer_norm(query.astype(f32) + visual_info,
                        env['g2'][...], env['be2'][...])                 # norm2

        # ---- stage 3: FFN (relu) --------------------------------------------
        h1 = jnp.maximum(_mm(x, env['w1'][...], cd) + env['b1'][...], 0.0)
        ffn = _mm(h1, env['w2'][...], cd) + env['b2'][...]
        out_ref[...] = _layer_norm(x + ffn, env['g3'][...],
                                   env['be3'][...]).astype(out_ref.dtype)  # norm3

    return kernel


def _pick_batch_block(B, seq_lens, max_bb):
    """Largest batch block <= max_bb dividing B that keeps row blocks 8-sublane
    aligned; prefer leaving >= 2 grid steps so v7x's two TensorCores get work."""
    best_any = None
    for bb in range(min(B, max_bb), 0, -1):
        if B % bb != 0:
            continue
        aligned = (bb == B) or all((bb * L) % 8 == 0 for L in seq_lens)
        if not aligned:
            continue
        if best_any is None:
            best_any = bb
        if bb >= 2 and B // bb >= 2:
            return bb
    return best_any if best_any is not None else B


# ---------------------------------------------------------------------------
# wrapper (PyTorch (L, B, E) layout at the boundary)
# ---------------------------------------------------------------------------
def vltvg_decoder_layer(query, query_pos=None, text_memory=None,
                        text_memory_key_padding_mask=None, text_pos=None,
                        visual_memory=None, visual_memory_key_padding_mask=None,
                        visual_pos=None, text_informed_query_pos=None,
                        *, params, nhead, img_feat_chunk_num=1,
                        compute_dtype=jnp.bfloat16, max_batch_block=8):
    f32 = jnp.float32
    cd = compute_dtype
    Lq, B, E = query.shape
    assert E % nhead == 0, "d_model must be divisible by nhead"

    if visual_memory is not None and img_feat_chunk_num > 1:
        chunks = jnp.split(visual_memory, img_feat_chunk_num, axis=-1)
        visual_k_src, visual_v_src = chunks[1], chunks[0]
    else:
        visual_k_src = visual_memory
        visual_v_src = None             # same tensor as K -> do not DMA it twice

    Lt = text_memory.shape[0]
    Lv = visual_k_src.shape[0]

    bb = _pick_batch_block(B, (Lq, Lt, Lv), max_batch_block)
    grid = (B // bb,)

    def to_rows(x_lbe):                 # (L, B, E) -> (B*L, E) in compute dtype
        L = x_lbe.shape[0]
        return jnp.transpose(x_lbe, (1, 0, 2)).reshape(B * L, E).astype(cd)

    def mask_bias(kpm, L):              # (B, L) bool -> additive f32 (B, 1, L)
        return jnp.where(kpm, -1e9, 0.0).astype(f32).reshape(B, 1, L)

    arrays, names, specs = [], [], []

    def add_rows(name, x_lbe):
        L = x_lbe.shape[0]
        arrays.append(to_rows(x_lbe))
        names.append(name)
        specs.append(pl.BlockSpec((bb * L, E), lambda i: (i, 0)))

    def add_mask(name, kpm, L):
        arrays.append(mask_bias(kpm, L))
        names.append(name)
        specs.append(pl.BlockSpec((bb, 1, L), lambda i: (i, 0, 0)))

    def add_full(name, arr):
        arrays.append(arr)
        names.append(name)
        specs.append(pl.BlockSpec(arr.shape, lambda i, _nd=arr.ndim: (0,) * _nd))

    # ---- per-batch-block activations (only the ones that actually exist) ----
    add_rows('q', query)
    if query_pos is not None:
        add_rows('qpos', query_pos)
    add_rows('tmem', text_memory)
    if text_pos is not None:
        add_rows('tpos', text_pos)
    add_rows('vk', visual_k_src)
    if visual_v_src is not None:
        add_rows('vv', visual_v_src)
    if visual_pos is not None:
        add_rows('vpos', visual_pos)
    if text_informed_query_pos is not None:
        add_rows('qvpos', text_informed_query_pos)
        qv_from_qpos = False
    else:
        qv_from_qpos = query_pos is not None     # reuse the 'qpos' block, no extra DMA
    if text_memory_key_padding_mask is not None:
        add_mask('tmask', text_memory_key_padding_mask, Lt)
    if visual_memory_key_padding_mask is not None:
        add_mask('vmask', visual_memory_key_padding_mask, Lv)

    # ---- weights: pre-transposed to x @ W form, biases pre-split (done once by
    # XLA outside the kernel), so the kernel never slices at non-128 offsets. ----
    p = params

    def attn_weights(prefix, in_w, in_b, out_w, out_b):
        b = in_b.reshape(-1).astype(f32)
        return [
            (prefix + 'wq', in_w[0:E, :].T.astype(cd)),
            (prefix + 'bq', b[0:E].reshape(1, E)),
            (prefix + 'wk', in_w[E:2 * E, :].T.astype(cd)),
            (prefix + 'bk', b[E:2 * E].reshape(1, E)),
            (prefix + 'wv', in_w[2 * E:, :].T.astype(cd)),
            (prefix + 'bv', b[2 * E:].reshape(1, E)),
            (prefix + 'wo', out_w.T.astype(cd)),
            (prefix + 'bo', out_b.reshape(1, E).astype(f32)),
        ]

    weight_items = (
        attn_weights('t_', p['t_in_w'], p['t_in_b'], p['t_out_w'], p['t_out_b'])
        + attn_weights('v_', p['v_in_w'], p['v_in_b'], p['v_out_w'], p['v_out_b'])
        + [('w1', p['w1'].T.astype(cd)),
           ('b1', p['b1'].reshape(1, -1).astype(f32)),
           ('w2', p['w2'].T.astype(cd)),
           ('b2', p['b2'].reshape(1, -1).astype(f32)),
           ('g1', p['g1'].reshape(1, E).astype(f32)),
           ('be1', p['be1'].reshape(1, E).astype(f32)),
           ('g2', p['g2'].reshape(1, E).astype(f32)),
           ('be2', p['be2'].reshape(1, E).astype(f32)),
           ('g3', p['g3'].reshape(1, E).astype(f32)),
           ('be3', p['be3'].reshape(1, E).astype(f32))]
    )
    # NOTE: for production-size weights, add pipeline_mode=pl.Buffered(1) to these
    # constant-index BlockSpecs (never re-fetched) to halve their VMEM footprint on
    # v7x; at these sizes the default double buffering is harmless.
    for nm, arr in weight_items:
        add_full(nm, arr)

    kernel = _make_kernel(tuple(names), nhead=nhead, bb=bb,
                          lq=Lq, lt=Lt, lv=Lv, cd=cd,
                          qv_from_qpos=qv_from_qpos)

    out2d = pl.pallas_call(
        kernel,
        out_shape=jax.ShapeDtypeStruct((B * Lq, E), f32),
        grid=grid,
        in_specs=specs,
        out_specs=pl.BlockSpec((bb * Lq, E), lambda i: (i, 0)),
        compiler_params=pltpu.CompilerParams(
            dimension_semantics=("parallel",)),
    )(*arrays)

    # back to PyTorch's (Lq, B, E) layout
    return jnp.transpose(out2d.reshape(B, Lq, E), (1, 0, 2))


# ---------------------------------------------------------------------------
# pure-JAX reference (mirrors the PyTorch forward, eval mode)
# ---------------------------------------------------------------------------
def reference_forward(query, query_pos, text_memory, text_kpm, text_pos,
                      visual_memory, visual_kpm, visual_pos, tiq_pos,
                      params, nhead, img_feat_chunk_num=1):
    p = params

    def with_pos(t, pos):
        return t if pos is None else t + pos

    def mha(q, k, v, in_w, in_b, out_w, out_b, kpm):
        Lq, B, E = q.shape
        Lk = k.shape[0]
        Dh = E // nhead
        in_b = in_b.reshape(-1)
        out_b = out_b.reshape(-1)
        qp = q @ in_w[:E].T + in_b[:E]
        kp = k @ in_w[E:2 * E].T + in_b[E:2 * E]
        vp = v @ in_w[2 * E:].T + in_b[2 * E:]
        qp = qp.reshape(Lq, B, nhead, Dh).transpose(1, 2, 0, 3)
        kp = kp.reshape(Lk, B, nhead, Dh).transpose(1, 2, 0, 3)
        vp = vp.reshape(Lk, B, nhead, Dh).transpose(1, 2, 0, 3)
        s = jnp.einsum('bhqd,bhkd->bhqk', qp, kp) / math.sqrt(Dh)
        if kpm is not None:
            s = s + jnp.where(kpm, -1e9, 0.0)[:, None, None, :]
        attn = jax.nn.softmax(s, axis=-1)
        o = jnp.einsum('bhqk,bhkd->bhqd', attn, vp)
        o = o.transpose(2, 0, 1, 3).reshape(Lq, B, E)
        return o @ out_w.T + out_b

    def ln(x, g, b, eps=1e-5):
        g = g.reshape(-1)
        b = b.reshape(-1)
        mu = jnp.mean(x, axis=-1, keepdims=True)
        var = jnp.mean((x - mu) ** 2, axis=-1, keepdims=True)
        return (x - mu) / jnp.sqrt(var + eps) * g + b

    if visual_memory is not None and img_feat_chunk_num > 1:
        chunks = jnp.split(visual_memory, img_feat_chunk_num, axis=-1)
        vk, vv = chunks[1], chunks[0]
    else:
        vk = vv = visual_memory

    text_info = mha(with_pos(query, query_pos), with_pos(text_memory, text_pos),
                    text_memory, p['t_in_w'], p['t_in_b'],
                    p['t_out_w'], p['t_out_b'], text_kpm)
    inter = ln(text_info, p['g1'], p['be1'])
    qv_pos = tiq_pos if tiq_pos is not None else query_pos
    visual_info = mha(with_pos(inter, qv_pos), with_pos(vk, visual_pos),
                      vv, p['v_in_w'], p['v_in_b'],
                      p['v_out_w'], p['v_out_b'], visual_kpm)
    x = ln(query + visual_info, p['g2'], p['be2'])
    ffn = (jnp.maximum(x @ p['w1'].T + p['b1'].reshape(-1), 0.0)
           @ p['w2'].T + p['b2'].reshape(-1))
    return ln(x + ffn, p['g3'], p['be3'])


# ---------------------------------------------------------------------------
# deterministic parameter init (shapes from VltvgStyleDecoderLayer.__init__)
# ---------------------------------------------------------------------------
def init_params(key, d_model, dim_feedforward):
    E, dff = d_model, dim_feedforward
    ks = jax.random.split(key, 18)

    def w(kk, shape, fan_in):
        return jax.random.normal(kk, shape, jnp.float32) / math.sqrt(fan_in)

    return dict(
        t_in_w=w(ks[0], (3 * E, E), E),  t_in_b=w(ks[1], (1, 3 * E), E),
        t_out_w=w(ks[2], (E, E), E),     t_out_b=w(ks[3], (1, E), E),
        v_in_w=w(ks[4], (3 * E, E), E),  v_in_b=w(ks[5], (1, 3 * E), E),
        v_out_w=w(ks[6], (E, E), E),     v_out_b=w(ks[7], (1, E), E),
        w1=w(ks[8], (dff, E), E),        b1=w(ks[9], (1, dff), E),
        w2=w(ks[10], (E, dff), dff),     b2=w(ks[11], (1, E), dff),
        g1=1.0 + 0.1 * jax.random.normal(ks[12], (1, E), jnp.float32),
        be1=0.1 * jax.random.normal(ks[13], (1, E), jnp.float32),
        g2=1.0 + 0.1 * jax.random.normal(ks[14], (1, E), jnp.float32),
        be2=0.1 * jax.random.normal(ks[15], (1, E), jnp.float32),
        g3=1.0 + 0.1 * jax.random.normal(ks[16], (1, E), jnp.float32),
        be3=0.1 * jax.random.normal(ks[17], (1, E), jnp.float32),
    )


if __name__ == "__main__":
    B, Lq, Lt, Lv = 4, 8, 8, 16
    d_model, nhead, dff = 32, 4, 64

    key = jax.random.PRNGKey(0)
    kparam, kdata = jax.random.split(key)
    params = init_params(kparam, d_model, dff)

    kq, kqp, ktm, ktp, kvm, kvp = jax.random.split(kdata, 6)
    query = jax.random.normal(kq, (Lq, B, d_model), jnp.float32)
    query_pos = jax.random.normal(kqp, (Lq, B, d_model), jnp.float32)
    text_memory = jax.random.normal(ktm, (Lt, B, d_model), jnp.float32)
    text_pos = jax.random.normal(ktp, (Lt, B, d_model), jnp.float32)
    visual_memory = jax.random.normal(kvm, (Lv, B, d_model), jnp.float32)
    visual_pos = jax.random.normal(kvp, (Lv, B, d_model), jnp.float32)

    text_kpm = (jnp.zeros((B, Lt), bool)
                .at[1, Lt - 1].set(True).at[1, Lt - 2].set(True)
                .at[3, Lt - 1].set(True))
    visual_kpm = (jnp.zeros((B, Lv), bool)
                  .at[0, Lv - 1].set(True)
                  .at[2, Lv - 3:].set(True))

    ref = reference_forward(query, query_pos, text_memory, text_kpm, text_pos,
                            visual_memory, visual_kpm, visual_pos, None,
                            params, nhead, img_feat_chunk_num=1)
    ref = jax.block_until_ready(ref)

    # f32 compute path: strict semantic check against the pure-JAX reference.
    out32 = vltvg_decoder_layer(
        query, query_pos=query_pos, text_memory=text_memory,
        text_memory_key_padding_mask=text_kpm, text_pos=text_pos,
        visual_memory=visual_memory, visual_memory_key_padding_mask=visual_kpm,
        visual_pos=visual_pos, text_informed_query_pos=None,
        params=params, nhead=nhead, img_feat_chunk_num=1,
        compute_dtype=jnp.float32)
    out32 = jax.block_until_ready(out32)
    assert out32.shape == (Lq, B, d_model)
    np.testing.assert_allclose(np.asarray(out32), np.asarray(ref),
                               rtol=1e-2, atol=1e-2)

    # default bf16 MXU path: loose sanity check (reduced-precision matmul inputs).
    out16 = vltvg_decoder_layer(
        query, query_pos=query_pos, text_memory=text_memory,
        text_memory_key_padding_mask=text_kpm, text_pos=text_pos,
        visual_memory=visual_memory, visual_memory_key_padding_mask=visual_kpm,
        visual_pos=visual_pos, text_informed_query_pos=None,
        params=params, nhead=nhead, img_feat_chunk_num=1,
        compute_dtype=jnp.bfloat16)
    out16 = jax.block_until_ready(out16)
    assert bool(jnp.all(jnp.isfinite(out16)))
    np.testing.assert_allclose(np.asarray(out16), np.asarray(ref),
                               rtol=2e-1, atol=2e-1)

    print("KERNEL_OK")
</pallas_src>

<mosaic_0001>
module attributes {stable_mosaic.version = 11 : i64} {
  func.func @kernel(%arg0: i32, %arg1: memref<16x32xf32, #tpu.memory_space<vmem>>, %arg2: memref<16x32xf32, #tpu.memory_space<vmem>>, %arg3: memref<16x32xf32, #tpu.memory_space<vmem>>, %arg4: memref<16x32xf32, #tpu.memory_space<vmem>>, %arg5: memref<32x32xf32, #tpu.memory_space<vmem>>, %arg6: memref<32x32xf32, #tpu.memory_space<vmem>>, %arg7: memref<2x1x8xf32, #tpu.memory_space<vmem>>, %arg8: memref<2x1x16xf32, #tpu.memory_space<vmem>>, %arg9: memref<32x32xf32, #tpu.memory_space<vmem>>, %arg10: memref<1x32xf32, #tpu.memory_space<vmem>>, %arg11: memref<32x32xf32, #tpu.memory_space<vmem>>, %arg12: memref<1x32xf32, #tpu.memory_space<vmem>>, %arg13: memref<32x32xf32, #tpu.memory_space<vmem>>, %arg14: memref<1x32xf32, #tpu.memory_space<vmem>>, %arg15: memref<32x32xf32, #tpu.memory_space<vmem>>, %arg16: memref<1x32xf32, #tpu.memory_space<vmem>>, %arg17: memref<32x32xf32, #tpu.memory_space<vmem>>, %arg18: memref<1x32xf32, #tpu.memory_space<vmem>>, %arg19: memref<32x32xf32, #tpu.memory_space<vmem>>, %arg20: memref<1x32xf32, #tpu.memory_space<vmem>>, %arg21: memref<32x32xf32, #tpu.memory_space<vmem>>, %arg22: memref<1x32xf32, #tpu.memory_space<vmem>>, %arg23: memref<32x32xf32, #tpu.memory_space<vmem>>, %arg24: memref<1x32xf32, #tpu.memory_space<vmem>>, %arg25: memref<32x64xf32, #tpu.memory_space<vmem>>, %arg26: memref<1x64xf32, #tpu.memory_space<vmem>>, %arg27: memref<64x32xf32, #tpu.memory_space<vmem>>, %arg28: memref<1x32xf32, #tpu.memory_space<vmem>>, %arg29: memref<1x32xf32, #tpu.memory_space<vmem>>, %arg30: memref<1x32xf32, #tpu.memory_space<vmem>>, %arg31: memref<1x32xf32, #tpu.memory_space<vmem>>, %arg32: memref<1x32xf32, #tpu.memory_space<vmem>>, %arg33: memref<1x32xf32, #tpu.memory_space<vmem>>, %arg34: memref<1x32xf32, #tpu.memory_space<vmem>>, %arg35: memref<16x32xf32, #tpu.memory_space<vmem>>) attributes {dimension_semantics = [#tpu.dimension_semantics<parallel>], iteration_bounds = array<i64: 2>, scalar_prefetch = 0 : i64, scratch_operands = 0 : i64, tpu.core_type = #tpu.core_type<tc>, window_params = [{transform_indices = @transform_0, window_bounds = array<i64: 16, 32>}, {transform_indices = @transform_1, window_bounds = array<i64: 16, 32>}, {transform_indices = @transform_2, window_bounds = array<i64: 16, 32>}, {transform_indices = @transform_3, window_bounds = array<i64: 16, 32>}, {transform_indices = @transform_4, window_bounds = array<i64: 32, 32>}, {transform_indices = @transform_5, window_bounds = array<i64: 32, 32>}, {transform_indices = @transform_6, window_bounds = array<i64: 2, 1, 8>}, {transform_indices = @transform_7, window_bounds = array<i64: 2, 1, 16>}, {pipeline_mode = #tpu.pipeline_mode<synchronous>, transform_indices = @transform_8, window_bounds = array<i64: 32, 32>}, {pipeline_mode = #tpu.pipeline_mode<synchronous>, transform_indices = @transform_9, window_bounds = array<i64: 1, 32>}, {pipeline_mode = #tpu.pipeline_mode<synchronous>, transform_indices = @transform_10, window_bounds = array<i64: 32, 32>}, {pipeline_mode = #tpu.pipeline_mode<synchronous>, transform_indices = @transform_11, window_bounds = array<i64: 1, 32>}, {pipeline_mode = #tpu.pipeline_mode<synchronous>, transform_indices = @transform_12, window_bounds = array<i64: 32, 32>}, {pipeline_mode = #tpu.pipeline_mode<synchronous>, transform_indices = @transform_13, window_bounds = array<i64: 1, 32>}, {pipeline_mode = #tpu.pipeline_mode<synchronous>, transform_indices = @transform_14, window_bounds = array<i64: 32, 32>}, {pipeline_mode = #tpu.pipeline_mode<synchronous>, transform_indices = @transform_15, window_bounds = array<i64: 1, 32>}, {pipeline_mode = #tpu.pipeline_mode<synchronous>, transform_indices = @transform_16, window_bounds = array<i64: 32, 32>}, {pipeline_mode = #tpu.pipeline_mode<synchronous>, transform_indices = @transform_17, window_bounds = array<i64: 1, 32>}, {pipeline_mode = #tpu.pipeline_mode<synchronous>, transform_indices = @transform_18, window_bounds = array<i64: 32, 32>}, {pipeline_mode = #tpu.pipeline_mode<synchronous>, transform_indices = @transform_19, window_bounds = array<i64: 1, 32>}, {pipeline_mode = #tpu.pipeline_mode<synchronous>, transform_indices = @transform_20, window_bounds = array<i64: 32, 32>}, {pipeline_mode = #tpu.pipeline_mode<synchronous>, transform_indices = @transform_21, window_bounds = array<i64: 1, 32>}, {pipeline_mode = #tpu.pipeline_mode<synchronous>, transform_indices = @transform_22, window_bounds = array<i64: 32, 32>}, {pipeline_mode = #tpu.pipeline_mode<synchronous>, transform_indices = @transform_23, window_bounds = array<i64: 1, 32>}, {pipeline_mode = #tpu.pipeline_mode<synchronous>, transform_indices = @transform_24, window_bounds = array<i64: 32, 64>}, {pipeline_mode = #tpu.pipeline_mode<synchronous>, transform_indices = @transform_25, window_bounds = array<i64: 1, 64>}, {pipeline_mode = #tpu.pipeline_mode<synchronous>, transform_indices = @transform_26, window_bounds = array<i64: 64, 32>}, {pipeline_mode = #tpu.pipeline_mode<synchronous>, transform_indices = @transform_27, window_bounds = array<i64: 1, 32>}, {pipeline_mode = #tpu.pipeline_mode<synchronous>, transform_indices = @transform_28, window_bounds = array<i64: 1, 32>}, {pipeline_mode = #tpu.pipeline_mode<synchronous>, transform_indices = @transform_29, window_bounds = array<i64: 1, 32>}, {pipeline_mode = #tpu.pipeline_mode<synchronous>, transform_indices = @transform_30, window_bounds = array<i64: 1, 32>}, {pipeline_mode = #tpu.pipeline_mode<synchronous>, transform_indices = @transform_31, window_bounds = array<i64: 1, 32>}, {pipeline_mode = #tpu.pipeline_mode<synchronous>, transform_indices = @transform_32, window_bounds = array<i64: 1, 32>}, {pipeline_mode = #tpu.pipeline_mode<synchronous>, transform_indices = @transform_33, window_bounds = array<i64: 1, 32>}, {transform_indices = @transform_34, window_bounds = array<i64: 16, 32>}]} {
    %c0 = arith.constant 0 : index
    %c0_0 = arith.constant 0 : index
    %0 = vector.load %arg1[%c0, %c0_0] : memref<16x32xf32, #tpu.memory_space<vmem>>, vector<16x32xf32>
    %c0_1 = arith.constant 0 : index
    %c0_2 = arith.constant 0 : index
    %1 = vector.load %arg2[%c0_1, %c0_2] : memref<16x32xf32, #tpu.memory_space<vmem>>, vector<16x32xf32>
    %2 = arith.addf %0, %1 : vector<16x32xf32>
    %c0_3 = arith.constant 0 : index
    %c0_4 = arith.constant 0 : index
    %3 = vector.load %arg3[%c0_3, %c0_4] : memref<16x32xf32, #tpu.memory_space<vmem>>, vector<16x32xf32>
    %c0_5 = arith.constant 0 : index
    %c0_6 = arith.constant 0 : index
    %4 = vector.load %arg4[%c0_5, %c0_6] : memref<16x32xf32, #tpu.memory_space<vmem>>, vector<16x32xf32>
    %5 = arith.addf %3, %4 : vector<16x32xf32>
    %c0_7 = arith.constant 0 : index
    %c0_8 = arith.constant 0 : index
    %c0_9 = arith.constant 0 : index
    %6 = vector.load %arg7[%c0_7, %c0_8, %c0_9] : memref<2x1x8xf32, #tpu.memory_space<vmem>>, vector<2x1x8xf32>
    %c0_10 = arith.constant 0 : index
    %c0_11 = arith.constant 0 : index
    %7 = vector.load %arg9[%c0_10, %c0_11] : memref<32x32xf32, #tpu.memory_space<vmem>>, vector<32x32xf32>
    %c0_12 = arith.constant 0 : index
    %c0_13 = arith.constant 0 : index
    %8 = vector.load %arg10[%c0_12, %c0_13] : memref<1x32xf32, #tpu.memory_space<vmem>>, vector<1x32xf32>
    %c0_14 = arith.constant 0 : index
    %c0_15 = arith.constant 0 : index
    %9 = vector.load %arg11[%c0_14, %c0_15] : memref<32x32xf32, #tpu.memory_space<vmem>>, vector<32x32xf32>
    %c0_16 = arith.constant 0 : index
    %c0_17 = arith.constant 0 : index
    %10 = vector.load %arg12[%c0_16, %c0_17] : memref<1x32xf32, #tpu.memory_space<vmem>>, vector<1x32xf32>
    %c0_18 = arith.constant 0 : index
    %c0_19 = arith.constant 0 : index
    %11 = vector.load %arg13[%c0_18, %c0_19] : memref<32x32xf32, #tpu.memory_space<vmem>>, vector<32x32xf32>
    %c0_20 = arith.constant 0 : index
    %c0_21 = arith.constant 0 : index
    %12 = vector.load %arg14[%c0_20, %c0_21] : memref<1x32xf32, #tpu.memory_space<vmem>>, vector<1x32xf32>
    %c0_22 = arith.constant 0 : index
    %c0_23 = arith.constant 0 : index
    %13 = vector.load %arg15[%c0_22, %c0_23] : memref<32x32xf32, #tpu.memory_space<vmem>>, vector<32x32xf32>
    %c0_24 = arith.constant 0 : index
    %c0_25 = arith.constant 0 : index
    %14 = vector.load %arg16[%c0_24, %c0_25] : memref<1x32xf32, #tpu.memory_space<vmem>>, vector<1x32xf32>
    %cst = arith.constant dense<0.000000e+00> : vector<16x32xf32>
    %15 = tpu.matmul %2, %7, %cst {dimension_numbers = #tpu.dot_dimension_numbers<[1], [0], [0], [1], [0, 0, 1, 1], [], []>} : vector<16x32xf32>, vector<32x32xf32>, vector<16x32xf32> -> vector<16x32xf32>
    %16 = vector.broadcast %8 : vector<1x32xf32> to vector<16x32xf32>
    %17 = arith.addf %15, %16 : vector<16x32xf32>
    %18 = vector.shape_cast %17 : vector<16x32xf32> to vector<2x8x32xf32>
    %cst_26 = arith.constant dense<0.000000e+00> : vector<16x32xf32>
    %19 = tpu.matmul %5, %9, %cst_26 {dimension_numbers = #tpu.dot_dimension_numbers<[1], [0], [0], [1], [0, 0, 1, 1], [], []>} : vector<16x32xf32>, vector<32x32xf32>, vector<16x32xf32> -> vector<16x32xf32>
    %20 = vector.broadcast %10 : vector<1x32xf32> to vector<16x32xf32>
    %21 = arith.addf %19, %20 : vector<16x32xf32>
    %22 = vector.shape_cast %21 : vector<16x32xf32> to vector<2x8x32xf32>
    %cst_27 = arith.constant dense<0.000000e+00> : vector<16x32xf32>
    %23 = tpu.matmul %3, %11, %cst_27 {dimension_numbers = #tpu.dot_dimension_numbers<[1], [0], [0], [1], [0, 0, 1, 1], [], []>} : vector<16x32xf32>, vector<32x32xf32>, vector<16x32xf32> -> vector<16x32xf32>
    %24 = vector.broadcast %12 : vector<1x32xf32> to vector<16x32xf32>
    %25 = arith.addf %23, %24 : vector<16x32xf32>
    %26 = vector.shape_cast %25 : vector<16x32xf32> to vector<2x8x32xf32>
    %27 = vector.extract_strided_slice %18 {offsets = [0, 0, 0], sizes = [2, 8, 8], strides = [1, 1, 1]} : vector<2x8x32xf32> to vector<2x8x8xf32>
    %28 = vector.extract_strided_slice %22 {offsets = [0, 0, 0], sizes = [2, 8, 8], strides = [1, 1, 1]} : vector<2x8x32xf32> to vector<2x8x8xf32>
    %29 = vector.extract_strided_slice %26 {offsets = [0, 0, 0], sizes = [2, 8, 8], strides = [1, 1, 1]} : vector<2x8x32xf32> to vector<2x8x8xf32>
    "tpu.trace_start"() <{level = 10 : i32, message = "bqd,bkd->bqk"}> : () -> ()
    %cst_28 = arith.constant dense<0.000000e+00> : vector<2x8x8xf32>
    %30 = tpu.matmul %27, %28, %cst_28 {dimension_numbers = #tpu.dot_dimension_numbers<[2], [2], [1], [1], [0, 0, 0, 1, 1, 1], [0], [0]>} : vector<2x8x8xf32>, vector<2x8x8xf32>, vector<2x8x8xf32> -> vector<2x8x8xf32>
    "tpu.trace_stop"() : () -> ()
    %cst_29 = arith.constant 0.353553385 : f32
    %31 = vector.broadcast %cst_29 : f32 to vector<2x8x8xf32>
    %32 = arith.mulf %30, %31 : vector<2x8x8xf32>
    %33 = vector.broadcast %6 : vector<2x1x8xf32> to vector<2x8x8xf32>
    %34 = arith.addf %32, %33 : vector<2x8x8xf32>
    %cst_30 = arith.constant dense<0xFF800000> : vector<2x8xf32>
    %35 = vector.multi_reduction <maximumf>, %34, %cst_30 [2] : vector<2x8x8xf32> to vector<2x8xf32>
    %36 = vector.shape_cast %35 : vector<2x8xf32> to vector<2x8x1xf32>
    %37 = vector.broadcast %36 : vector<2x8x1xf32> to vector<2x8x8xf32>
    %38 = arith.subf %34, %37 : vector<2x8x8xf32>
    %39 = math.exp %38 : vector<2x8x8xf32>
    %cst_31 = arith.constant dense<0.000000e+00> : vector<2x8xf32>
    %40 = vector.multi_reduction <add>, %39, %cst_31 [2] : vector<2x8x8xf32> to vector<2x8xf32>
    %41 = vector.shape_cast %40 : vector<2x8xf32> to vector<2x8x1xf32>
    %42 = tpu.reciprocal %41 {approx = true} : vector<2x8x1xf32> -> vector<2x8x1xf32>
    %43 = vector.broadcast %42 : vector<2x8x1xf32> to vector<2x8x8xf32>
    %44 = arith.mulf %39, %43 : vector<2x8x8xf32>
    "tpu.trace_start"() <{level = 10 : i32, message = "bqk,bkd->bqd"}> : () -> ()
    %cst_32 = arith.constant dense<0.000000e+00> : vector<2x8x8xf32>
    %45 = tpu.matmul %44, %29, %cst_32 {dimension_numbers = #tpu.dot_dimension_numbers<[2], [1], [1], [2], [0, 0, 0, 1, 1, 2], [0], [0]>} : vector<2x8x8xf32>, vector<2x8x8xf32>, vector<2x8x8xf32> -> vector<2x8x8xf32>
    "tpu.trace_stop"() : () -> ()
    %46 = vector.extract_strided_slice %18 {offsets = [0, 0, 8], sizes = [2, 8, 8], strides = [1, 1, 1]} : vector<2x8x32xf32> to vector<2x8x8xf32>
    %47 = vector.extract_strided_slice %22 {offsets = [0, 0, 8], sizes = [2, 8, 8], strides = [1, 1, 1]} : vector<2x8x32xf32> to vector<2x8x8xf32>
    %48 = vector.extract_strided_slice %26 {offsets = [0, 0, 8], sizes = [2, 8, 8], strides = [1, 1, 1]} : vector<2x8x32xf32> to vector<2x8x8xf32>
    "tpu.trace_start"() <{level = 10 : i32, message = "bqd,bkd->bqk"}> : () -> ()
    %cst_33 = arith.constant dense<0.000000e+00> : vector<2x8x8xf32>
    %49 = tpu.matmul %46, %47, %cst_33 {dimension_numbers = #tpu.dot_dimension_numbers<[2], [2], [1], [1], [0, 0, 0, 1, 1, 1], [0], [0]>} : vector<2x8x8xf32>, vector<2x8x8xf32>, vector<2x8x8xf32> -> vector<2x8x8xf32>
    "tpu.trace_stop"() : () -> ()
    %cst_34 = arith.constant 0.353553385 : f32
    %50 = vector.broadcast %cst_34 : f32 to vector<2x8x8xf32>
    %51 = arith.mulf %49, %50 : vector<2x8x8xf32>
    %52 = vector.broadcast %6 : vector<2x1x8xf32> to vector<2x8x8xf32>
    %53 = arith.addf %51, %52 : vector<2x8x8xf32>
    %cst_35 = arith.constant dense<0xFF800000> : vector<2x8xf32>
    %54 = vector.multi_reduction <maximumf>, %53, %cst_35 [2] : vector<2x8x8xf32> to vector<2x8xf32>
    %55 = vector.shape_cast %54 : vector<2x8xf32> to vector<2x8x1xf32>
    %56 = vector.broadcast %55 : vector<2x8x1xf32> to vector<2x8x8xf32>
    %57 = arith.subf %53, %56 : vector<2x8x8xf32>
    %58 = math.exp %57 : vector<2x8x8xf32>
    %cst_36 = arith.constant dense<0.000000e+00> : vector<2x8xf32>
    %59 = vector.multi_reduction <add>, %58, %cst_36 [2] : vector<2x8x8xf32> to vector<2x8xf32>
    %60 = vector.shape_cast %59 : vector<2x8xf32> to vector<2x8x1xf32>
    %61 = tpu.reciprocal %60 {approx = true} : vector<2x8x1xf32> -> vector<2x8x1xf32>
    %62 = vector.broadcast %61 : vector<2x8x1xf32> to vector<2x8x8xf32>
    %63 = arith.mulf %58, %62 : vector<2x8x8xf32>
    "tpu.trace_start"() <{level = 10 : i32, message = "bqk,bkd->bqd"}> : () -> ()
    %cst_37 = arith.constant dense<0.000000e+00> : vector<2x8x8xf32>
    %64 = tpu.matmul %63, %48, %cst_37 {dimension_numbers = #tpu.dot_dimension_numbers<[2], [1], [1], [2], [0, 0, 0, 1, 1, 2], [0], [0]>} : vector<2x8x8xf32>, vector<2x8x8xf32>, vector<2x8x8xf32> -> vector<2x8x8xf32>
    "tpu.trace_stop"() : () -> ()
    %65 = vector.extract_strided_slice %18 {offsets = [0, 0, 16], sizes = [2, 8, 8], strides = [1, 1, 1]} : vector<2x8x32xf32> to vector<2x8x8xf32>
    %66 = vector.extract_strided_slice %22 {offsets = [0, 0, 16], sizes = [2, 8, 8], strides = [1, 1, 1]} : vector<2x8x32xf32> to vector<2x8x8xf32>
    %67 = vector.extract_strided_slice %26 {offsets = [0, 0, 16], sizes = [2, 8, 8], strides = [1, 1, 1]} : vector<2x8x32xf32> to vector<2x8x8xf32>
    "tpu.trace_start"() <{level = 10 : i32, message = "bqd,bkd->bqk"}> : () -> ()
    %cst_38 = arith.constant dense<0.000000e+00> : vector<2x8x8xf32>
    %68 = tpu.matmul %65, %66, %cst_38 {dimension_numbers = #tpu.dot_dimension_numbers<[2], [2], [1], [1], [0, 0, 0, 1, 1, 1], [0], [0]>} : vector<2x8x8xf32>, vector<2x8x8xf32>, vector<2x8x8xf32> -> vector<2x8x8xf32>
    "tpu.trace_stop"() : () -> ()
    %cst_39 = arith.constant 0.353553385 : f32
    %69 = vector.broadcast %cst_39 : f32 to vector<2x8x8xf32>
    %70 = arith.mulf %68, %69 : vector<2x8x8xf32>
    %71 = vector.broadcast %6 : vector<2x1x8xf32> to vector<2x8x8xf32>
    %72 = arith.addf %70, %71 : vector<2x8x8xf32>
    %cst_40 = arith.constant dense<0xFF800000> : vector<2x8xf32>
    %73 = vector.multi_reduction <maximumf>, %72, %cst_40 [2] : vector<2x8x8xf32> to vector<2x8xf32>
    %74 = vector.shape_cast %73 : vector<2x8xf32> to vector<2x8x1xf32>
    %75 = vector.broadcast %74 : vector<2x8x1xf32> to vector<2x8x8xf32>
    %76 = arith.subf %72, %75 : vector<2x8x8xf32>
    %77 = math.exp %76 : vector<2x8x8xf32>
    %cst_41 = arith.constant dense<0.000000e+00> : vector<2x8xf32>
    %78 = vector.multi_reduction <add>, %77, %cst_41 [2] : vector<2x8x8xf32> to vector<2x8xf32>
    %79 = vector.shape_cast %78 : vector<2x8xf32> to vector<2x8x1xf32>
    %80 = tpu.reciprocal %79 {approx = true} : vector<2x8x1xf32> -> vector<2x8x1xf32>
    %81 = vector.broadcast %80 : vector<2x8x1xf32> to vector<2x8x8xf32>
    %82 = arith.mulf %77, %81 : vector<2x8x8xf32>
    "tpu.trace_start"() <{level = 10 : i32, message = "bqk,bkd->bqd"}> : () -> ()
    %cst_42 = arith.constant dense<0.000000e+00> : vector<2x8x8xf32>
    %83 = tpu.matmul %82, %67, %cst_42 {dimension_numbers = #tpu.dot_dimension_numbers<[2], [1], [1], [2], [0, 0, 0, 1, 1, 2], [0], [0]>} : vector<2x8x8xf32>, vector<2x8x8xf32>, vector<2x8x8xf32> -> vector<2x8x8xf32>
    "tpu.trace_stop"() : () -> ()
    %84 = vector.extract_strided_slice %18 {offsets = [0, 0, 24], sizes = [2, 8, 8], strides = [1, 1, 1]} : vector<2x8x32xf32> to vector<2x8x8xf32>
    %85 = vector.extract_strided_slice %22 {offsets = [0, 0, 24], sizes = [2, 8, 8], strides = [1, 1, 1]} : vector<2x8x32xf32> to vector<2x8x8xf32>
    %86 = vector.extract_strided_slice %26 {offsets = [0, 0, 24], sizes = [2, 8, 8], strides = [1, 1, 1]} : vector<2x8x32xf32> to vector<2x8x8xf32>
    "tpu.trace_start"() <{level = 10 : i32, message = "bqd,bkd->bqk"}> : () -> ()
    %cst_43 = arith.constant dense<0.000000e+00> : vector<2x8x8xf32>
    %87 = tpu.matmul %84, %85, %cst_43 {dimension_numbers = #tpu.dot_dimension_numbers<[2], [2], [1], [1], [0, 0, 0, 1, 1, 1], [0], [0]>} : vector<2x8x8xf32>, vector<2x8x8xf32>, vector<2x8x8xf32> -> vector<2x8x8xf32>
    "tpu.trace_stop"() : () -> ()
    %cst_44 = arith.constant 0.353553385 : f32
    %88 = vector.broadcast %cst_44 : f32 to vector<2x8x8xf32>
    %89 = arith.mulf %87, %88 : vector<2x8x8xf32>
    %90 = vector.broadcast %6 : vector<2x1x8xf32> to vector<2x8x8xf32>
    %91 = arith.addf %89, %90 : vector<2x8x8xf32>
    %cst_45 = arith.constant dense<0xFF800000> : vector<2x8xf32>
    %92 = vector.multi_reduction <maximumf>, %91, %cst_45 [2] : vector<2x8x8xf32> to vector<2x8xf32>
    %93 = vector.shape_cast %92 : vector<2x8xf32> to vector<2x8x1xf32>
    %94 = vector.broadcast %93 : vector<2x8x1xf32> to vector<2x8x8xf32>
    %95 = arith.subf %91, %94 : vector<2x8x8xf32>
    %96 = math.exp %95 : vector<2x8x8xf32>
    %cst_46 = arith.constant dense<0.000000e+00> : vector<2x8xf32>
    %97 = vector.multi_reduction <add>, %96, %cst_46 [2] : vector<2x8x8xf32> to vector<2x8xf32>
    %98 = vector.shape_cast %97 : vector<2x8xf32> to vector<2x8x1xf32>
    %99 = tpu.reciprocal %98 {approx = true} : vector<2x8x1xf32> -> vector<2x8x1xf32>
    %100 = vector.broadcast %99 : vector<2x8x1xf32> to vector<2x8x8xf32>
    %101 = arith.mulf %96, %100 : vector<2x8x8xf32>
    "tpu.trace_start"() <{level = 10 : i32, message = "bqk,bkd->bqd"}> : () -> ()
    %cst_47 = arith.constant dense<0.000000e+00> : vector<2x8x8xf32>
    %102 = tpu.matmul %101, %86, %cst_47 {dimension_numbers = #tpu.dot_dimension_numbers<[2], [1], [1], [2], [0, 0, 0, 1, 1, 2], [0], [0]>} : vector<2x8x8xf32>, vector<2x8x8xf32>, vector<2x8x8xf32> -> vector<2x8x8xf32>
    "tpu.trace_stop"() : () -> ()
    %103 = tpu.concatenate %45, %64, %83, %102 in 2 : vector<2x8x8xf32>, vector<2x8x8xf32>, vector<2x8x8xf32>, vector<2x8x8xf32> -> vector<2x8x32xf32>
    %104 = vector.shape_cast %103 : vector<2x8x32xf32> to vector<16x32xf32>
    %cst_48 = arith.constant dense<0.000000e+00> : vector<16x32xf32>
    %105 = tpu.matmul %104, %13, %cst_48 {dimension_numbers = #tpu.dot_dimension_numbers<[1], [0], [0], [1], [0, 0, 1, 1], [], []>} : vector<16x32xf32>, vector<32x32xf32>, vector<16x32xf32> -> vector<16x32xf32>
    %106 = vector.broadcast %14 : vector<1x32xf32> to vector<16x32xf32>
    %107 = arith.addf %105, %106 : vector<16x32xf32>
    %c0_49 = arith.constant 0 : index
    %c0_50 = arith.constant 0 : index
    %108 = vector.load %arg29[%c0_49, %c0_50] : memref<1x32xf32, #tpu.memory_space<vmem>>, vector<1x32xf32>
    %c0_51 = arith.constant 0 : index
    %c0_52 = arith.constant 0 : index
    %109 = vector.load %arg30[%c0_51, %c0_52] : memref<1x32xf32, #tpu.memory_space<vmem>>, vector<1x32xf32>
    %cst_53 = arith.constant dense<0.000000e+00> : vector<16xf32>
    %110 = vector.multi_reduction <add>, %107, %cst_53 [1] : vector<16x32xf32> to vector<16xf32>
    %111 = vector.shape_cast %110 : vector<16xf32> to vector<16x1xf32>
    %cst_54 = arith.constant 3.200000e+01 : f32
    %112 = vector.broadcast %cst_54 : f32 to vector<16x1xf32>
    %113 = arith.divf %111, %112 : vector<16x1xf32>
    %114 = vector.broadcast %113 : vector<16x1xf32> to vector<16x32xf32>
    %115 = arith.subf %107, %114 : vector<16x32xf32>
    %116 = arith.mulf %115, %115 : vector<16x32xf32>
    %cst_55 = arith.constant dense<0.000000e+00> : vector<16xf32>
    %117 = vector.multi_reduction <add>, %116, %cst_55 [1] : vector<16x32xf32> to vector<16xf32>
    %118 = vector.shape_cast %117 : vector<16xf32> to vector<16x1xf32>
    %cst_56 = arith.constant 3.200000e+01 : f32
    %119 = vector.broadcast %cst_56 : f32 to vector<16x1xf32>
    %120 = arith.divf %118, %119 : vector<16x1xf32>
    %cst_57 = arith.constant 9.99999974E-6 : f32
    %121 = vector.broadcast %cst_57 : f32 to vector<16x1xf32>
    %122 = arith.addf %120, %121 : vector<16x1xf32>
    %123 = math.rsqrt %122 : vector<16x1xf32>
    %124 = vector.broadcast %123 : vector<16x1xf32> to vector<16x32xf32>
    %125 = arith.mulf %115, %124 : vector<16x32xf32>
    %126 = vector.broadcast %108 : vector<1x32xf32> to vector<16x32xf32>
    %127 = arith.mulf %125, %126 : vector<16x32xf32>
    %128 = vector.broadcast %109 : vector<1x32xf32> to vector<16x32xf32>
    %129 = arith.addf %127, %128 : vector<16x32xf32>
    %c0_58 = arith.constant 0 : index
    %c0_59 = arith.constant 0 : index
    %130 = vector.load %arg2[%c0_58, %c0_59] : memref<16x32xf32, #tpu.memory_space<vmem>>, vector<16x32xf32>
    %131 = arith.addf %129, %130 : vector<16x32xf32>
    %c0_60 = arith.constant 0 : index
    %c0_61 = arith.constant 0 : index
    %132 = vector.load %arg5[%c0_60, %c0_61] : memref<32x32xf32, #tpu.memory_space<vmem>>, vector<32x32xf32>
    %c0_62 = arith.constant 0 : index
    %c0_63 = arith.constant 0 : index
    %133 = vector.load %arg6[%c0_62, %c0_63] : memref<32x32xf32, #tpu.memory_space<vmem>>, vector<32x32xf32>
    %134 = arith.addf %132, %133 : vector<32x32xf32>
    %c0_64 = arith.constant 0 : index
    %c0_65 = arith.constant 0 : index
    %c0_66 = arith.constant 0 : index
    %135 = vector.load %arg8[%c0_64, %c0_65, %c0_66] : memref<2x1x16xf32, #tpu.memory_space<vmem>>, vector<2x1x16xf32>
    %c0_67 = arith.constant 0 : index
    %c0_68 = arith.constant 0 : index
    %136 = vector.load %arg17[%c0_67, %c0_68] : memref<32x32xf32, #tpu.memory_space<vmem>>, vector<32x32xf32>
    %c0_69 = arith.constant 0 : index
    %c0_70 = arith.constant 0 : index
    %137 = vector.load %arg18[%c0_69, %c0_70] : memref<1x32xf32, #tpu.memory_space<vmem>>, vector<1x32xf32>
    %c0_71 = arith.constant 0 : index
    %c0_72 = arith.constant 0 : index
    %138 = vector.load %arg19[%c0_71, %c0_72] : memref<32x32xf32, #tpu.memory_space<vmem>>, vector<32x32xf32>
    %c0_73 = arith.constant 0 : index
    %c0_74 = arith.constant 0 : index
    %139 = vector.load %arg20[%c0_73, %c0_74] : memref<1x32xf32, #tpu.memory_space<vmem>>, vector<1x32xf32>
    %c0_75 = arith.constant 0 : index
    %c0_76 = arith.constant 0 : index
    %140 = vector.load %arg21[%c0_75, %c0_76] : memref<32x32xf32, #tpu.memory_space<vmem>>, vector<32x32xf32>
    %c0_77 = arith.constant 0 : index
    %c0_78 = arith.constant 0 : index
    %141 = vector.load %arg22[%c0_77, %c0_78] : memref<1x32xf32, #tpu.memory_space<vmem>>, vector<1x32xf32>
    %c0_79 = arith.constant 0 : index
    %c0_80 = arith.constant 0 : index
    %142 = vector.load %arg23[%c0_79, %c0_80] : memref<32x32xf32, #tpu.memory_space<vmem>>, vector<32x32xf32>
    %c0_81 = arith.constant 0 : index
    %c0_82 = arith.constant 0 : index
    %143 = vector.load %arg24[%c0_81, %c0_82] : memref<1x32xf32, #tpu.memory_space<vmem>>, vector<1x32xf32>
    %cst_83 = arith.constant dense<0.000000e+00> : vector<16x32xf32>
    %144 = tpu.matmul %131, %136, %cst_83 {dimension_numbers = #tpu.dot_dimension_numbers<[1], [0], [0], [1], [0, 0, 1, 1], [], []>} : vector<16x32xf32>, vector<32x32xf32>, vector<16x32xf32> -> vector<16x32xf32>
    %145 = vector.broadcast %137 : vector<1x32xf32> to vector<16x32xf32>
    %146 = arith.addf %144, %145 : vector<16x32xf32>
    %147 = vector.shape_cast %146 : vector<16x32xf32> to vector<2x8x32xf32>
    %cst_84 = arith.constant dense<0.000000e+00> : vector<32x32xf32>
    %148 = tpu.matmul %134, %138, %cst_84 {dimension_numbers = #tpu.dot_dimension_numbers<[1], [0], [0], [1], [0, 0, 1, 1], [], []>} : vector<32x32xf32>, vector<32x32xf32>, vector<32x32xf32> -> vector<32x32xf32>
    %149 = vector.broadcast %139 : vector<1x32xf32> to vector<32x32xf32>
    %150 = arith.addf %148, %149 : vector<32x32xf32>
    %151 = vector.shape_cast %150 : vector<32x32xf32> to vector<2x16x32xf32>
    %cst_85 = arith.constant dense<0.000000e+00> : vector<32x32xf32>
    %152 = tpu.matmul %132, %140, %cst_85 {dimension_numbers = #tpu.dot_dimension_numbers<[1], [0], [0], [1], [0, 0, 1, 1], [], []>} : vector<32x32xf32>, vector<32x32xf32>, vector<32x32xf32> -> vector<32x32xf32>
    %153 = vector.broadcast %141 : vector<1x32xf32> to vector<32x32xf32>
    %154 = arith.addf %152, %153 : vector<32x32xf32>
    %155 = vector.shape_cast %154 : vector<32x32xf32> to vector<2x16x32xf32>
    %156 = vector.extract_strided_slice %147 {offsets = [0, 0, 0], sizes = [2, 8, 8], strides = [1, 1, 1]} : vector<2x8x32xf32> to vector<2x8x8xf32>
    %157 = vector.extract_strided_slice %151 {offsets = [0, 0, 0], sizes = [2, 16, 8], strides = [1, 1, 1]} : vector<2x16x32xf32> to vector<2x16x8xf32>
    %158 = vector.extract_strided_slice %155 {offsets = [0, 0, 0], sizes = [2, 16, 8], strides = [1, 1, 1]} : vector<2x16x32xf32> to vector<2x16x8xf32>
    "tpu.trace_start"() <{level = 10 : i32, message = "bqd,bkd->bqk"}> : () -> ()
    %cst_86 = arith.constant dense<0.000000e+00> : vector<2x8x16xf32>
    %159 = tpu.matmul %156, %157, %cst_86 {dimension_numbers = #tpu.dot_dimension_numbers<[2], [2], [1], [1], [0, 0, 0, 1, 1, 1], [0], [0]>} : vector<2x8x8xf32>, vector<2x16x8xf32>, vector<2x8x16xf32> -> vector<2x8x16xf32>
    "tpu.trace_stop"() : () -> ()
    %cst_87 = arith.constant 0.353553385 : f32
    %160 = vector.broadcast %cst_87 : f32 to vector<2x8x16xf32>
    %161 = arith.mulf %159, %160 : vector<2x8x16xf32>
    %162 = vector.broadcast %135 : vector<2x1x16xf32> to vector<2x8x16xf32>
    %163 = arith.addf %161, %162 : vector<2x8x16xf32>
    %cst_88 = arith.constant dense<0xFF800000> : vector<2x8xf32>
    %164 = vector.multi_reduction <maximumf>, %163, %cst_88 [2] : vector<2x8x16xf32> to vector<2x8xf32>
    %165 = vector.shape_cast %164 : vector<2x8xf32> to vector<2x8x1xf32>
    %166 = vector.broadcast %165 : vector<2x8x1xf32> to vector<2x8x16xf32>
    %167 = arith.subf %163, %166 : vector<2x8x16xf32>
    %168 = math.exp %167 : vector<2x8x16xf32>
    %cst_89 = arith.constant dense<0.000000e+00> : vector<2x8xf32>
    %169 = vector.multi_reduction <add>, %168, %cst_89 [2] : vector<2x8x16xf32> to vector<2x8xf32>
    %170 = vector.shape_cast %169 : vector<2x8xf32> to vector<2x8x1xf32>
    %171 = tpu.reciprocal %170 {approx = true} : vector<2x8x1xf32> -> vector<2x8x1xf32>
    %172 = vector.broadcast %171 : vector<2x8x1xf32> to vector<2x8x16xf32>
    %173 = arith.mulf %168, %172 : vector<2x8x16xf32>
    "tpu.trace_start"() <{level = 10 : i32, message = "bqk,bkd->bqd"}> : () -> ()
    %cst_90 = arith.constant dense<0.000000e+00> : vector<2x8x8xf32>
    %174 = tpu.matmul %173, %158, %cst_90 {dimension_numbers = #tpu.dot_dimension_numbers<[2], [1], [1], [2], [0, 0, 0, 1, 1, 2], [0], [0]>} : vector<2x8x16xf32>, vector<2x16x8xf32>, vector<2x8x8xf32> -> vector<2x8x8xf32>
    "tpu.trace_stop"() : () -> ()
    %175 = vector.extract_strided_slice %147 {offsets = [0, 0, 8], sizes = [2, 8, 8], strides = [1, 1, 1]} : vector<2x8x32xf32> to vector<2x8x8xf32>
    %176 = vector.extract_strided_slice %151 {offsets = [0, 0, 8], sizes = [2, 16, 8], strides = [1, 1, 1]} : vector<2x16x32xf32> to vector<2x16x8xf32>
    %177 = vector.extract_strided_slice %155 {offsets = [0, 0, 8], sizes = [2, 16, 8], strides = [1, 1, 1]} : vector<2x16x32xf32> to vector<2x16x8xf32>
    "tpu.trace_start"() <{level = 10 : i32, message = "bqd,bkd->bqk"}> : () -> ()
    %cst_91 = arith.constant dense<0.000000e+00> : vector<2x8x16xf32>
    %178 = tpu.matmul %175, %176, %cst_91 {dimension_numbers = #tpu.dot_dimension_numbers<[2], [2], [1], [1], [0, 0, 0, 1, 1, 1], [0], [0]>} : vector<2x8x8xf32>, vector<2x16x8xf32>, vector<2x8x16xf32> -> vector<2x8x16xf32>
    "tpu.trace_stop"() : () -> ()
    %cst_92 = arith.constant 0.353553385 : f32
    %179 = vector.broadcast %cst_92 : f32 to vector<2x8x16xf32>
    %180 = arith.mulf %178, %179 : vector<2x8x16xf32>
    %181 = vector.broadcast %135 : vector<2x1x16xf32> to vector<2x8x16xf32>
    %182 = arith.addf %180, %181 : vector<2x8x16xf32>
    %cst_93 = arith.constant dense<0xFF800000> : vector<2x8xf32>
    %183 = vector.multi_reduction <maximumf>, %182, %cst_93 [2] : vector<2x8x16xf32> to vector<2x8xf32>
    %184 = vector.shape_cast %183 : vector<2x8xf32> to vector<2x8x1xf32>
    %185 = vector.broadcast %184 : vector<2x8x1xf32> to vector<2x8x16xf32>
    %186 = arith.subf %182, %185 : vector<2x8x16xf32>
    %187 = math.exp %186 : vector<2x8x16xf32>
    %cst_94 = arith.constant dense<0.000000e+00> : vector<2x8xf32>
    %188 = vector.multi_reduction <add>, %187, %cst_94 [2] : vector<2x8x16xf32> to vector<2x8xf32>
    %189 = vector.shape_cast %188 : vector<2x8xf32> to vector<2x8x1xf32>
    %190 = tpu.reciprocal %189 {approx = true} : vector<2x8x1xf32> -> vector<2x8x1xf32>
    %191 = vector.broadcast %190 : vector<2x8x1xf32> to vector<2x8x16xf32>
    %192 = arith.mulf %187, %191 : vector<2x8x16xf32>
    "tpu.trace_start"() <{level = 10 : i32, message = "bqk,bkd->bqd"}> : () -> ()
    %cst_95 = arith.constant dense<0.000000e+00> : vector<2x8x8xf32>
    %193 = tpu.matmul %192, %177, %cst_95 {dimension_numbers = #tpu.dot_dimension_numbers<[2], [1], [1], [2], [0, 0, 0, 1, 1, 2], [0], [0]>} : vector<2x8x16xf32>, vector<2x16x8xf32>, vector<2x8x8xf32> -> vector<2x8x8xf32>
    "tpu.trace_stop"() : () -> ()
    %194 = vector.extract_strided_slice %147 {offsets = [0, 0, 16], sizes = [2, 8, 8], strides = [1, 1, 1]} : vector<2x8x32xf32> to vector<2x8x8xf32>
    %195 = vector.extract_strided_slice %151 {offsets = [0, 0, 16], sizes = [2, 16, 8], strides = [1, 1, 1]} : vector<2x16x32xf32> to vector<2x16x8xf32>
    %196 = vector.extract_strided_slice %155 {offsets = [0, 0, 16], sizes = [2, 16, 8], strides = [1, 1, 1]} : vector<2x16x32xf32> to vector<2x16x8xf32>
    "tpu.trace_start"() <{level = 10 : i32, message = "bqd,bkd->bqk"}> : () -> ()
    %cst_96 = arith.constant dense<0.000000e+00> : vector<2x8x16xf32>
    %197 = tpu.matmul %194, %195, %cst_96 {dimension_numbers = #tpu.dot_dimension_numbers<[2], [2], [1], [1], [0, 0, 0, 1, 1, 1], [0], [0]>} : vector<2x8x8xf32>, vector<2x16x8xf32>, vector<2x8x16xf32> -> vector<2x8x16xf32>
    "tpu.trace_stop"() : () -> ()
    %cst_97 = arith.constant 0.353553385 : f32
    %198 = vector.broadcast %cst_97 : f32 to vector<2x8x16xf32>
    %199 = arith.mulf %197, %198 : vector<2x8x16xf32>
    %200 = vector.broadcast %135 : vector<2x1x16xf32> to vector<2x8x16xf32>
    %201 = arith.addf %199, %200 : vector<2x8x16xf32>
    %cst_98 = arith.constant dense<0xFF800000> : vector<2x8xf32>
    %202 = vector.multi_reduction <maximumf>, %201, %cst_98 [2] : vector<2x8x16xf32> to vector<2x8xf32>
    %203 = vector.shape_cast %202 : vector<2x8xf32> to vector<2x8x1xf32>
    %204 = vector.broadcast %203 : vector<2x8x1xf32> to vector<2x8x16xf32>
    %205 = arith.subf %201, %204 : vector<2x8x16xf32>
    %206 = math.exp %205 : vector<2x8x16xf32>
    %cst_99 = arith.constant dense<0.000000e+00> : vector<2x8xf32>
    %207 = vector.multi_reduction <add>, %206, %cst_99 [2] : vector<2x8x16xf32> to vector<2x8xf32>
    %208 = vector.shape_cast %207 : vector<2x8xf32> to vector<2x8x1xf32>
    %209 = tpu.reciprocal %208 {approx = true} : vector<2x8x1xf32> -> vector<2x8x1xf32>
    %210 = vector.broadcast %209 : vector<2x8x1xf32> to vector<2x8x16xf32>
    %211 = arith.mulf %206, %210 : vector<2x8x16xf32>
    "tpu.trace_start"() <{level = 10 : i32, message = "bqk,bkd->bqd"}> : () -> ()
    %cst_100 = arith.constant dense<0.000000e+00> : vector<2x8x8xf32>
    %212 = tpu.matmul %211, %196, %cst_100 {dimension_numbers = #tpu.dot_dimension_numbers<[2], [1], [1], [2], [0, 0, 0, 1, 1, 2], [0], [0]>} : vector<2x8x16xf32>, vector<2x16x8xf32>, vector<2x8x8xf32> -> vector<2x8x8xf32>
    "tpu.trace_stop"() : () -> ()
    %213 = vector.extract_strided_slice %147 {offsets = [0, 0, 24], sizes = [2, 8, 8], strides = [1, 1, 1]} : vector<2x8x32xf32> to vector<2x8x8xf32>
    %214 = vector.extract_strided_slice %151 {offsets = [0, 0, 24], sizes = [2, 16, 8], strides = [1, 1, 1]} : vector<2x16x32xf32> to vector<2x16x8xf32>
    %215 = vector.extract_strided_slice %155 {offsets = [0, 0, 24], sizes = [2, 16, 8], strides = [1, 1, 1]} : vector<2x16x32xf32> to vector<2x16x8xf32>
    "tpu.trace_start"() <{level = 10 : i32, message = "bqd,bkd->bqk"}> : () -> ()
    %cst_101 = arith.constant dense<0.000000e+00> : vector<2x8x16xf32>
    %216 = tpu.matmul %213, %214, %cst_101 {dimension_numbers = #tpu.dot_dimension_numbers<[2], [2], [1], [1], [0, 0, 0, 1, 1, 1], [0], [0]>} : vector<2x8x8xf32>, vector<2x16x8xf32>, vector<2x8x16xf32> -> vector<2x8x16xf32>
    "tpu.trace_stop"() : () -> ()
    %cst_102 = arith.constant 0.353553385 : f32
    %217 = vector.broadcast %cst_102 : f32 to vector<2x8x16xf32>
    %218 = arith.mulf %216, %217 : vector<2x8x16xf32>
    %219 = vector.broadcast %135 : vector<2x1x16xf32> to vector<2x8x16xf32>
    %220 = arith.addf %218, %219 : vector<2x8x16xf32>
    %cst_103 = arith.constant dense<0xFF800000> : vector<2x8xf32>
    %221 = vector.multi_reduction <maximumf>, %220, %cst_103 [2] : vector<2x8x16xf32> to vector<2x8xf32>
    %222 = vector.shape_cast %221 : vector<2x8xf32> to vector<2x8x1xf32>
    %223 = vector.broadcast %222 : vector<2x8x1xf32> to vector<2x8x16xf32>
    %224 = arith.subf %220, %223 : vector<2x8x16xf32>
    %225 = math.exp %224 : vector<2x8x16xf32>
    %cst_104 = arith.constant dense<0.000000e+00> : vector<2x8xf32>
    %226 = vector.multi_reduction <add>, %225, %cst_104 [2] : vector<2x8x16xf32> to vector<2x8xf32>
    %227 = vector.shape_cast %226 : vector<2x8xf32> to vector<2x8x1xf32>
    %228 = tpu.reciprocal %227 {approx = true} : vector<2x8x1xf32> -> vector<2x8x1xf32>
    %229 = vector.broadcast %228 : vector<2x8x1xf32> to vector<2x8x16xf32>
    %230 = arith.mulf %225, %229 : vector<2x8x16xf32>
    "tpu.trace_start"() <{level = 10 : i32, message = "bqk,bkd->bqd"}> : () -> ()
    %cst_105 = arith.constant dense<0.000000e+00> : vector<2x8x8xf32>
    %231 = tpu.matmul %230, %215, %cst_105 {dimension_numbers = #tpu.dot_dimension_numbers<[2], [1], [1], [2], [0, 0, 0, 1, 1, 2], [0], [0]>} : vector<2x8x16xf32>, vector<2x16x8xf32>, vector<2x8x8xf32> -> vector<2x8x8xf32>
    "tpu.trace_stop"() : () -> ()
    %232 = tpu.concatenate %174, %193, %212, %231 in 2 : vector<2x8x8xf32>, vector<2x8x8xf32>, vector<2x8x8xf32>, vector<2x8x8xf32> -> vector<2x8x32xf32>
    %233 = vector.shape_cast %232 : vector<2x8x32xf32> to vector<16x32xf32>
    %cst_106 = arith.constant dense<0.000000e+00> : vector<16x32xf32>
    %234 = tpu.matmul %233, %142, %cst_106 {dimension_numbers = #tpu.dot_dimension_numbers<[1], [0], [0], [1], [0, 0, 1, 1], [], []>} : vector<16x32xf32>, vector<32x32xf32>, vector<16x32xf32> -> vector<16x32xf32>
    %235 = vector.broadcast %143 : vector<1x32xf32> to vector<16x32xf32>
    %236 = arith.addf %234, %235 : vector<16x32xf32>
    %237 = arith.addf %0, %236 : vector<16x32xf32>
    %c0_107 = arith.constant 0 : index
    %c0_108 = arith.constant 0 : index
    %238 = vector.load %arg31[%c0_107, %c0_108] : memref<1x32xf32, #tpu.memory_space<vmem>>, vector<1x32xf32>
    %c0_109 = arith.constant 0 : index
    %c0_110 = arith.constant 0 : index
    %239 = vector.load %arg32[%c0_109, %c0_110] : memref<1x32xf32, #tpu.memory_space<vmem>>, vector<1x32xf32>
    %cst_111 = arith.constant dense<0.000000e+00> : vector<16xf32>
    %240 = vector.multi_reduction <add>, %237, %cst_111 [1] : vector<16x32xf32> to vector<16xf32>
    %241 = vector.shape_cast %240 : vector<16xf32> to vector<16x1xf32>
    %cst_112 = arith.constant 3.200000e+01 : f32
    %242 = vector.broadcast %cst_112 : f32 to vector<16x1xf32>
    %243 = arith.divf %241, %242 : vector<16x1xf32>
    %244 = vector.broadcast %243 : vector<16x1xf32> to vector<16x32xf32>
    %245 = arith.subf %237, %244 : vector<16x32xf32>
    %246 = arith.mulf %245, %245 : vector<16x32xf32>
    %cst_113 = arith.constant dense<0.000000e+00> : vector<16xf32>
    %247 = vector.multi_reduction <add>, %246, %cst_113 [1] : vector<16x32xf32> to vector<16xf32>
    %248 = vector.shape_cast %247 : vector<16xf32> to vector<16x1xf32>
    %cst_114 = arith.constant 3.200000e+01 : f32
    %249 = vector.broadcast %cst_114 : f32 to vector<16x1xf32>
    %250 = arith.divf %248, %249 : vector<16x1xf32>
    %cst_115 = arith.constant 9.99999974E-6 : f32
    %251 = vector.broadcast %cst_115 : f32 to vector<16x1xf32>
    %252 = arith.addf %250, %251 : vector<16x1xf32>
    %253 = math.rsqrt %252 : vector<16x1xf32>
    %254 = vector.broadcast %253 : vector<16x1xf32> to vector<16x32xf32>
    %255 = arith.mulf %245, %254 : vector<16x32xf32>
    %256 = vector.broadcast %238 : vector<1x32xf32> to vector<16x32xf32>
    %257 = arith.mulf %255, %256 : vector<16x32xf32>
    %258 = vector.broadcast %239 : vector<1x32xf32> to vector<16x32xf32>
    %259 = arith.addf %257, %258 : vector<16x32xf32>
    %c0_116 = arith.constant 0 : index
    %c0_117 = arith.constant 0 : index
    %260 = vector.load %arg25[%c0_116, %c0_117] : memref<32x64xf32, #tpu.memory_space<vmem>>, vector<32x64xf32>
    %cst_118 = arith.constant dense<0.000000e+00> : vector<16x64xf32>
    %261 = tpu.matmul %259, %260, %cst_118 {dimension_numbers = #tpu.dot_dimension_numbers<[1], [0], [0], [1], [0, 0, 1, 1], [], []>} : vector<16x32xf32>, vector<32x64xf32>, vector<16x64xf32> -> vector<16x64xf32>
    %c0_119 = arith.constant 0 : index
    %c0_120 = arith.constant 0 : index
    %262 = vector.load %arg26[%c0_119, %c0_120] : memref<1x64xf32, #tpu.memory_space<vmem>>, vector<1x64xf32>
    %263 = vector.broadcast %262 : vector<1x64xf32> to vector<16x64xf32>
    %264 = arith.addf %261, %263 : vector<16x64xf32>
    %cst_121 = arith.constant 0.000000e+00 : f32
    %265 = vector.broadcast %cst_121 : f32 to vector<16x64xf32>
    %266 = arith.maximumf %264, %265 : vector<16x64xf32>
    %c0_122 = arith.constant 0 : index
    %c0_123 = arith.constant 0 : index
    %267 = vector.load %arg27[%c0_122, %c0_123] : memref<64x32xf32, #tpu.memory_space<vmem>>, vector<64x32xf32>
    %cst_124 = arith.constant dense<0.000000e+00> : vector<16x32xf32>
    %268 = tpu.matmul %266, %267, %cst_124 {dimension_numbers = #tpu.dot_dimension_numbers<[1], [0], [0], [1], [0, 0, 1, 1], [], []>} : vector<16x64xf32>, vector<64x32xf32>, vector<16x32xf32> -> vector<16x32xf32>
    %c0_125 = arith.constant 0 : index
    %c0_126 = arith.constant 0 : index
    %269 = vector.load %arg28[%c0_125, %c0_126] : memref<1x32xf32, #tpu.memory_space<vmem>>, vector<1x32xf32>
    %270 = vector.broadcast %269 : vector<1x32xf32> to vector<16x32xf32>
    %271 = arith.addf %268, %270 : vector<16x32xf32>
    %272 = arith.addf %259, %271 : vector<16x32xf32>
    %c0_127 = arith.constant 0 : index
    %c0_128 = arith.constant 0 : index
    %273 = vector.load %arg33[%c0_127, %c0_128] : memref<1x32xf32, #tpu.memory_space<vmem>>, vector<1x32xf32>
    %c0_129 = arith.constant 0 : index
    %c0_130 = arith.constant 0 : index
    %274 = vector.load %arg34[%c0_129, %c0_130] : memref<1x32xf32, #tpu.memory_space<vmem>>, vector<1x32xf32>
    %cst_131 = arith.constant dense<0.000000e+00> : vector<16xf32>
    %275 = vector.multi_reduction <add>, %272, %cst_131 [1] : vector<16x32xf32> to vector<16xf32>
    %276 = vector.shape_cast %275 : vector<16xf32> to vector<16x1xf32>
    %cst_132 = arith.constant 3.200000e+01 : f32
    %277 = vector.broadcast %cst_132 : f32 to vector<16x1xf32>
    %278 = arith.divf %276, %277 : vector<16x1xf32>
    %279 = vector.broadcast %278 : vector<16x1xf32> to vector<16x32xf32>
    %280 = arith.subf %272, %279 : vector<16x32xf32>
    %281 = arith.mulf %280, %280 : vector<16x32xf32>
    %cst_133 = arith.constant dense<0.000000e+00> : vector<16xf32>
    %282 = vector.multi_reduction <add>, %281, %cst_133 [1] : vector<16x32xf32> to vector<16xf32>
    %283 = vector.shape_cast %282 : vector<16xf32> to vector<16x1xf32>
    %cst_134 = arith.constant 3.200000e+01 : f32
    %284 = vector.broadcast %cst_134 : f32 to vector<16x1xf32>
    %285 = arith.divf %283, %284 : vector<16x1xf32>
    %cst_135 = arith.constant 9.99999974E-6 : f32
    %286 = vector.broadcast %cst_135 : f32 to vector<16x1xf32>
    %287 = arith.addf %285, %286 : vector<16x1xf32>
    %288 = math.rsqrt %287 : vector<16x1xf32>
    %289 = vector.broadcast %288 : vector<16x1xf32> to vector<16x32xf32>
    %290 = arith.mulf %280, %289 : vector<16x32xf32>
    %291 = vector.broadcast %273 : vector<1x32xf32> to vector<16x32xf32>
    %292 = arith.mulf %290, %291 : vector<16x32xf32>
    %293 = vector.broadcast %274 : vector<1x32xf32> to vector<16x32xf32>
    %294 = arith.addf %292, %293 : vector<16x32xf32>
    %c0_136 = arith.constant 0 : index
    %c0_137 = arith.constant 0 : index
    %295 = vector.load %arg35[%c0_136, %c0_137] : memref<16x32xf32, #tpu.memory_space<vmem>>, vector<16x32xf32>
    tpu.vector_store %arg35[%c0_136, %c0_137], %294 {strides = array<i32>} : memref<16x32xf32, #tpu.memory_space<vmem>>, vector<16x32xf32>,
    return
  }
  func.func @transform_0(%arg0: i32) -> (i32, i32) {
    %c0_i32 = arith.constant 0 : i32
    %c0_i32_0 = arith.constant 0 : i32
    return %arg0, %c0_i32 : i32, i32
  }
  func.func @transform_1(%arg0: i32) -> (i32, i32) {
    %c0_i32 = arith.constant 0 : i32
    %c0_i32_0 = arith.constant 0 : i32
    return %arg0, %c0_i32 : i32, i32
  }
  func.func @transform_2(%arg0: i32) -> (i32, i32) {
    %c0_i32 = arith.constant 0 : i32
    %c0_i32_0 = arith.constant 0 : i32
    return %arg0, %c0_i32 : i32, i32
  }
  func.func @transform_3(%arg0: i32) -> (i32, i32) {
    %c0_i32 = arith.constant 0 : i32
    %c0_i32_0 = arith.constant 0 : i32
    return %arg0, %c0_i32 : i32, i32
  }
  func.func @transform_4(%arg0: i32) -> (i32, i32) {
    %c0_i32 = arith.constant 0 : i32
    %c0_i32_0 = arith.constant 0 : i32
    return %arg0, %c0_i32 : i32, i32
  }
  func.func @transform_5(%arg0: i32) -> (i32, i32) {
    %c0_i32 = arith.constant 0 : i32
    %c0_i32_0 = arith.constant 0 : i32
    return %arg0, %c0_i32 : i32, i32
  }
  func.func @transform_6(%arg0: i32) -> (i32, i32, i32) {
    %c0_i32 = arith.constant 0 : i32
    %c0_i32_0 = arith.constant 0 : i32
    %c0_i32_1 = arith.constant 0 : i32
    return %arg0, %c0_i32, %c0_i32_0 : i32, i32, i32
  }
  func.func @transform_7(%arg0: i32) -> (i32, i32, i32) {
    %c0_i32 = arith.constant 0 : i32
    %c0_i32_0 = arith.constant 0 : i32
    %c0_i32_1 = arith.constant 0 : i32
    return %arg0, %c0_i32, %c0_i32_0 : i32, i32, i32
  }
  func.func @transform_8(%arg0: i32) -> (i32, i32) {
    %c0_i32 = arith.constant 0 : i32
    %c0_i32_0 = arith.constant 0 : i32
    %c0_i32_1 = arith.constant 0 : i32
    return %c0_i32, %c0_i32_0 : i32, i32
  }
  func.func @transform_9(%arg0: i32) -> (i32, i32) {
    %c0_i32 = arith.constant 0 : i32
    %c0_i32_0 = arith.constant 0 : i32
    %c0_i32_1 = arith.constant 0 : i32
    return %c0_i32, %c0_i32_0 : i32, i32
  }
  func.func @transform_10(%arg0: i32) -> (i32, i32) {
    %c0_i32 = arith.constant 0 : i32
    %c0_i32_0 = arith.constant 0 : i32
    %c0_i32_1 = arith.constant 0 : i32
    return %c0_i32, %c0_i32_0 : i32, i32
  }
  func.func @transform_11(%arg0: i32) -> (i32, i32) {
    %c0_i32 = arith.constant 0 : i32
    %c0_i32_0 = arith.constant 0 : i32
    %c0_i32_1 = arith.constant 0 : i32
    return %c0_i32, %c0_i32_0 : i32, i32
  }
  func.func @transform_12(%arg0: i32) -> (i32, i32) {
    %c0_i32 = arith.constant 0 : i32
    %c0_i32_0 = arith.constant 0 : i32
    %c0_i32_1 = arith.constant 0 : i32
    return %c0_i32, %c0_i32_0 : i32, i32
  }
  func.func @transform_13(%arg0: i32) -> (i32, i32) {
    %c0_i32 = arith.constant 0 : i32
    %c0_i32_0 = arith.constant 0 : i32
    %c0_i32_1 = arith.constant 0 : i32
    return %c0_i32, %c0_i32_0 : i32, i32
  }
  func.func @transform_14(%arg0: i32) -> (i32, i32) {
    %c0_i32 = arith.constant 0 : i32
    %c0_i32_0 = arith.constant 0 : i32
    %c0_i32_1 = arith.constant 0 : i32
    return %c0_i32, %c0_i32_0 : i32, i32
  }
  func.func @transform_15(%arg0: i32) -> (i32, i32) {
    %c0_i32 = arith.constant 0 : i32
    %c0_i32_0 = arith.constant 0 : i32
    %c0_i32_1 = arith.constant 0 : i32
    return %c0_i32, %c0_i32_0 : i32, i32
  }
  func.func @transform_16(%arg0: i32) -> (i32, i32) {
    %c0_i32 = arith.constant 0 : i32
    %c0_i32_0 = arith.constant 0 : i32
    %c0_i32_1 = arith.constant 0 : i32
    return %c0_i32, %c0_i32_0 : i32, i32
  }
  func.func @transform_17(%arg0: i32) -> (i32, i32) {
    %c0_i32 = arith.constant 0 : i32
    %c0_i32_0 = arith.constant 0 : i32
    %c0_i32_1 = arith.constant 0 : i32
    return %c0_i32, %c0_i32_0 : i32, i32
  }
  func.func @transform_18(%arg0: i32) -> (i32, i32) {
    %c0_i32 = arith.constant 0 : i32
    %c0_i32_0 = arith.constant 0 : i32
    %c0_i32_1 = arith.constant 0 : i32
    return %c0_i32, %c0_i32_0 : i32, i32
  }
  func.func @transform_19(%arg0: i32) -> (i32, i32) {
    %c0_i32 = arith.constant 0 : i32
    %c0_i32_0 = arith.constant 0 : i32
    %c0_i32_1 = arith.constant 0 : i32
    return %c0_i32, %c0_i32_0 : i32, i32
  }
  func.func @transform_20(%arg0: i32) -> (i32, i32) {
    %c0_i32 = arith.constant 0 : i32
    %c0_i32_0 = arith.constant 0 : i32
    %c0_i32_1 = arith.constant 0 : i32
    return %c0_i32, %c0_i32_0 : i32, i32
  }
  func.func @transform_21(%arg0: i32) -> (i32, i32) {
    %c0_i32 = arith.constant 0 : i32
    %c0_i32_0 = arith.constant 0 : i32
    %c0_i32_1 = arith.constant 0 : i32
    return %c0_i32, %c0_i32_0 : i32, i32
  }
  func.func @transform_22(%arg0: i32) -> (i32, i32) {
    %c0_i32 = arith.constant 0 : i32
    %c0_i32_0 = arith.constant 0 : i32
    %c0_i32_1 = arith.constant 0 : i32
    return %c0_i32, %c0_i32_0 : i32, i32
  }
  func.func @transform_23(%arg0: i32) -> (i32, i32) {
    %c0_i32 = arith.constant 0 : i32
    %c0_i32_0 = arith.constant 0 : i32
    %c0_i32_1 = arith.constant 0 : i32
    return %c0_i32, %c0_i32_0 : i32, i32
  }
  func.func @transform_24(%arg0: i32) -> (i32, i32) {
    %c0_i32 = arith.constant 0 : i32
    %c0_i32_0 = arith.constant 0 : i32
    %c0_i32_1 = arith.constant 0 : i32
    return %c0_i32, %c0_i32_0 : i32, i32
  }
  func.func @transform_25(%arg0: i32) -> (i32, i32) {
    %c0_i32 = arith.constant 0 : i32
    %c0_i32_0 = arith.constant 0 : i32
    %c0_i32_1 = arith.constant 0 : i32
    return %c0_i32, %c0_i32_0 : i32, i32
  }
  func.func @transform_26(%arg0: i32) -> (i32, i32) {
    %c0_i32 = arith.constant 0 : i32
    %c0_i32_0 = arith.constant 0 : i32
    %c0_i32_1 = arith.constant 0 : i32
    return %c0_i32, %c0_i32_0 : i32, i32
  }
  func.func @transform_27(%arg0: i32) -> (i32, i32) {
    %c0_i32 = arith.constant 0 : i32
    %c0_i32_0 = arith.constant 0 : i32
    %c0_i32_1 = arith.constant 0 : i32
    return %c0_i32, %c0_i32_0 : i32, i32
  }
  func.func @transform_28(%arg0: i32) -> (i32, i32) {
    %c0_i32 = arith.constant 0 : i32
    %c0_i32_0 = arith.constant 0 : i32
    %c0_i32_1 = arith.constant 0 : i32
    return %c0_i32, %c0_i32_0 : i32, i32
  }
  func.func @transform_29(%arg0: i32) -> (i32, i32) {
    %c0_i32 = arith.constant 0 : i32
    %c0_i32_0 = arith.constant 0 : i32
    %c0_i32_1 = arith.constant 0 : i32
    return %c0_i32, %c0_i32_0 : i32, i32
  }
  func.func @transform_30(%arg0: i32) -> (i32, i32) {
    %c0_i32 = arith.constant 0 : i32
    %c0_i32_0 = arith.constant 0 : i32
    %c0_i32_1 = arith.constant 0 : i32
    return %c0_i32, %c0_i32_0 : i32, i32
  }
  func.func @transform_31(%arg0: i32) -> (i32, i32) {
    %c0_i32 = arith.constant 0 : i32
    %c0_i32_0 = arith.constant 0 : i32
    %c0_i32_1 = arith.constant 0 : i32
    return %c0_i32, %c0_i32_0 : i32, i32
  }
  func.func @transform_32(%arg0: i32) -> (i32, i32) {
    %c0_i32 = arith.constant 0 : i32
    %c0_i32_0 = arith.constant 0 : i32
    %c0_i32_1 = arith.constant 0 : i32
    return %c0_i32, %c0_i32_0 : i32, i32
  }
  func.func @transform_33(%arg0: i32) -> (i32, i32) {
    %c0_i32 = arith.constant 0 : i32
    %c0_i32_0 = arith.constant 0 : i32
    %c0_i32_1 = arith.constant 0 : i32
    return %c0_i32, %c0_i32_0 : i32, i32
  }
  func.func @transform_34(%arg0: i32) -> (i32, i32) {
    %c0_i32 = arith.constant 0 : i32
    %c0_i32_0 = arith.constant 0 : i32
    return %arg0, %c0_i32 : i32, i32
  }
}

</mosaic_0001>

<llo_original>
// kernel: tpu_custom_call.1
$region0: #{tpu_custom_call.1}
  #allocation0 [shape = 'u32[]', space=smem, size = 0x4, offset = 0x4, fixed_abs, tag = 'smem constant byte address 0x4 - core index']
  #allocation1 [shape = 'u32[144,128]{1,0:T(1,128)}', space=vmem, size = 0x12000, scoped, tag = 'internal scratch']
  %s0 = inlined_call_operand.smem [shape: u32[35], index: -1, kind: input, shape index: {}]
  %s1 = sld [smem:[%s0]]
  %s2 = scalar_lea.smem %s0, 1
  %s3 = sld [smem:[%s2]]
  %s4 = scalar_lea.smem %s0, 2
  %s5 = sld [smem:[%s4]]
  %s6 = scalar_lea.smem %s0, 3
  %s7 = sld [smem:[%s6]]
  %s8 = scalar_lea.smem %s0, 4
  %s9 = sld [smem:[%s8]]
  %s10 = scalar_lea.smem %s0, 5
  %s11 = sld [smem:[%s10]]
  %s12 = scalar_lea.smem %s0, 6
  %s13 = sld [smem:[%s12]]
  %s14 = scalar_lea.smem %s0, 7
  %s15 = sld [smem:[%s14]]
  %s16 = scalar_lea.smem %s0, 8
  %s17 = sld [smem:[%s16]]
  %s18 = scalar_lea.smem %s0, 9
  %s19 = sld [smem:[%s18]]
  %s20 = scalar_lea.smem %s0, 10
  %s21 = sld [smem:[%s20]]
  %s22 = scalar_lea.smem %s0, 11
  %s23 = sld [smem:[%s22]]
  %s24 = scalar_lea.smem %s0, 12
  %s25 = sld [smem:[%s24]]
  %s26 = scalar_lea.smem %s0, 13
  %s27 = sld [smem:[%s26]]
  %s28 = scalar_lea.smem %s0, 14
  %s29 = sld [smem:[%s28]]
  %s30 = scalar_lea.smem %s0, 15
  %s31 = sld [smem:[%s30]]
  %s32 = scalar_lea.smem %s0, 16
  %s33 = sld [smem:[%s32]]
  %s34 = scalar_lea.smem %s0, 17
  %s35 = sld [smem:[%s34]]
  %s36 = scalar_lea.smem %s0, 18
  %s37 = sld [smem:[%s36]]
  %s38 = scalar_lea.smem %s0, 19
  %s39 = sld [smem:[%s38]]
  %s40 = scalar_lea.smem %s0, 20
  %s41 = sld [smem:[%s40]]
  %s42 = scalar_lea.smem %s0, 21
  %s43 = sld [smem:[%s42]]
  %s44 = scalar_lea.smem %s0, 22
  %s45 = sld [smem:[%s44]]
  %s46 = scalar_lea.smem %s0, 23
  %s47 = sld [smem:[%s46]]
  %s48 = scalar_lea.smem %s0, 24
  %s49 = sld [smem:[%s48]]
  %s50 = scalar_lea.smem %s0, 25
  %s51 = sld [smem:[%s50]]
  %s52 = scalar_lea.smem %s0, 26
  %s53 = sld [smem:[%s52]]
  %s54 = scalar_lea.smem %s0, 27
  %s55 = sld [smem:[%s54]]
  %s56 = scalar_lea.smem %s0, 28
  %s57 = sld [smem:[%s56]]
  %s58 = scalar_lea.smem %s0, 29
  %s59 = sld [smem:[%s58]]
  %s60 = scalar_lea.smem %s0, 30
  %s61 = sld [smem:[%s60]]
  %s62 = scalar_lea.smem %s0, 31
  %s63 = sld [smem:[%s62]]
  %s64 = scalar_lea.smem %s0, 32
  %s65 = sld [smem:[%s64]]
  %s66 = scalar_lea.smem %s0, 33
  %s67 = sld [smem:[%s66]]
  %s68 = scalar_lea.smem %s0, 34
  %s69 = sld [smem:[%s68]]
  %s70 = sld [smem:[#allocation0]]
  $region221: #{tpu_custom_call.1} parent=0
    _
  %s72 = ssub.s32 1, %s70
  %s73 = scalar_select 0, %s72, %s70
  $region1: #{tpu_custom_call.1} parent=0
    #allocation2 [shape = 'u8[2048]{0}', space=vmem, size = 0x800, scoped, tag = 'input window, operand 6']
    #allocation3 [shape = 's32[2]{0}', space=sflag, size = 0x8, scoped, tag = 'scoped memory for tpu_custom_call.1']
    #allocation4 [shape = 's32[2]{0}', space=sflag, size = 0x8, scoped, tag = 'scoped memory for tpu_custom_call.1']
    #allocation5 [shape = 'u8[2048]{0}', space=vmem, size = 0x800, scoped, tag = 'input window, operand 7']
    #allocation6 [shape = 's32[2]{0}', space=sflag, size = 0x8, scoped, tag = 'scoped memory for tpu_custom_call.1']
    #allocation7 [shape = 'u8[512]{0}', space=vmem, size = 0x400, scoped, tag = 'input window, operand 9, single buffered']
    #allocation8 [shape = 'u8[512]{0}', space=vmem, size = 0x400, scoped, tag = 'input window, operand 11, single buffered']
    #allocation9 [shape = 's32[1]{0}', space=sflag, size = 0x4, scoped, tag = 'scoped memory for tpu_custom_call.1']
    #allocation10 [shape = 'u8[512]{0}', space=vmem, size = 0x400, scoped, tag = 'input window, operand 13, single buffered']
    #allocation11 [shape = 'u8[16384]{0}', space=vmem, size = 0x4000, scoped, tag = 'input window, operand 14, single buffered']
    #allocation12 [shape = 's32[1]{0}', space=sflag, size = 0x4, scoped, tag = 'scoped memory for tpu_custom_call.1']
    #allocation13 [shape = 'u8[512]{0}', space=vmem, size = 0x400, scoped, tag = 'input window, operand 15, single buffered']
    #allocation14 [shape = 'u8[16384]{0}', space=vmem, size = 0x4000, scoped, tag = 'input window, operand 16, single buffered']
    #allocation15 [shape = 's32[1]{0}', space=sflag, size = 0x4, scoped, tag = 'scoped memory for tpu_custom_call.1']
    #allocation16 [shape = 'u8[512]{0}', space=vmem, size = 0x400, scoped, tag = 'input window, operand 17, single buffered']
    #allocation17 [shape = 'u8[512]{0}', space=vmem, size = 0x400, scoped, tag = 'input window, operand 19, single buffered']
    #allocation18 [shape = 's32[1]{0}', space=sflag, size = 0x4, scoped, tag = 'scoped memory for tpu_custom_call.1']
    #allocation19 [shape = 'u8[16384]{0}', space=vmem, size = 0x4000, scoped, tag = 'input window, operand 20, single buffered']
    #allocation20 [shape = 'u8[16384]{0}', space=vmem, size = 0x4000, scoped, tag = 'input window, operand 22, single buffered']
    #allocation21 [shape = 's32[1]{0}', space=sflag, size = 0x4, scoped, tag = 'scoped memory for tpu_custom_call.1']
    #allocation22 [shape = 'u8[16384]{0}', space=vmem, size = 0x4000, scoped, tag = 'input window, operand 24, single buffered']
    #allocation23 [shape = 'u8[16384]{0}', space=vmem, size = 0x4000, scoped, tag = 'output window, operand 0']
    %74 = vsyncpa [#allocation3], 0
    %s75 = scalar_lea.sflag [#allocation3], 1
    %76 = vsyncpa %s75, 0
    %77 = vsyncpa [#allocation6], 0
    %s78 = scalar_lea.sflag [#allocation6], 1
    %79 = vsyncpa %s78, 0
    %80 = vsyncpa [#allocation9], 0
    %81 = vsyncpa [#allocation12], 0
    %82 = vsyncpa [#allocation15], 0
    %83 = vsyncpa [#allocation18], 0
    %84 = vsyncpa [#allocation21], 0
    %85 = vsyncpa [#allocation4], 0
    %s86 = scalar_lea.sflag [#allocation4], 1
    %87 = vsyncpa %s86, 0
    loop: start=0, step=1, limit=4
    $region2: #{tpu_custom_call.1} parent=1 // loop_pre_header
      _
    $region3: #{tpu_custom_call.1} parent=1 // loop_header
      %s89 = sphi 0, %s93
      %p90 = scmp.ge.s32.totalorder %s89, 4
      %s99 = sphi 0, %s101
      %s102 = sphi 0, %s99
      %s103 = sphi 0, %s102
      %s119 = sphi 0, %s103
      %s125 = sphi 0, %s127
      %s128 = sphi 0, %s125
      %s129 = sphi 0, %s128
      %s145 = sphi 0, %s129
      %s151 = sphi 0, %s153
      %s154 = sphi 0, %s151
      %s155 = sphi 0, %s154
      %s171 = sphi 0, %s155
      %s177 = sphi 0, %s179
      %s180 = sphi 0, %s177
      %s181 = sphi 0, %s180
      %s197 = sphi 0, %s181
      %s203 = sphi 0, %s205
      %s206 = sphi 0, %s203
      %s207 = sphi 0, %s206
      %s223 = sphi 0, %s207
      %s229 = sphi 0, %s231
      %s232 = sphi 0, %s229
      %s233 = sphi 0, %s232
      %s249 = sphi 0, %s233
      %s255 = sphi 0, %s257
      %s258 = sphi 0, %s255
      %s259 = sphi 0, %s258
      %s275 = sphi 0, %s259
      %s281 = sphi 0, %s283
      %s284 = sphi 0, %s281
      %s285 = sphi 0, %s284
      %s301 = sphi 0, %s285
      %s305 = sphi 0, %s305
      %s307 = sphi 0, %s305
      %s308 = sphi 0, %s307
      %s322 = sphi 0, %s308
      %s326 = sphi 0, %s326
      %s328 = sphi 0, %s326
      %s329 = sphi 0, %s328
      %s343 = sphi 0, %s329
      %s347 = sphi 0, %s347
      %s349 = sphi 0, %s347
      %s350 = sphi 0, %s349
      %s364 = sphi 0, %s350
      %s368 = sphi 0, %s368
      %s370 = sphi 0, %s368
      %s371 = sphi 0, %s370
      %s385 = sphi 0, %s371
      %s389 = sphi 0, %s389
      %s391 = sphi 0, %s389
      %s392 = sphi 0, %s391
      %s406 = sphi 0, %s392
      %s410 = sphi 0, %s410
      %s412 = sphi 0, %s410
      %s413 = sphi 0, %s412
      %s427 = sphi 0, %s413
      %s431 = sphi 0, %s431
      %s433 = sphi 0, %s431
      %s434 = sphi 0, %s433
      %s448 = sphi 0, %s434
      %s452 = sphi 0, %s452
      %s454 = sphi 0, %s452
      %s455 = sphi 0, %s454
      %s469 = sphi 0, %s455
      %s473 = sphi 0, %s473
      %s475 = sphi 0, %s473
      %s476 = sphi 0, %s475
      %s490 = sphi 0, %s476
      %s494 = sphi 0, %s494
      %s496 = sphi 0, %s494
      %s497 = sphi 0, %s496
      %s511 = sphi 0, %s497
      %s515 = sphi 0, %s515
      %s517 = sphi 0, %s515
      %s518 = sphi 0, %s517
      %s532 = sphi 0, %s518
      %s536 = sphi 0, %s536
      %s538 = sphi 0, %s536
      %s539 = sphi 0, %s538
      %s553 = sphi 0, %s539
      %s557 = sphi 0, %s557
      %s559 = sphi 0, %s557
      %s560 = sphi 0, %s559
      %s574 = sphi 0, %s560
      %s578 = sphi 0, %s578
      %s580 = sphi 0, %s578
      %s581 = sphi 0, %s580
      %s595 = sphi 0, %s581
      %s599 = sphi 0, %s599
      %s601 = sphi 0, %s599
      %s602 = sphi 0, %s601
      %s616 = sphi 0, %s602
      %s620 = sphi 0, %s620
      %s622 = sphi 0, %s620
      %s623 = sphi 0, %s622
      %s637 = sphi 0, %s623
      %s641 = sphi 0, %s641
      %s643 = sphi 0, %s641
      %s644 = sphi 0, %s643
      %s658 = sphi 0, %s644
      %s662 = sphi 0, %s662
      %s664 = sphi 0, %s662
      %s665 = sphi 0, %s664
      %s679 = sphi 0, %s665
      %s683 = sphi 0, %s683
      %s685 = sphi 0, %s683
      %s686 = sphi 0, %s685
      %s700 = sphi 0, %s686
      %s704 = sphi 0, %s704
      %s706 = sphi 0, %s704
      %s707 = sphi 0, %s706
      %s721 = sphi 0, %s707
      %s725 = sphi 0, %s725
      %s727 = sphi 0, %s725
      %s728 = sphi 0, %s727
      %s742 = sphi 0, %s728
      %s746 = sphi 0, %s746
      %s748 = sphi 0, %s746
      %s749 = sphi 0, %s748
      %s763 = sphi 0, %s749
      %s767 = sphi 0, %s767
      %s769 = sphi 0, %s767
      %s770 = sphi 0, %s769
      %s784 = sphi 0, %s770
      %s788 = sphi 0, %s788
      %s790 = sphi 0, %s788
      %s791 = sphi 0, %s790
      %s805 = sphi 0, %s791
      %s809 = sphi 0, %s809
      %s811 = sphi 0, %s809
      %s812 = sphi 0, %s811
      %s826 = sphi 0, %s812
      %s830 = sphi 0, %s830
      %s832 = sphi 0, %s830
      %s833 = sphi 0, %s832
      %s847 = sphi 0, %s833
      %s853 = sphi 0, %s855
      %s856 = sphi 0, %s853
      %s857 = sphi 0, %s856
      %s873 = sphi 0, %s857
    $region4: #{tpu_custom_call.1} parent=1 // loop_header_branch
      %92 = sbr.rel (%p90) target = $region8
    $region5: #{tpu_custom_call.1} parent=1 // loop_body
      %s94 = ssub.s32 %s89, 1
      %s95 = ssub.s32 %s89, 2
      %s96 = sadd.s32 %s89, 1
      %s97 = ssub.s32 %s89, %s96
      %p98 = scmp.eq.s32.totalorder %s97, 0
      %s100 = sadd.s32 %s99, 1
      %s101 = scalar_select %p98, %s99, %s100
      %p104 = pneg %p98
      %p105 = scmp.eq.s32.totalorder %s89, 1
      %p106 = por %p104, %p105
      %p107 = scmp.ne.s32.totalorder %s99, %s102
      %p108 = scmp.eq.s32.totalorder %s89, 0
      %p109 = por %p107, %p108
      %p110 = scmp.ne.s32.totalorder %s99, %s102
      %p111 = scmp.eq.s32.totalorder %s94, 1
      %p112 = por %p110, %p111
      %p113 = scmp.ne.s32.totalorder %s102, %s103
      %p114 = scmp.eq.s32.totalorder %s94, 0
      %p115 = por %p113, %p114
      %p116 = scmp.ne.s32.totalorder %s102, %s103
      %p117 = scmp.eq.s32.totalorder %s95, 1
      %p118 = por %p116, %p117
      %p120 = scmp.ne.s32.totalorder %s103, %s119
      %p121 = scmp.eq.s32.totalorder %s95, 0
      %p122 = por %p120, %p121
      %s123 = ssub.s32 %s89, %s96
      %p124 = scmp.eq.s32.totalorder %s123, 0
      %s126 = sadd.s32 %s125, 1
      %s127 = scalar_select %p124, %s125, %s126
      %p130 = pneg %p124
      %p131 = scmp.eq.s32.totalorder %s89, 1
      %p132 = por %p130, %p131
      %p133 = scmp.ne.s32.totalorder %s125, %s128
      %p134 = scmp.eq.s32.totalorder %s89, 0
      %p135 = por %p133, %p134
      %p136 = scmp.ne.s32.totalorder %s125, %s128
      %p137 = scmp.eq.s32.totalorder %s94, 1
      %p138 = por %p136, %p137
      %p139 = scmp.ne.s32.totalorder %s128, %s129
      %p140 = scmp.eq.s32.totalorder %s94, 0
      %p141 = por %p139, %p140
      %p142 = scmp.ne.s32.totalorder %s128, %s129
      %p143 = scmp.eq.s32.totalorder %s95, 1
      %p144 = por %p142, %p143
      %p146 = scmp.ne.s32.totalorder %s129, %s145
      %p147 = scmp.eq.s32.totalorder %s95, 0
      %p148 = por %p146, %p147
      %s149 = ssub.s32 %s89, %s96
      %p150 = scmp.eq.s32.totalorder %s149, 0
      %s152 = sadd.s32 %s151, 1
      %s153 = scalar_select %p150, %s151, %s152
      %p156 = pneg %p150
      %p157 = scmp.eq.s32.totalorder %s89, 1
      %p158 = por %p156, %p157
      %p159 = scmp.ne.s32.totalorder %s151, %s154
      %p160 = scmp.eq.s32.totalorder %s89, 0
      %p161 = por %p159, %p160
      %p162 = scmp.ne.s32.totalorder %s151, %s154
      %p163 = scmp.eq.s32.totalorder %s94, 1
      %p164 = por %p162, %p163
      %p165 = scmp.ne.s32.totalorder %s154, %s155
      %p166 = scmp.eq.s32.totalorder %s94, 0
      %p167 = por %p165, %p166
      %p168 = scmp.ne.s32.totalorder %s154, %s155
      %p169 = scmp.eq.s32.totalorder %s95, 1
      %p170 = por %p168, %p169
      %p172 = scmp.ne.s32.totalorder %s155, %s171
      %p173 = scmp.eq.s32.totalorder %s95, 0
      %p174 = por %p172, %p173
      %s175 = ssub.s32 %s89, %s96
      %p176 = scmp.eq.s32.totalorder %s175, 0
      %s178 = sadd.s32 %s177, 1
      %s179 = scalar_select %p176, %s177, %s178
      %p182 = pneg %p176
      %p183 = scmp.eq.s32.totalorder %s89, 1
      %p184 = por %p182, %p183
      %p185 = scmp.ne.s32.totalorder %s177, %s180
      %p186 = scmp.eq.s32.totalorder %s89, 0
      %p187 = por %p185, %p186
      %p188 = scmp.ne.s32.totalorder %s177, %s180
      %p189 = scmp.eq.s32.totalorder %s94, 1
      %p190 = por %p188, %p189
      %p191 = scmp.ne.s32.totalorder %s180, %s181
      %p192 = scmp.eq.s32.totalorder %s94, 0
      %p193 = por %p191, %p192
      %p194 = scmp.ne.s32.totalorder %s180, %s181
      %p195 = scmp.eq.s32.totalorder %s95, 1
      %p196 = por %p194, %p195
      %p198 = scmp.ne.s32.totalorder %s181, %s197
      %p199 = scmp.eq.s32.totalorder %s95, 0
      %p200 = por %p198, %p199
      %s201 = ssub.s32 %s89, %s96
      %p202 = scmp.eq.s32.totalorder %s201, 0
      %s204 = sadd.s32 %s203, 1
      %s205 = scalar_select %p202, %s203, %s204
      %p208 = pneg %p202
      %p209 = scmp.eq.s32.totalorder %s89, 1
      %p210 = por %p208, %p209
      %p211 = scmp.ne.s32.totalorder %s203, %s206
      %p212 = scmp.eq.s32.totalorder %s89, 0
      %p213 = por %p211, %p212
      %p214 = scmp.ne.s32.totalorder %s203, %s206
      %p215 = scmp.eq.s32.totalorder %s94, 1
      %p216 = por %p214, %p215
      %p217 = scmp.ne.s32.totalorder %s206, %s207
      %p218 = scmp.eq.s32.totalorder %s94, 0
      %p219 = por %p217, %p218
      %p220 = scmp.ne.s32.totalorder %s206, %s207
      %p221 = scmp.eq.s32.totalorder %s95, 1
      %p222 = por %p220, %p221
      %p224 = scmp.ne.s32.totalorder %s207, %s223
      %p225 = scmp.eq.s32.totalorder %s95, 0
      %p226 = por %p224, %p225
      %s227 = ssub.s32 %s89, %s96
      %p228 = scmp.eq.s32.totalorder %s227, 0
      %s230 = sadd.s32 %s229, 1
      %s231 = scalar_select %p228, %s229, %s230
      %p234 = pneg %p228
      %p235 = scmp.eq.s32.totalorder %s89, 1
      %p236 = por %p234, %p235
      %p237 = scmp.ne.s32.totalorder %s229, %s232
      %p238 = scmp.eq.s32.totalorder %s89, 0
      %p239 = por %p237, %p238
      %p240 = scmp.ne.s32.totalorder %s229, %s232
      %p241 = scmp.eq.s32.totalorder %s94, 1
      %p242 = por %p240, %p241
      %p243 = scmp.ne.s32.totalorder %s232, %s233
      %p244 = scmp.eq.s32.totalorder %s94, 0
      %p245 = por %p243, %p244
      %p246 = scmp.ne.s32.totalorder %s232, %s233
      %p247 = scmp.eq.s32.totalorder %s95, 1
      %p248 = por %p246, %p247
      %p250 = scmp.ne.s32.totalorder %s233, %s249
      %p251 = scmp.eq.s32.totalorder %s95, 0
      %p252 = por %p250, %p251
      %s253 = ssub.s32 %s89, %s96
      %p254 = scmp.eq.s32.totalorder %s253, 0
      %s256 = sadd.s32 %s255, 1
      %s257 = scalar_select %p254, %s255, %s256
      %p260 = pneg %p254
      %p261 = scmp.eq.s32.totalorder %s89, 1
      %p262 = por %p260, %p261
      %p263 = scmp.ne.s32.totalorder %s255, %s258
      %p264 = scmp.eq.s32.totalorder %s89, 0
      %p265 = por %p263, %p264
      %p266 = scmp.ne.s32.totalorder %s255, %s258
      %p267 = scmp.eq.s32.totalorder %s94, 1
      %p268 = por %p266, %p267
      %p269 = scmp.ne.s32.totalorder %s258, %s259
      %p270 = scmp.eq.s32.totalorder %s94, 0
      %p271 = por %p269, %p270
      %p272 = scmp.ne.s32.totalorder %s258, %s259
      %p273 = scmp.eq.s32.totalorder %s95, 1
      %p274 = por %p272, %p273
      %p276 = scmp.ne.s32.totalorder %s259, %s275
      %p277 = scmp.eq.s32.totalorder %s95, 0
      %p278 = por %p276, %p277
      %s279 = ssub.s32 %s89, %s96
      %p280 = scmp.eq.s32.totalorder %s279, 0
      %s282 = sadd.s32 %s281, 1
      %s283 = scalar_select %p280, %s281, %s282
      %p286 = pneg %p280
      %p287 = scmp.eq.s32.totalorder %s89, 1
      %p288 = por %p286, %p287
      %p289 = scmp.ne.s32.totalorder %s281, %s284
      %p290 = scmp.eq.s32.totalorder %s89, 0
      %p291 = por %p289, %p290
      %p292 = scmp.ne.s32.totalorder %s281, %s284
      %p293 = scmp.eq.s32.totalorder %s94, 1
      %p294 = por %p292, %p293
      %p295 = scmp.ne.s32.totalorder %s284, %s285
      %p296 = scmp.eq.s32.totalorder %s94, 0
      %p297 = por %p295, %p296
      %p298 = scmp.ne.s32.totalorder %s284, %s285
      %p299 = scmp.eq.s32.totalorder %s95, 1
      %p300 = por %p298, %p299
      %p302 = scmp.ne.s32.totalorder %s285, %s301
      %p303 = scmp.eq.s32.totalorder %s95, 0
      %p304 = por %p302, %p303
      %s306 = sadd.s32 %s305, 1
      %p309 = scmp.eq.s32.totalorder %s89, 1
      %p310 = scmp.ne.s32.totalorder %s305, %s307
      %p311 = scmp.eq.s32.totalorder %s89, 0
      %p312 = por %p310, %p311
      %p313 = scmp.ne.s32.totalorder %s305, %s307
      %p314 = scmp.eq.s32.totalorder %s94, 1
      %p315 = por %p313, %p314
      %p316 = scmp.ne.s32.totalorder %s307, %s308
      %p317 = scmp.eq.s32.totalorder %s94, 0
      %p318 = por %p316, %p317
      %p319 = scmp.ne.s32.totalorder %s307, %s308
      %p320 = scmp.eq.s32.totalorder %s95, 1
      %p321 = por %p319, %p320
      %p323 = scmp.ne.s32.totalorder %s308, %s322
      %p324 = scmp.eq.s32.totalorder %s95, 0
      %p325 = por %p323, %p324
      %s327 = sadd.s32 %s326, 1
      %p330 = scmp.eq.s32.totalorder %s89, 1
      %p331 = scmp.ne.s32.totalorder %s326, %s328
      %p332 = scmp.eq.s32.totalorder %s89, 0
      %p333 = por %p331, %p332
      %p334 = scmp.ne.s32.totalorder %s326, %s328
      %p335 = scmp.eq.s32.totalorder %s94, 1
      %p336 = por %p334, %p335
      %p337 = scmp.ne.s32.totalorder %s328, %s329
      %p338 = scmp.eq.s32.totalorder %s94, 0
      %p339 = por %p337, %p338
      %p340 = scmp.ne.s32.totalorder %s328, %s329
      %p341 = scmp.eq.s32.totalorder %s95, 1
      %p342 = por %p340, %p341
      %p344 = scmp.ne.s32.totalorder %s329, %s343
      %p345 = scmp.eq.s32.totalorder %s95, 0
      %p346 = por %p344, %p345
      %s348 = sadd.s32 %s347, 1
      %p351 = scmp.eq.s32.totalorder %s89, 1
      %p352 = scmp.ne.s32.totalorder %s347, %s349
      %p353 = scmp.eq.s32.totalorder %s89, 0
      %p354 = por %p352, %p353
      %p355 = scmp.ne.s32.totalorder %s347, %s349
      %p356 = scmp.eq.s32.totalorder %s94, 1
      %p357 = por %p355, %p356
      %p358 = scmp.ne.s32.totalorder %s349, %s350
      %p359 = scmp.eq.s32.totalorder %s94, 0
      %p360 = por %p358, %p359
      %p361 = scmp.ne.s32.totalorder %s349, %s350
      %p362 = scmp.eq.s32.totalorder %s95, 1
      %p363 = por %p361, %p362
      %p365 = scmp.ne.s32.totalorder %s350, %s364
      %p366 = scmp.eq.s32.totalorder %s95, 0
      %p367 = por %p365, %p366
      %s369 = sadd.s32 %s368, 1
      %p372 = scmp.eq.s32.totalorder %s89, 1
      %p373 = scmp.ne.s32.totalorder %s368, %s370
      %p374 = scmp.eq.s32.totalorder %s89, 0
      %p375 = por %p373, %p374
      %p376 = scmp.ne.s32.totalorder %s368, %s370
      %p377 = scmp.eq.s32.totalorder %s94, 1
      %p378 = por %p376, %p377
      %p379 = scmp.ne.s32.totalorder %s370, %s371
      %p380 = scmp.eq.s32.totalorder %s94, 0
      %p381 = por %p379, %p380
      %p382 = scmp.ne.s32.totalorder %s370, %s371
      %p383 = scmp.eq.s32.totalorder %s95, 1
      %p384 = por %p382, %p383
      %p386 = scmp.ne.s32.totalorder %s371, %s385
      %p387 = scmp.eq.s32.totalorder %s95, 0
      %p388 = por %p386, %p387
      %s390 = sadd.s32 %s389, 1
      %p393 = scmp.eq.s32.totalorder %s89, 1
      %p394 = scmp.ne.s32.totalorder %s389, %s391
      %p395 = scmp.eq.s32.totalorder %s89, 0
      %p396 = por %p394, %p395
      %p397 = scmp.ne.s32.totalorder %s389, %s391
      %p398 = scmp.eq.s32.totalorder %s94, 1
      %p399 = por %p397, %p398
      %p400 = scmp.ne.s32.totalorder %s391, %s392
      %p401 = scmp.eq.s32.totalorder %s94, 0
      %p402 = por %p400, %p401
      %p403 = scmp.ne.s32.totalorder %s391, %s392
      %p404 = scmp.eq.s32.totalorder %s95, 1
      %p405 = por %p403, %p404
      %p407 = scmp.ne.s32.totalorder %s392, %s406
      %p408 = scmp.eq.s32.totalorder %s95, 0
      %p409 = por %p407, %p408
      %s411 = sadd.s32 %s410, 1
      %p414 = scmp.eq.s32.totalorder %s89, 1
      %p415 = scmp.ne.s32.totalorder %s410, %s412
      %p416 = scmp.eq.s32.totalorder %s89, 0
      %p417 = por %p415, %p416
      %p418 = scmp.ne.s32.totalorder %s410, %s412
      %p419 = scmp.eq.s32.totalorder %s94, 1
      %p420 = por %p418, %p419
      %p421 = scmp.ne.s32.totalorder %s412, %s413
      %p422 = scmp.eq.s32.totalorder %s94, 0
      %p423 = por %p421, %p422
      %p424 = scmp.ne.s32.totalorder %s412, %s413
      %p425 = scmp.eq.s32.totalorder %s95, 1
      %p426 = por %p424, %p425
      %p428 = scmp.ne.s32.totalorder %s413, %s427
      %p429 = scmp.eq.s32.totalorder %s95, 0
      %p430 = por %p428, %p429
      %s432 = sadd.s32 %s431, 1
      %p435 = scmp.eq.s32.totalorder %s89, 1
      %p436 = scmp.ne.s32.totalorder %s431, %s433
      %p437 = scmp.eq.s32.totalorder %s89, 0
      %p438 = por %p436, %p437
      %p439 = scmp.ne.s32.totalorder %s431, %s433
      %p440 = scmp.eq.s32.totalorder %s94, 1
      %p441 = por %p439, %p440
      %p442 = scmp.ne.s32.totalorder %s433, %s434
      %p443 = scmp.eq.s32.totalorder %s94, 0
      %p444 = por %p442, %p443
      %p445 = scmp.ne.s32.totalorder %s433, %s434
      %p446 = scmp.eq.s32.totalorder %s95, 1
      %p447 = por %p445, %p446
      %p449 = scmp.ne.s32.totalorder %s434, %s448
      %p450 = scmp.eq.s32.totalorder %s95, 0
      %p451 = por %p449, %p450
      %s453 = sadd.s32 %s452, 1
      %p456 = scmp.eq.s32.totalorder %s89, 1
      %p457 = scmp.ne.s32.totalorder %s452, %s454
      %p458 = scmp.eq.s32.totalorder %s89, 0
      %p459 = por %p457, %p458
      %p460 = scmp.ne.s32.totalorder %s452, %s454
      %p461 = scmp.eq.s32.totalorder %s94, 1
      %p462 = por %p460, %p461
      %p463 = scmp.ne.s32.totalorder %s454, %s455
      %p464 = scmp.eq.s32.totalorder %s94, 0
      %p465 = por %p463, %p464
      %p466 = scmp.ne.s32.totalorder %s454, %s455
      %p467 = scmp.eq.s32.totalorder %s95, 1
      %p468 = por %p466, %p467
      %p470 = scmp.ne.s32.totalorder %s455, %s469
      %p471 = scmp.eq.s32.totalorder %s95, 0
      %p472 = por %p470, %p471
      %s474 = sadd.s32 %s473, 1
      %p477 = scmp.eq.s32.totalorder %s89, 1
      %p478 = scmp.ne.s32.totalorder %s473, %s475
      %p479 = scmp.eq.s32.totalorder %s89, 0
      %p480 = por %p478, %p479
      %p481 = scmp.ne.s32.totalorder %s473, %s475
      %p482 = scmp.eq.s32.totalorder %s94, 1
      %p483 = por %p481, %p482
      %p484 = scmp.ne.s32.totalorder %s475, %s476
      %p485 = scmp.eq.s32.totalorder %s94, 0
      %p486 = por %p484, %p485
      %p487 = scmp.ne.s32.totalorder %s475, %s476
      %p488 = scmp.eq.s32.totalorder %s95, 1
      %p489 = por %p487, %p488
      %p491 = scmp.ne.s32.totalorder %s476, %s490
      %p492 = scmp.eq.s32.totalorder %s95, 0
      %p493 = por %p491, %p492
      %s495 = sadd.s32 %s494, 1
      %p498 = scmp.eq.s32.totalorder %s89, 1
      %p499 = scmp.ne.s32.totalorder %s494, %s496
      %p500 = scmp.eq.s32.totalorder %s89, 0
      %p501 = por %p499, %p500
      %p502 = scmp.ne.s32.totalorder %s494, %s496
      %p503 = scmp.eq.s32.totalorder %s94, 1
      %p504 = por %p502, %p503
      %p505 = scmp.ne.s32.totalorder %s496, %s497
      %p506 = scmp.eq.s32.totalorder %s94, 0
      %p507 = por %p505, %p506
      %p508 = scmp.ne.s32.totalorder %s496, %s497
      %p509 = scmp.eq.s32.totalorder %s95, 1
      %p510 = por %p508, %p509
      %p512 = scmp.ne.s32.totalorder %s497, %s511
      %p513 = scmp.eq.s32.totalorder %s95, 0
      %p514 = por %p512, %p513
      %s516 = sadd.s32 %s515, 1
      %p519 = scmp.eq.s32.totalorder %s89, 1
      %p520 = scmp.ne.s32.totalorder %s515, %s517
      %p521 = scmp.eq.s32.totalorder %s89, 0
      %p522 = por %p520, %p521
      %p523 = scmp.ne.s32.totalorder %s515, %s517
      %p524 = scmp.eq.s32.totalorder %s94, 1
      %p525 = por %p523, %p524
      %p526 = scmp.ne.s32.totalorder %s517, %s518
      %p527 = scmp.eq.s32.totalorder %s94, 0
      %p528 = por %p526, %p527
      %p529 = scmp.ne.s32.totalorder %s517, %s518
      %p530 = scmp.eq.s32.totalorder %s95, 1
      %p531 = por %p529, %p530
      %p533 = scmp.ne.s32.totalorder %s518, %s532
      %p534 = scmp.eq.s32.totalorder %s95, 0
      %p535 = por %p533, %p534
      %s537 = sadd.s32 %s536, 1
      %p540 = scmp.eq.s32.totalorder %s89, 1
      %p541 = scmp.ne.s32.totalorder %s536, %s538
      %p542 = scmp.eq.s32.totalorder %s89, 0
      %p543 = por %p541, %p542
      %p544 = scmp.ne.s32.totalorder %s536, %s538
      %p545 = scmp.eq.s32.totalorder %s94, 1
      %p546 = por %p544, %p545
      %p547 = scmp.ne.s32.totalorder %s538, %s539
      %p548 = scmp.eq.s32.totalorder %s94, 0
      %p549 = por %p547, %p548
      %p550 = scmp.ne.s32.totalorder %s538, %s539
      %p551 = scmp.eq.s32.totalorder %s95, 1
      %p552 = por %p550, %p551
      %p554 = scmp.ne.s32.totalorder %s539, %s553
      %p555 = scmp.eq.s32.totalorder %s95, 0
      %p556 = por %p554, %p555
      %s558 = sadd.s32 %s557, 1
      %p561 = scmp.eq.s32.totalorder %s89, 1
      %p562 = scmp.ne.s32.totalorder %s557, %s559
      %p563 = scmp.eq.s32.totalorder %s89, 0
      %p564 = por %p562, %p563
      %p565 = scmp.ne.s32.totalorder %s557, %s559
      %p566 = scmp.eq.s32.totalorder %s94, 1
      %p567 = por %p565, %p566
      %p568 = scmp.ne.s32.totalorder %s559, %s560
      %p569 = scmp.eq.s32.totalorder %s94, 0
      %p570 = por %p568, %p569
      %p571 = scmp.ne.s32.totalorder %s559, %s560
      %p572 = scmp.eq.s32.totalorder %s95, 1
      %p573 = por %p571, %p572
      %p575 = scmp.ne.s32.totalorder %s560, %s574
      %p576 = scmp.eq.s32.totalorder %s95, 0
      %p577 = por %p575, %p576
      %s579 = sadd.s32 %s578, 1
      %p582 = scmp.eq.s32.totalorder %s89, 1
      %p583 = scmp.ne.s32.totalorder %s578, %s580
      %p584 = scmp.eq.s32.totalorder %s89, 0
      %p585 = por %p583, %p584
      %p586 = scmp.ne.s32.totalorder %s578, %s580
      %p587 = scmp.eq.s32.totalorder %s94, 1
      %p588 = por %p586, %p587
      %p589 = scmp.ne.s32.totalorder %s580, %s581
      %p590 = scmp.eq.s32.totalorder %s94, 0
      %p591 = por %p589, %p590
      %p592 = scmp.ne.s32.totalorder %s580, %s581
      %p593 = scmp.eq.s32.totalorder %s95, 1
      %p594 = por %p592, %p593
      %p596 = scmp.ne.s32.totalorder %s581, %s595
      %p597 = scmp.eq.s32.totalorder %s95, 0
      %p598 = por %p596, %p597
      %s600 = sadd.s32 %s599, 1
      %p603 = scmp.eq.s32.totalorder %s89, 1
      %p604 = scmp.ne.s32.totalorder %s599, %s601
      %p605 = scmp.eq.s32.totalorder %s89, 0
      %p606 = por %p604, %p605
      %p607 = scmp.ne.s32.totalorder %s599, %s601
      %p608 = scmp.eq.s32.totalorder %s94, 1
      %p609 = por %p607, %p608
      %p610 = scmp.ne.s32.totalorder %s601, %s602
      %p611 = scmp.eq.s32.totalorder %s94, 0
      %p612 = por %p610, %p611
      %p613 = scmp.ne.s32.totalorder %s601, %s602
      %p614 = scmp.eq.s32.totalorder %s95, 1
      %p615 = por %p613, %p614
      %p617 = scmp.ne.s32.totalorder %s602, %s616
      %p618 = scmp.eq.s32.totalorder %s95, 0
      %p619 = por %p617, %p618
      %s621 = sadd.s32 %s620, 1
      %p624 = scmp.eq.s32.totalorder %s89, 1
      %p625 = scmp.ne.s32.totalorder %s620, %s622
      %p626 = scmp.eq.s32.totalorder %s89, 0
      %p627 = por %p625, %p626
      %p628 = scmp.ne.s32.totalorder %s620, %s622
      %p629 = scmp.eq.s32.totalorder %s94, 1
      %p630 = por %p628, %p629
      %p631 = scmp.ne.s32.totalorder %s622, %s623
      %p632 = scmp.eq.s32.totalorder %s94, 0
      %p633 = por %p631, %p632
      %p634 = scmp.ne.s32.totalorder %s622, %s623
      %p635 = scmp.eq.s32.totalorder %s95, 1
      %p636 = por %p634, %p635
      %p638 = scmp.ne.s32.totalorder %s623, %s637
      %p639 = scmp.eq.s32.totalorder %s95, 0
      %p640 = por %p638, %p639
      %s642 = sadd.s32 %s641, 1
      %p645 = scmp.eq.s32.totalorder %s89, 1
      %p646 = scmp.ne.s32.totalorder %s641, %s643
      %p647 = scmp.eq.s32.totalorder %s89, 0
      %p648 = por %p646, %p647
      %p649 = scmp.ne.s32.totalorder %s641, %s643
      %p650 = scmp.eq.s32.totalorder %s94, 1
      %p651 = por %p649, %p650
      %p652 = scmp.ne.s32.totalorder %s643, %s644
      %p653 = scmp.eq.s32.totalorder %s94, 0
      %p654 = por %p652, %p653
      %p655 = scmp.ne.s32.totalorder %s643, %s644
      %p656 = scmp.eq.s32.totalorder %s95, 1
      %p657 = por %p655, %p656
      %p659 = scmp.ne.s32.totalorder %s644, %s658
      %p660 = scmp.eq.s32.totalorder %s95, 0
      %p661 = por %p659, %p660
      %s663 = sadd.s32 %s662, 1
      %p666 = scmp.eq.s32.totalorder %s89, 1
      %p667 = scmp.ne.s32.totalorder %s662, %s664
      %p668 = scmp.eq.s32.totalorder %s89, 0
      %p669 = por %p667, %p668
      %p670 = scmp.ne.s32.totalorder %s662, %s664
      %p671 = scmp.eq.s32.totalorder %s94, 1
      %p672 = por %p670, %p671
      %p673 = scmp.ne.s32.totalorder %s664, %s665
      %p674 = scmp.eq.s32.totalorder %s94, 0
      %p675 = por %p673, %p674
      %p676 = scmp.ne.s32.totalorder %s664, %s665
      %p677 = scmp.eq.s32.totalorder %s95, 1
      %p678 = por %p676, %p677
      %p680 = scmp.ne.s32.totalorder %s665, %s679
      %p681 = scmp.eq.s32.totalorder %s95, 0
      %p682 = por %p680, %p681
      %s684 = sadd.s32 %s683, 1
      %p687 = scmp.eq.s32.totalorder %s89, 1
      %p688 = scmp.ne.s32.totalorder %s683, %s685
      %p689 = scmp.eq.s32.totalorder %s89, 0
      %p690 = por %p688, %p689
      %p691 = scmp.ne.s32.totalorder %s683, %s685
      %p692 = scmp.eq.s32.totalorder %s94, 1
      %p693 = por %p691, %p692
      %p694 = scmp.ne.s32.totalorder %s685, %s686
      %p695 = scmp.eq.s32.totalorder %s94, 0
      %p696 = por %p694, %p695
      %p697 = scmp.ne.s32.totalorder %s685, %s686
      %p698 = scmp.eq.s32.totalorder %s95, 1
      %p699 = por %p697, %p698
      %p701 = scmp.ne.s32.totalorder %s686, %s700
      %p702 = scmp.eq.s32.totalorder %s95, 0
      %p703 = por %p701, %p702
      %s705 = sadd.s32 %s704, 1
      %p708 = scmp.eq.s32.totalorder %s89, 1
      %p709 = scmp.ne.s32.totalorder %s704, %s706
      %p710 = scmp.eq.s32.totalorder %s89, 0
      %p711 = por %p709, %p710
      %p712 = scmp.ne.s32.totalorder %s704, %s706
      %p713 = scmp.eq.s32.totalorder %s94, 1
      %p714 = por %p712, %p713
      %p715 = scmp.ne.s32.totalorder %s706, %s707
      %p716 = scmp.eq.s32.totalorder %s94, 0
      %p717 = por %p715, %p716
      %p718 = scmp.ne.s32.totalorder %s706, %s707
      %p719 = scmp.eq.s32.totalorder %s95, 1
      %p720 = por %p718, %p719
      %p722 = scmp.ne.s32.totalorder %s707, %s721
      %p723 = scmp.eq.s32.totalorder %s95, 0
      %p724 = por %p722, %p723
      %s726 = sadd.s32 %s725, 1
      %p729 = scmp.eq.s32.totalorder %s89, 1
      %p730 = scmp.ne.s32.totalorder %s725, %s727
      %p731 = scmp.eq.s32.totalorder %s89, 0
      %p732 = por %p730, %p731
      %p733 = scmp.ne.s32.totalorder %s725, %s727
      %p734 = scmp.eq.s32.totalorder %s94, 1
      %p735 = por %p733, %p734
      %p736 = scmp.ne.s32.totalorder %s727, %s728
      %p737 = scmp.eq.s32.totalorder %s94, 0
      %p738 = por %p736, %p737
      %p739 = scmp.ne.s32.totalorder %s727, %s728
      %p740 = scmp.eq.s32.totalorder %s95, 1
      %p741 = por %p739, %p740
      %p743 = scmp.ne.s32.totalorder %s728, %s742
      %p744 = scmp.eq.s32.totalorder %s95, 0
      %p745 = por %p743, %p744
      %s747 = sadd.s32 %s746, 1
      %p750 = scmp.eq.s32.totalorder %s89, 1
      %p751 = scmp.ne.s32.totalorder %s746, %s748
      %p752 = scmp.eq.s32.totalorder %s89, 0
      %p753 = por %p751, %p752
      %p754 = scmp.ne.s32.totalorder %s746, %s748
      %p755 = scmp.eq.s32.totalorder %s94, 1
      %p756 = por %p754, %p755
      %p757 = scmp.ne.s32.totalorder %s748, %s749
      %p758 = scmp.eq.s32.totalorder %s94, 0
      %p759 = por %p757, %p758
      %p760 = scmp.ne.s32.totalorder %s748, %s749
      %p761 = scmp.eq.s32.totalorder %s95, 1
      %p762 = por %p760, %p761
      %p764 = scmp.ne.s32.totalorder %s749, %s763
      %p765 = scmp.eq.s32.totalorder %s95, 0
      %p766 = por %p764, %p765
      %s768 = sadd.s32 %s767, 1
      %p771 = scmp.eq.s32.totalorder %s89, 1
      %p772 = scmp.ne.s32.totalorder %s767, %s769
      %p773 = scmp.eq.s32.totalorder %s89, 0
      %p774 = por %p772, %p773
      %p775 = scmp.ne.s32.totalorder %s767, %s769
      %p776 = scmp.eq.s32.totalorder %s94, 1
      %p777 = por %p775, %p776
      %p778 = scmp.ne.s32.totalorder %s769, %s770
      %p779 = scmp.eq.s32.totalorder %s94, 0
      %p780 = por %p778, %p779
      %p781 = scmp.ne.s32.totalorder %s769, %s770
      %p782 = scmp.eq.s32.totalorder %s95, 1
      %p783 = por %p781, %p782
      %p785 = scmp.ne.s32.totalorder %s770, %s784
      %p786 = scmp.eq.s32.totalorder %s95, 0
      %p787 = por %p785, %p786
      %s789 = sadd.s32 %s788, 1
      %p792 = scmp.eq.s32.totalorder %s89, 1
      %p793 = scmp.ne.s32.totalorder %s788, %s790
      %p794 = scmp.eq.s32.totalorder %s89, 0
      %p795 = por %p793, %p794
      %p796 = scmp.ne.s32.totalorder %s788, %s790
      %p797 = scmp.eq.s32.totalorder %s94, 1
      %p798 = por %p796, %p797
      %p799 = scmp.ne.s32.totalorder %s790, %s791
      %p800 = scmp.eq.s32.totalorder %s94, 0
      %p801 = por %p799, %p800
      %p802 = scmp.ne.s32.totalorder %s790, %s791
      %p803 = scmp.eq.s32.totalorder %s95, 1
      %p804 = por %p802, %p803
      %p806 = scmp.ne.s32.totalorder %s791, %s805
      %p807 = scmp.eq.s32.totalorder %s95, 0
      %p808 = por %p806, %p807
      %s810 = sadd.s32 %s809, 1
      %p813 = scmp.eq.s32.totalorder %s89, 1
      %p814 = scmp.ne.s32.totalorder %s809, %s811
      %p815 = scmp.eq.s32.totalorder %s89, 0
      %p816 = por %p814, %p815
      %p817 = scmp.ne.s32.totalorder %s809, %s811
      %p818 = scmp.eq.s32.totalorder %s94, 1
      %p819 = por %p817, %p818
      %p820 = scmp.ne.s32.totalorder %s811, %s812
      %p821 = scmp.eq.s32.totalorder %s94, 0
      %p822 = por %p820, %p821
      %p823 = scmp.ne.s32.totalorder %s811, %s812
      %p824 = scmp.eq.s32.totalorder %s95, 1
      %p825 = por %p823, %p824
      %p827 = scmp.ne.s32.totalorder %s812, %s826
      %p828 = scmp.eq.s32.totalorder %s95, 0
      %p829 = por %p827, %p828
      %s831 = sadd.s32 %s830, 1
      %p834 = scmp.eq.s32.totalorder %s89, 1
      %p835 = scmp.ne.s32.totalorder %s830, %s832
      %p836 = scmp.eq.s32.totalorder %s89, 0
      %p837 = por %p835, %p836
      %p838 = scmp.ne.s32.totalorder %s830, %s832
      %p839 = scmp.eq.s32.totalorder %s94, 1
      %p840 = por %p838, %p839
      %p841 = scmp.ne.s32.totalorder %s832, %s833
      %p842 = scmp.eq.s32.totalorder %s94, 0
      %p843 = por %p841, %p842
      %p844 = scmp.ne.s32.totalorder %s832, %s833
      %p845 = scmp.eq.s32.totalorder %s95, 1
      %p846 = por %p844, %p845
      %p848 = scmp.ne.s32.totalorder %s833, %s847
      %p849 = scmp.eq.s32.totalorder %s95, 0
      %p850 = por %p848, %p849
      %s851 = ssub.s32 %s89, %s96
      %p852 = scmp.eq.s32.totalorder %s851, 0
      %s854 = sadd.s32 %s853, 1
      %s855 = scalar_select %p852, %s853, %s854
      %p858 = pneg %p852
      %p859 = scmp.eq.s32.totalorder %s89, 1
      %p860 = por %p858, %p859
      %p861 = scmp.ne.s32.totalorder %s853, %s856
      %p862 = scmp.eq.s32.totalorder %s89, 0
      %p863 = por %p861, %p862
      %p864 = scmp.ne.s32.totalorder %s853, %s856
      %p865 = scmp.eq.s32.totalorder %s94, 1
      %p866 = por %p864, %p865
      %p867 = scmp.ne.s32.totalorder %s856, %s857
      %p868 = scmp.eq.s32.totalorder %s94, 0
      %p869 = por %p867, %p868
      %p870 = scmp.ne.s32.totalorder %s856, %s857
      %p871 = scmp.eq.s32.totalorder %s95, 1
      %p872 = por %p870, %p871
      %p874 = scmp.ne.s32.totalorder %s857, %s873
      %p875 = scmp.eq.s32.totalorder %s95, 0
      %p876 = por %p874, %p875
      %p877 = scmp.le.s32.totalorder 1, %s89
      %p878 = scmp.lt.s32.totalorder %s89, 3
      %p879 = pnand %p877, %p878
      %p880 = pneg %p879
      // Predicated region
      $region9: #{tpu_custom_call.1} parent=5 // pred_check
        _
      $region10: #{tpu_custom_call.1} parent=5 // pred_check_branch
        %882 = sbr.rel (%p879) target = $region12
      $region11: #{tpu_custom_call.1} parent=5 // pred_region
        %s883 = ssub.s32 %s89, 1
        // Predicated region
        $region13: #{tpu_custom_call.1} parent=11 // pred_check
          %p884 = pneg %p318
        $region14: #{tpu_custom_call.1} parent=11 // pred_check_branch
          %886 = sbr.rel (%p884) target = $region16
        $region15: #{tpu_custom_call.1} parent=11 // pred_region
          _
        $region16: #{tpu_custom_call.1} parent=11 // pred_fallthru
          _
        // Predicated region
        $region17: #{tpu_custom_call.1} parent=11 // pred_check
          %p887 = pneg %p339
        $region18: #{tpu_custom_call.1} parent=11 // pred_check_branch
          %889 = sbr.rel (%p887) target = $region20
        $region19: #{tpu_custom_call.1} parent=11 // pred_region
          %s891 = ssub.s32 16, 16
          %892 = vsyncadd [#allocation6], %s891
          %s894 = sshll.u32 [#allocation7], 4
          %s895 = int_to_ptr.vmem [resolvable:$true] %s894
          %897 = dma.hbm_to_vmem [thread:$0]  %s19, 16, %s895, [#allocation6]
        $region20: #{tpu_custom_call.1} parent=11 // pred_fallthru
          _
        // Predicated region
        $region21: #{tpu_custom_call.1} parent=11 // pred_check
          %p898 = pneg %p360
        $region22: #{tpu_custom_call.1} parent=11 // pred_check_branch
          %900 = sbr.rel (%p898) target = $region24
        $region23: #{tpu_custom_call.1} parent=11 // pred_region
          _
        $region24: #{tpu_custom_call.1} parent=11 // pred_fallthru
          _
        // Predicated region
        $region25: #{tpu_custom_call.1} parent=11 // pred_check
          %p901 = pneg %p381
        $region26: #{tpu_custom_call.1} parent=11 // pred_check_branch
          %903 = sbr.rel (%p901) target = $region28
        $region27: #{tpu_custom_call.1} parent=11 // pred_region
          %s905 = ssub.s32 16, 16
          %906 = vsyncadd [#allocation9], %s905
          %s908 = sshll.u32 [#allocation8], 4
          %s909 = int_to_ptr.vmem [resolvable:$true] %s908
          %911 = dma.hbm_to_vmem [thread:$0]  %s23, 16, %s909, [#allocation9]
        $region28: #{tpu_custom_call.1} parent=11 // pred_fallthru
          _
        // Predicated region
        $region29: #{tpu_custom_call.1} parent=11 // pred_check
          %p912 = pneg %p402
        $region30: #{tpu_custom_call.1} parent=11 // pred_check_branch
          %914 = sbr.rel (%p912) target = $region32
        $region31: #{tpu_custom_call.1} parent=11 // pred_region
          _
        $region32: #{tpu_custom_call.1} parent=11 // pred_fallthru
          _
        // Predicated region
        $region33: #{tpu_custom_call.1} parent=11 // pred_check
          %p915 = pneg %p423
        $region34: #{tpu_custom_call.1} parent=11 // pred_check_branch
          %917 = sbr.rel (%p915) target = $region36
        $region35: #{tpu_custom_call.1} parent=11 // pred_region
          %s919 = ssub.s32 16, 16
          %920 = vsyncadd [#allocation9], %s919
          %s922 = sshll.u32 [#allocation10], 4
          %s923 = int_to_ptr.vmem [resolvable:$true] %s922
          %925 = dma.hbm_to_vmem [thread:$0]  %s27, 16, %s923, [#allocation9]
        $region36: #{tpu_custom_call.1} parent=11 // pred_fallthru
          _
        // Predicated region
        $region37: #{tpu_custom_call.1} parent=11 // pred_check
          %p926 = pneg %p444
        $region38: #{tpu_custom_call.1} parent=11 // pred_check_branch
          %928 = sbr.rel (%p926) target = $region40
        $region39: #{tpu_custom_call.1} parent=11 // pred_region
          %s930 = ssub.s32 512, 512
          %931 = vsyncadd [#allocation12], %s930
          %s932 = sshll.u32 [#allocation11], 4
          %s933 = int_to_ptr.vmem [resolvable:$true] %s932
          %938 = dma.hbm_to_vmem [thread:$0]  %s29, 512, %s933, [#allocation12], 128, 128, 8
        $region40: #{tpu_custom_call.1} parent=11 // pred_fallthru
          _
        // Predicated region
        $region41: #{tpu_custom_call.1} parent=11 // pred_check
          %p939 = pneg %p465
        $region42: #{tpu_custom_call.1} parent=11 // pred_check_branch
          %941 = sbr.rel (%p939) target = $region44
        $region43: #{tpu_custom_call.1} parent=11 // pred_region
          %s943 = ssub.s32 16, 16
          %944 = vsyncadd [#allocation12], %s943
          %s946 = sshll.u32 [#allocation13], 4
          %s947 = int_to_ptr.vmem [resolvable:$true] %s946
          %949 = dma.hbm_to_vmem [thread:$0]  %s31, 16, %s947, [#allocation12]
        $region44: #{tpu_custom_call.1} parent=11 // pred_fallthru
          _
        // Predicated region
        $region45: #{tpu_custom_call.1} parent=11 // pred_check
          %p950 = pneg %p486
        $region46: #{tpu_custom_call.1} parent=11 // pred_check_branch
          %952 = sbr.rel (%p950) target = $region48
        $region47: #{tpu_custom_call.1} parent=11 // pred_region
          %s954 = ssub.s32 512, 512
          %955 = vsyncadd [#allocation15], %s954
          %s956 = sshll.u32 [#allocation14], 4
          %s957 = int_to_ptr.vmem [resolvable:$true] %s956
          %962 = dma.hbm_to_vmem [thread:$0]  %s33, 512, %s957, [#allocation15], 128, 128, 8
        $region48: #{tpu_custom_call.1} parent=11 // pred_fallthru
          _
        // Predicated region
        $region49: #{tpu_custom_call.1} parent=11 // pred_check
          %p963 = pneg %p507
        $region50: #{tpu_custom_call.1} parent=11 // pred_check_branch
          %965 = sbr.rel (%p963) target = $region52
        $region51: #{tpu_custom_call.1} parent=11 // pred_region
          %s967 = ssub.s32 16, 16
          %968 = vsyncadd [#allocation15], %s967
          %s970 = sshll.u32 [#allocation16], 4
          %s971 = int_to_ptr.vmem [resolvable:$true] %s970
          %973 = dma.hbm_to_vmem [thread:$0]  %s35, 16, %s971, [#allocation15]
        $region52: #{tpu_custom_call.1} parent=11 // pred_fallthru
          _
        // Predicated region
        $region53: #{tpu_custom_call.1} parent=11 // pred_check
          %p974 = pneg %p528
        $region54: #{tpu_custom_call.1} parent=11 // pred_check_branch
          %976 = sbr.rel (%p974) target = $region56
        $region55: #{tpu_custom_call.1} parent=11 // pred_region
          _
        $region56: #{tpu_custom_call.1} parent=11 // pred_fallthru
          _
        // Predicated region
        $region57: #{tpu_custom_call.1} parent=11 // pred_check
          %p977 = pneg %p549
        $region58: #{tpu_custom_call.1} parent=11 // pred_check_branch
          %979 = sbr.rel (%p977) target = $region60
        $region59: #{tpu_custom_call.1} parent=11 // pred_region
          %s981 = ssub.s32 16, 16
          %982 = vsyncadd [#allocation18], %s981
          %s984 = sshll.u32 [#allocation17], 4
          %s985 = int_to_ptr.vmem [resolvable:$true] %s984
          %987 = dma.hbm_to_vmem [thread:$0]  %s39, 16, %s985, [#allocation18]
        $region60: #{tpu_custom_call.1} parent=11 // pred_fallthru
          _
        // Predicated region
        $region61: #{tpu_custom_call.1} parent=11 // pred_check
          %p988 = pneg %p570
        $region62: #{tpu_custom_call.1} parent=11 // pred_check_branch
          %990 = sbr.rel (%p988) target = $region64
        $region63: #{tpu_custom_call.1} parent=11 // pred_region
          %s992 = ssub.s32 512, 512
          %993 = vsyncadd [#allocation18], %s992
          %s994 = sshll.u32 [#allocation19], 4
          %s995 = int_to_ptr.vmem [resolvable:$true] %s994
          %1000 = dma.hbm_to_vmem [thread:$0]  %s41, 512, %s995, [#allocation18], 128, 128, 8
        $region64: #{tpu_custom_call.1} parent=11 // pred_fallthru
          _
        // Predicated region
        $region65: #{tpu_custom_call.1} parent=11 // pred_check
          %p1001 = pneg %p591
        $region66: #{tpu_custom_call.1} parent=11 // pred_check_branch
          %1003 = sbr.rel (%p1001) target = $region68
        $region67: #{tpu_custom_call.1} parent=11 // pred_region
          _
        $region68: #{tpu_custom_call.1} parent=11 // pred_fallthru
          _
        // Predicated region
        $region69: #{tpu_custom_call.1} parent=11 // pred_check
          %p1004 = pneg %p612
        $region70: #{tpu_custom_call.1} parent=11 // pred_check_branch
          %1006 = sbr.rel (%p1004) target = $region72
        $region71: #{tpu_custom_call.1} parent=11 // pred_region
          %s1008 = ssub.s32 512, 512
          %1009 = vsyncadd [#allocation21], %s1008
          %s1010 = sshll.u32 [#allocation20], 4
          %s1011 = int_to_ptr.vmem [resolvable:$true] %s1010
          %1016 = dma.hbm_to_vmem [thread:$0]  %s45, 512, %s1011, [#allocation21], 128, 128, 8
        $region72: #{tpu_custom_call.1} parent=11 // pred_fallthru
          _
        // Predicated region
        $region73: #{tpu_custom_call.1} parent=11 // pred_check
          %p1017 = pneg %p633
        $region74: #{tpu_custom_call.1} parent=11 // pred_check_branch
          %1019 = sbr.rel (%p1017) target = $region76
        $region75: #{tpu_custom_call.1} parent=11 // pred_region
          _
        $region76: #{tpu_custom_call.1} parent=11 // pred_fallthru
          _
        // Predicated region
        $region77: #{tpu_custom_call.1} parent=11 // pred_check
          %p1020 = pneg %p654
        $region78: #{tpu_custom_call.1} parent=11 // pred_check_branch
          %1022 = sbr.rel (%p1020) target = $region80
        $region79: #{tpu_custom_call.1} parent=11 // pred_region
          %s1024 = ssub.s32 512, 512
          %1025 = vsyncadd [#allocation21], %s1024
          %s1026 = sshll.u32 [#allocation22], 4
          %s1027 = int_to_ptr.vmem [resolvable:$true] %s1026
          %1032 = dma.hbm_to_vmem [thread:$0]  %s49, 512, %s1027, [#allocation21], 128, 128, 8
        $region80: #{tpu_custom_call.1} parent=11 // pred_fallthru
          _
        // Predicated region
        $region81: #{tpu_custom_call.1} parent=11 // pred_check
          %p1033 = pneg %p675
        $region82: #{tpu_custom_call.1} parent=11 // pred_check_branch
          %1035 = sbr.rel (%p1033) target = $region84
        $region83: #{tpu_custom_call.1} parent=11 // pred_region
          _
        $region84: #{tpu_custom_call.1} parent=11 // pred_fallthru
          _
        // Predicated region
        $region85: #{tpu_custom_call.1} parent=11 // pred_check
          %p1036 = pneg %p696
        $region86: #{tpu_custom_call.1} parent=11 // pred_check_branch
          %1038 = sbr.rel (%p1036) target = $region88
        $region87: #{tpu_custom_call.1} parent=11 // pred_region
          _
        $region88: #{tpu_custom_call.1} parent=11 // pred_fallthru
          _
        // Predicated region
        $region89: #{tpu_custom_call.1} parent=11 // pred_check
          %p1039 = pneg %p717
        $region90: #{tpu_custom_call.1} parent=11 // pred_check_branch
          %1041 = sbr.rel (%p1039) target = $region92
        $region91: #{tpu_custom_call.1} parent=11 // pred_region
          _
        $region92: #{tpu_custom_call.1} parent=11 // pred_fallthru
          _
        // Predicated region
        $region93: #{tpu_custom_call.1} parent=11 // pred_check
          %p1042 = pneg %p738
        $region94: #{tpu_custom_call.1} parent=11 // pred_check_branch
          %1044 = sbr.rel (%p1042) target = $region96
        $region95: #{tpu_custom_call.1} parent=11 // pred_region
          _
        $region96: #{tpu_custom_call.1} parent=11 // pred_fallthru
          _
        // Predicated region
        $region97: #{tpu_custom_call.1} parent=11 // pred_check
          %p1045 = pneg %p759
        $region98: #{tpu_custom_call.1} parent=11 // pred_check_branch
          %1047 = sbr.rel (%p1045) target = $region100
        $region99: #{tpu_custom_call.1} parent=11 // pred_region
          _
        $region100: #{tpu_custom_call.1} parent=11 // pred_fallthru
          _
        // Predicated region
        $region101: #{tpu_custom_call.1} parent=11 // pred_check
          %p1048 = pneg %p780
        $region102: #{tpu_custom_call.1} parent=11 // pred_check_branch
          %1050 = sbr.rel (%p1048) target = $region104
        $region103: #{tpu_custom_call.1} parent=11 // pred_region
          _
        $region104: #{tpu_custom_call.1} parent=11 // pred_fallthru
          _
        // Predicated region
        $region105: #{tpu_custom_call.1} parent=11 // pred_check
          %p1051 = pneg %p801
        $region106: #{tpu_custom_call.1} parent=11 // pred_check_branch
          %1053 = sbr.rel (%p1051) target = $region108
        $region107: #{tpu_custom_call.1} parent=11 // pred_region
          _
        $region108: #{tpu_custom_call.1} parent=11 // pred_fallthru
          _
        // Predicated region
        $region109: #{tpu_custom_call.1} parent=11 // pred_check
          %p1054 = pneg %p822
        $region110: #{tpu_custom_call.1} parent=11 // pred_check_branch
          %1056 = sbr.rel (%p1054) target = $region112
        $region111: #{tpu_custom_call.1} parent=11 // pred_region
          _
        $region112: #{tpu_custom_call.1} parent=11 // pred_fallthru
          _
        // Predicated region
        $region113: #{tpu_custom_call.1} parent=11 // pred_check
          %p1057 = pneg %p843
        $region114: #{tpu_custom_call.1} parent=11 // pred_check_branch
          %1059 = sbr.rel (%p1057) target = $region116
        $region115: #{tpu_custom_call.1} parent=11 // pred_region
          _
        $region116: #{tpu_custom_call.1} parent=11 // pred_fallthru
          _
      $region12: #{tpu_custom_call.1} parent=5 // pred_fallthru
        _
      %p1060 = scmp.lt.s32.totalorder %s89, 2
      // Predicated region
      $region117: #{tpu_custom_call.1} parent=5 // pred_check
        %p1061 = pneg %p1060
      $region118: #{tpu_custom_call.1} parent=5 // pred_check_branch
        %1063 = sbr.rel (%p1061) target = $region120
      $region119: #{tpu_custom_call.1} parent=5 // pred_region
        // Predicated region
        $region121: #{tpu_custom_call.1} parent=119 // pred_check
          %p1064 = pneg %p109
        $region122: #{tpu_custom_call.1} parent=119 // pred_check_branch
          %1066 = sbr.rel (%p1064) target = $region124
        $region123: #{tpu_custom_call.1} parent=119 // pred_region
          %s1067 = smul.u32 2, %s89
          %p1068 = scmp.lt.s32.totalorder %s1067, 3
          %s1069 = scalar_select %p1068, %s1067, 3
          %s1070 = smul.addr %s1069, 8
          %s1071 = scalar_lea.vmem %s1, %s1070
          %s1072 = smul.u32 2, %s89
        $region124: #{tpu_custom_call.1} parent=119 // pred_fallthru
          _
        // Predicated region
        $region125: #{tpu_custom_call.1} parent=119 // pred_check
          %p1073 = pneg %p135
        $region126: #{tpu_custom_call.1} parent=119 // pred_check_branch
          %1075 = sbr.rel (%p1073) target = $region128
        $region127: #{tpu_custom_call.1} parent=119 // pred_region
          %s1076 = smul.u32 2, %s89
          %p1077 = scmp.lt.s32.totalorder %s1076, 3
          %s1078 = scalar_select %p1077, %s1076, 3
          %s1079 = smul.addr %s1078, 8
          %s1080 = scalar_lea.vmem %s3, %s1079
          %s1081 = smul.u32 2, %s89
        $region128: #{tpu_custom_call.1} parent=119 // pred_fallthru
          _
        // Predicated region
        $region129: #{tpu_custom_call.1} parent=119 // pred_check
          %p1082 = pneg %p161
        $region130: #{tpu_custom_call.1} parent=119 // pred_check_branch
          %1084 = sbr.rel (%p1082) target = $region132
        $region131: #{tpu_custom_call.1} parent=119 // pred_region
          %s1085 = smul.u32 2, %s89
          %p1086 = scmp.lt.s32.totalorder %s1085, 3
          %s1087 = scalar_select %p1086, %s1085, 3
          %s1088 = smul.addr %s1087, 8
          %s1089 = scalar_lea.vmem %s5, %s1088
          %s1090 = smul.u32 2, %s89
        $region132: #{tpu_custom_call.1} parent=119 // pred_fallthru
          _
        // Predicated region
        $region133: #{tpu_custom_call.1} parent=119 // pred_check
          %p1091 = pneg %p187
        $region134: #{tpu_custom_call.1} parent=119 // pred_check_branch
          %1093 = sbr.rel (%p1091) target = $region136
        $region135: #{tpu_custom_call.1} parent=119 // pred_region
          %s1094 = smul.u32 2, %s89
          %p1095 = scmp.lt.s32.totalorder %s1094, 3
          %s1096 = scalar_select %p1095, %s1094, 3
          %s1097 = smul.addr %s1096, 8
          %s1098 = scalar_lea.vmem %s7, %s1097
          %s1099 = smul.u32 2, %s89
        $region136: #{tpu_custom_call.1} parent=119 // pred_fallthru
          _
        // Predicated region
        $region137: #{tpu_custom_call.1} parent=119 // pred_check
          %p1100 = pneg %p213
        $region138: #{tpu_custom_call.1} parent=119 // pred_check_branch
          %1102 = sbr.rel (%p1100) target = $region140
        $region139: #{tpu_custom_call.1} parent=119 // pred_region
          %s1103 = smul.u32 4, %s89
          %p1104 = scmp.lt.s32.totalorder %s1103, 7
          %s1105 = scalar_select %p1104, %s1103, 7
          %s1106 = smul.addr %s1105, 8
          %s1107 = scalar_lea.vmem %s9, %s1106
          %s1108 = smul.u32 4, %s89
        $region140: #{tpu_custom_call.1} parent=119 // pred_fallthru
          _
        // Predicated region
        $region141: #{tpu_custom_call.1} parent=119 // pred_check
          %p1109 = pneg %p239
        $region142: #{tpu_custom_call.1} parent=119 // pred_check_branch
          %1111 = sbr.rel (%p1109) target = $region144
        $region143: #{tpu_custom_call.1} parent=119 // pred_region
          %s1112 = smul.u32 4, %s89
          %p1113 = scmp.lt.s32.totalorder %s1112, 7
          %s1114 = scalar_select %p1113, %s1112, 7
          %s1115 = smul.addr %s1114, 8
          %s1116 = scalar_lea.vmem %s11, %s1115
          %s1117 = smul.u32 4, %s89
        $region144: #{tpu_custom_call.1} parent=119 // pred_fallthru
          _
        // Predicated region
        $region145: #{tpu_custom_call.1} parent=119 // pred_check
          %p1118 = pneg %p265
        $region146: #{tpu_custom_call.1} parent=119 // pred_check_branch
          %1120 = sbr.rel (%p1118) target = $region148
        $region147: #{tpu_custom_call.1} parent=119 // pred_region
          %s1121 = sand.u32 %s255, 1
          %s1122 = scalar_lea.sflag [#allocation3], %s1121
          %s1123 = sand.u32 %s255, 1
          %s1124 = smul.addr %s1123, 2
          %s1125 = scalar_lea.vmem [#allocation2], %s1124
          %s1126 = smul.u32 2, %s89
          %s1128 = ssub.s32 32, 32
          %1129 = vsyncadd %s1122, %s1128
          %s1130 = smul.addr %s1126, 16
          %s1131 = scalar_lea.hbm %s13, %s1130
          %s1132 = sshll.u32 %s1125, 4
          %s1133 = int_to_ptr.vmem [resolvable:$true] %s1132
          %1138 = dma.hbm_to_vmem [thread:$0]  %s1131, 32, %s1133, %s1122, 16, 16, 1
        $region148: #{tpu_custom_call.1} parent=119 // pred_fallthru
          _
        // Predicated region
        $region149: #{tpu_custom_call.1} parent=119 // pred_check
          %p1139 = pneg %p291
        $region150: #{tpu_custom_call.1} parent=119 // pred_check_branch
          %1141 = sbr.rel (%p1139) target = $region152
        $region151: #{tpu_custom_call.1} parent=119 // pred_region
          %s1142 = sand.u32 %s89, 1
          %s1143 = scalar_lea.sflag [#allocation6], %s1142
          %s1144 = sand.u32 %s281, 1
          %s1145 = smul.addr %s1144, 2
          %s1146 = scalar_lea.vmem [#allocation5], %s1145
          %s1147 = smul.u32 2, %s89
          %s1149 = ssub.s32 32, 32
          %1150 = vsyncadd %s1143, %s1149
          %s1151 = smul.addr %s1147, 16
          %s1152 = scalar_lea.hbm %s15, %s1151
          %s1153 = sshll.u32 %s1146, 4
          %s1154 = int_to_ptr.vmem [resolvable:$true] %s1153
          %1159 = dma.hbm_to_vmem [thread:$0]  %s1152, 32, %s1154, %s1143, 16, 16, 1
        $region152: #{tpu_custom_call.1} parent=119 // pred_fallthru
          _
      $region120: #{tpu_custom_call.1} parent=5 // pred_fallthru
        _
      %p1160 = scmp.le.s32.totalorder 1, %s89
      %p1161 = scmp.lt.s32.totalorder %s89, 3
      %p1162 = pnand %p1160, %p1161
      %p1163 = pneg %p1162
      // Predicated region
      $region153: #{tpu_custom_call.1} parent=5 // pred_check
        _
      $region154: #{tpu_custom_call.1} parent=5 // pred_check_branch
        %1165 = sbr.rel (%p1162) target = $region156
      $region155: #{tpu_custom_call.1} parent=5 // pred_region
        %s1166 = ssub.s32 %s89, 1
        %s1167 = sand.u32 %s258, 1
        %s1168 = scalar_lea.sflag [#allocation3], %s1167
        %s1169 = sand.u32 %s258, 1
        %s1170 = smul.addr %s1169, 2
        %s1171 = scalar_lea.vmem [#allocation2], %s1170
        // Predicated region
        $region157: #{tpu_custom_call.1} parent=155 // pred_check
          %p1172 = pneg %p271
        $region158: #{tpu_custom_call.1} parent=155 // pred_check_branch
          %1174 = sbr.rel (%p1172) target = $region160
        $region159: #{tpu_custom_call.1} parent=155 // pred_region
          %1175 = dma.done %s1168, 32
        $region160: #{tpu_custom_call.1} parent=155 // pred_fallthru
          _
        %s1176 = sand.u32 %s94, 1
        %s1177 = scalar_lea.sflag [#allocation6], %s1176
        %s1178 = sand.u32 %s284, 1
        %s1179 = smul.addr %s1178, 2
        %s1180 = scalar_lea.vmem [#allocation5], %s1179
        // Predicated region
        $region161: #{tpu_custom_call.1} parent=155 // pred_check
          %p1181 = pneg %p297
        $region162: #{tpu_custom_call.1} parent=155 // pred_check_branch
          %1183 = sbr.rel (%p1181) target = $region164
        $region163: #{tpu_custom_call.1} parent=155 // pred_region
          %1184 = dma.done %s1177, 32
        $region164: #{tpu_custom_call.1} parent=155 // pred_fallthru
          _
        // Predicated region
        $region165: #{tpu_custom_call.1} parent=155 // pred_check
          %p1185 = pneg %p339
        $region166: #{tpu_custom_call.1} parent=155 // pred_check_branch
          %1187 = sbr.rel (%p1185) target = $region168
        $region167: #{tpu_custom_call.1} parent=155 // pred_region
          %1188 = dma.done [#allocation6], 16
        $region168: #{tpu_custom_call.1} parent=155 // pred_fallthru
          _
        // Predicated region
        $region169: #{tpu_custom_call.1} parent=155 // pred_check
          %p1189 = pneg %p381
        $region170: #{tpu_custom_call.1} parent=155 // pred_check_branch
          %1191 = sbr.rel (%p1189) target = $region172
        $region171: #{tpu_custom_call.1} parent=155 // pred_region
          %1192 = dma.done [#allocation9], 16
        $region172: #{tpu_custom_call.1} parent=155 // pred_fallthru
          _
        // Predicated region
        $region173: #{tpu_custom_call.1} parent=155 // pred_check
          %p1193 = pneg %p423
        $region174: #{tpu_custom_call.1} parent=155 // pred_check_branch
          %1195 = sbr.rel (%p1193) target = $region176
        $region175: #{tpu_custom_call.1} parent=155 // pred_region
          %1196 = dma.done [#allocation9], 16
        $region176: #{tpu_custom_call.1} parent=155 // pred_fallthru
          _
        // Predicated region
        $region177: #{tpu_custom_call.1} parent=155 // pred_check
          %p1197 = pneg %p444
        $region178: #{tpu_custom_call.1} parent=155 // pred_check_branch
          %1199 = sbr.rel (%p1197) target = $region180
        $region179: #{tpu_custom_call.1} parent=155 // pred_region
          %1200 = dma.done [#allocation12], 512
        $region180: #{tpu_custom_call.1} parent=155 // pred_fallthru
          _
        // Predicated region
        $region181: #{tpu_custom_call.1} parent=155 // pred_check
          %p1201 = pneg %p465
        $region182: #{tpu_custom_call.1} parent=155 // pred_check_branch
          %1203 = sbr.rel (%p1201) target = $region184
        $region183: #{tpu_custom_call.1} parent=155 // pred_region
          %1204 = dma.done [#allocation12], 16
        $region184: #{tpu_custom_call.1} parent=155 // pred_fallthru
          _
        // Predicated region
        $region185: #{tpu_custom_call.1} parent=155 // pred_check
          %p1205 = pneg %p486
        $region186: #{tpu_custom_call.1} parent=155 // pred_check_branch
          %1207 = sbr.rel (%p1205) target = $region188
        $region187: #{tpu_custom_call.1} parent=155 // pred_region
          %1208 = dma.done [#allocation15], 512
        $region188: #{tpu_custom_call.1} parent=155 // pred_fallthru
          _
        // Predicated region
        $region189: #{tpu_custom_call.1} parent=155 // pred_check
          %p1209 = pneg %p507
        $region190: #{tpu_custom_call.1} parent=155 // pred_check_branch
          %1211 = sbr.rel (%p1209) target = $region192
        $region191: #{tpu_custom_call.1} parent=155 // pred_region
          %1212 = dma.done [#allocation15], 16
        $region192: #{tpu_custom_call.1} parent=155 // pred_fallthru
          _
        // Predicated region
        $region193: #{tpu_custom_call.1} parent=155 // pred_check
          %p1213 = pneg %p549
        $region194: #{tpu_custom_call.1} parent=155 // pred_check_branch
          %1215 = sbr.rel (%p1213) target = $region196
        $region195: #{tpu_custom_call.1} parent=155 // pred_region
          %1216 = dma.done [#allocation18], 16
        $region196: #{tpu_custom_call.1} parent=155 // pred_fallthru
          _
        // Predicated region
        $region197: #{tpu_custom_call.1} parent=155 // pred_check
          %p1217 = pneg %p570
        $region198: #{tpu_custom_call.1} parent=155 // pred_check_branch
          %1219 = sbr.rel (%p1217) target = $region200
        $region199: #{tpu_custom_call.1} parent=155 // pred_region
          %1220 = dma.done [#allocation18], 512
        $region200: #{tpu_custom_call.1} parent=155 // pred_fallthru
          _
        // Predicated region
        $region201: #{tpu_custom_call.1} parent=155 // pred_check
          %p1221 = pneg %p612
        $region202: #{tpu_custom_call.1} parent=155 // pred_check_branch
          %1223 = sbr.rel (%p1221) target = $region204
        $region203: #{tpu_custom_call.1} parent=155 // pred_region
          %1224 = dma.done [#allocation21], 512
        $region204: #{tpu_custom_call.1} parent=155 // pred_fallthru
          _
        // Predicated region
        $region205: #{tpu_custom_call.1} parent=155 // pred_check
          %p1225 = pneg %p654
        $region206: #{tpu_custom_call.1} parent=155 // pred_check_branch
          %1227 = sbr.rel (%p1225) target = $region208
        $region207: #{tpu_custom_call.1} parent=155 // pred_region
          %1228 = dma.done [#allocation21], 512
        $region208: #{tpu_custom_call.1} parent=155 // pred_fallthru
          _
        %s1229 = smul.u32 2, %s94
        %p1230 = scmp.lt.s32.totalorder %s1229, 3
        %s1231 = scalar_select %p1230, %s1229, 3
        %s1232 = smul.addr %s1231, 8
        %s1233 = scalar_lea.vmem %s1, %s1232
        %p1234 = pneg %p115
        %p1235 = pneg %p112
        %s1236 = smul.u32 2, %s94
        %p1237 = scmp.lt.s32.totalorder %s1236, 3
        %s1238 = scalar_select %p1237, %s1236, 3
        %s1239 = smul.addr %s1238, 8
        %s1240 = scalar_lea.vmem %s3, %s1239
        %p1241 = pneg %p141
        %p1242 = pneg %p138
        %s1243 = smul.u32 2, %s94
        %p1244 = scmp.lt.s32.totalorder %s1243, 3
        %s1245 = scalar_select %p1244, %s1243, 3
        %s1246 = smul.addr %s1245, 8
        %s1247 = scalar_lea.vmem %s5, %s1246
        %p1248 = pneg %p167
        %p1249 = pneg %p164
        %s1250 = smul.u32 2, %s94
        %p1251 = scmp.lt.s32.totalorder %s1250, 3
        %s1252 = scalar_select %p1251, %s1250, 3
        %s1253 = smul.addr %s1252, 8
        %s1254 = scalar_lea.vmem %s7, %s1253
        %p1255 = pneg %p193
        %p1256 = pneg %p190
        %s1257 = smul.u32 4, %s94
        %p1258 = scmp.lt.s32.totalorder %s1257, 7
        %s1259 = scalar_select %p1258, %s1257, 7
        %s1260 = smul.addr %s1259, 8
        %s1261 = scalar_lea.vmem %s9, %s1260
        %p1262 = pneg %p219
        %p1263 = pneg %p216
        %s1264 = smul.u32 4, %s94
        %p1265 = scmp.lt.s32.totalorder %s1264, 7
        %s1266 = scalar_select %p1265, %s1264, 7
        %s1267 = smul.addr %s1266, 8
        %s1268 = scalar_lea.vmem %s11, %s1267
        %p1269 = pneg %p245
        %p1270 = pneg %p242
        %s1271 = sand.u32 %s258, 1
        %s1272 = scalar_lea.sflag [#allocation3], %s1271
        %s1273 = sand.u32 %s258, 1
        %s1274 = smul.addr %s1273, 2
        %s1275 = scalar_lea.vmem [#allocation2], %s1274
        %p1276 = pneg %p271
        %p1277 = pneg %p268
        %s1278 = sand.u32 %s94, 1
        %s1279 = scalar_lea.sflag [#allocation6], %s1278
        %s1280 = sand.u32 %s284, 1
        %s1281 = smul.addr %s1280, 2
        %s1282 = scalar_lea.vmem [#allocation5], %s1281
        %p1283 = pneg %p297
        %p1284 = pneg %p294
        %p1285 = pneg %p318
        %p1286 = pneg %p315
        %p1287 = pneg %p339
        %p1288 = pneg %p336
        %p1289 = pneg %p360
        %p1290 = pneg %p357
        %p1291 = pneg %p381
        %p1292 = pneg %p378
        %p1293 = pneg %p402
        %p1294 = pneg %p399
        %p1295 = pneg %p423
        %p1296 = pneg %p420
        %p1297 = pneg %p444
        %p1298 = pneg %p441
        %p1299 = pneg %p465
        %p1300 = pneg %p462
        %p1301 = pneg %p486
        %p1302 = pneg %p483
        %p1303 = pneg %p507
        %p1304 = pneg %p504
        %p1305 = pneg %p528
        %p1306 = pneg %p525
        %p1307 = pneg %p549
        %p1308 = pneg %p546
        %p1309 = pneg %p570
        %p1310 = pneg %p567
        %p1311 = pneg %p591
        %p1312 = pneg %p588
        %p1313 = pneg %p612
        %p1314 = pneg %p609
        %p1315 = pneg %p633
        %p1316 = pneg %p630
        %p1317 = pneg %p654
        %p1318 = pneg %p651
        %p1319 = pneg %p675
        %p1320 = pneg %p672
        %p1321 = pneg %p696
        %p1322 = pneg %p693
        %p1323 = pneg %p717
        %p1324 = pneg %p714
        %p1325 = pneg %p738
        %p1326 = pneg %p735
        %p1327 = pneg %p759
        %p1328 = pneg %p756
        %p1329 = pneg %p780
        %p1330 = pneg %p777
        %p1331 = pneg %p801
        %p1332 = pneg %p798
        %p1333 = pneg %p822
        %p1334 = pneg %p819
        %p1335 = pneg %p843
        %p1336 = pneg %p840
        %p1337 = pneg %p869
        %p1338 = pneg %p866
        %s1339 = sand.u32 %s856, 1
        %s1340 = scalar_lea.sflag [#allocation4], %s1339
        %s1341 = sand.u32 %s856, 1
        %s1342 = smul.addr %s1341, 16
        %s1343 = scalar_lea.vmem [#allocation23], %s1342
        %s1344 = smul.u32 2, %s94
        %p1345 = scmp.lt.s32.totalorder %s1344, 3
        %s1346 = scalar_select %p1345, %s1344, 3
        %s1347 = smul.addr %s1346, 8
        %s1348 = scalar_lea.vmem %s1, %s1347
        %s1349 = smul.u32 2, %s94
        %s1350 = smul.u32 2, %s94
        %p1351 = scmp.lt.s32.totalorder %s1350, 3
        %s1352 = scalar_select %p1351, %s1350, 3
        %s1353 = smul.addr %s1352, 8
        %s1354 = scalar_lea.vmem %s3, %s1353
        %s1355 = smul.u32 2, %s94
        %s1356 = smul.u32 2, %s94
        %p1357 = scmp.lt.s32.totalorder %s1356, 3
        %s1358 = scalar_select %p1357, %s1356, 3
        %s1359 = smul.addr %s1358, 8
        %s1360 = scalar_lea.vmem %s5, %s1359
        %s1361 = smul.u32 2, %s94
        %s1362 = smul.u32 2, %s94
        %p1363 = scmp.lt.s32.totalorder %s1362, 3
        %s1364 = scalar_select %p1363, %s1362, 3
        %s1365 = smul.addr %s1364, 8
        %s1366 = scalar_lea.vmem %s7, %s1365
        %s1367 = smul.u32 2, %s94
        %s1368 = smul.u32 4, %s94
        %p1369 = scmp.lt.s32.totalorder %s1368, 7
        %s1370 = scalar_select %p1369, %s1368, 7
        %s1371 = smul.addr %s1370, 8
        %s1372 = scalar_lea.vmem %s9, %s1371
        %s1373 = smul.u32 4, %s94
        %s1374 = smul.u32 4, %s94
        %p1375 = scmp.lt.s32.totalorder %s1374, 7
        %s1376 = scalar_select %p1375, %s1374, 7
        %s1377 = smul.addr %s1376, 8
        %s1378 = scalar_lea.vmem %s11, %s1377
        %s1379 = smul.u32 4, %s94
        %s1380 = smul.u32 2, %s94
        %s1381 = smul.u32 2, %s94
        %s1382 = smul.u32 2, %s94
        %v1383 = vld [vmem:[%s1348] sm:$0xff]
        %v1384 = vld [vmem:[%s1348 + $0x8] sm:$0xff]
        %v1385 = vld [vmem:[%s1354] sm:$0xff]
        %v1386 = vld [vmem:[%s1354 + $0x8] sm:$0xff]
        %v1387 = vadd.f32 %v1383, %v1385
        %v1388 = vadd.f32 %v1384, %v1386
        %v1389 = vld [vmem:[%s1360] sm:$0xff]
        %v1390 = vld [vmem:[%s1360 + $0x8] sm:$0xff]
        %v1391 = vld [vmem:[%s1366] sm:$0xff]
        %v1392 = vld [vmem:[%s1366 + $0x8] sm:$0xff]
        %v1393 = vadd.f32 %v1389, %v1391
        %v1394 = vadd.f32 %v1390, %v1392
        %v1395 = vld [vmem:[%s1171] sm:$0x1]
        %v1396 = vld [vmem:[%s1171 + $0x1] sm:$0x1]
        %v1397 = vld [vmem:[%s17] sm:$0xff]
        %v1398 = vld [vmem:[%s17 + $0x8] sm:$0xff]
        %v1399 = vld [vmem:[%s17 + $0x10] sm:$0xff]
        %v1400 = vld [vmem:[%s17 + $0x18] sm:$0xff]
        %v1401 = vld [vmem:[#allocation7] sm:$0x1]
        %v1402 = vld [vmem:[%s21] sm:$0xff]
        %v1403 = vld [vmem:[%s21 + $0x8] sm:$0xff]
        %v1404 = vld [vmem:[%s21 + $0x10] sm:$0xff]
        %v1405 = vld [vmem:[%s21 + $0x18] sm:$0xff]
        %v1406 = vld [vmem:[#allocation8] sm:$0x1]
        %v1407 = vld [vmem:[%s25] sm:$0xff]
        %v1408 = vld [vmem:[%s25 + $0x8] sm:$0xff]
        %v1409 = vld [vmem:[%s25 + $0x10] sm:$0xff]
        %v1410 = vld [vmem:[%s25 + $0x18] sm:$0xff]
        %v1411 = vld [vmem:[#allocation10] sm:$0x1]
        %v1412 = vld [vmem:[#allocation11] sm:$0xff]
        %v1413 = vld [vmem:[#allocation11 + $0x8] sm:$0xff]
        %v1414 = vld [vmem:[#allocation11 + $0x10] sm:$0xff]
        %v1415 = vld [vmem:[#allocation11 + $0x18] sm:$0xff]
        %v1416 = vld [vmem:[#allocation13] sm:$0x1]
        %v1418 = vlaneseq
        %v1419 = vshrl.u32 %v1418, 7
        %v1420 = vsub.s32 0, %v1419
        %v1421 = vrot.slane %v1401, %v1420
        %vm1423 = vcmask 261120
        %v1425 = vsel %vm1423, %v1387, 0
        %v1428 = vsel %vm1423, %v1388, 0
        %1430 = vmatprep.subr.mxu0 0.0
        %1431 = vmatpush1.msra.mxu0 0.0
        %1432 = vmatprep.subr.mxu0 0.0
        %1433 = vmatpush1.msra.mxu0 0.0
        %1434 = vmatprep.subr.mxu0 0.0
        %1435 = vmatpush1.msra.mxu0 0.0
        %1436 = vmatprep.subr.mxu0 0.0
        %1437 = vmatpush1.msra.mxu0 0.0
        %1438 = vmatprep.subr.mxu0 0.0
        %1439 = vmatpush1.msra.mxu0 0.0
        %1440 = vmatprep.subr.mxu0 0.0
        %1441 = vmatpush1.msra.mxu0 0.0
        %1442 = vmatprep.subr.mxu0 0.0
        %1443 = vmatpush1.msra.mxu0 0.0
        %1444 = vmatprep.subr.mxu0 0.0
        %1445 = vmatpush1.msra.mxu0 0.0
        %1446 = vmatprep.subr.mxu0 0.0
        %1447 = vmatpush1.msra.mxu0 0.0
        %1448 = vmatprep.subr.mxu0 0.0
        %1449 = vmatpush1.msra.mxu0 0.0
        %1450 = vmatprep.subr.mxu0 0.0
        %1451 = vmatpush1.msra.mxu0 0.0
        %1452 = vmatprep.subr.mxu0 0.0
        %1453 = vmatpush1.msra.mxu0 0.0
        %1454 = vmatprep.subr.mxu0 0.0
        %1455 = vmatpush1.msra.mxu0 %v1400
        %1456 = vmatprep.subr.mxu0 0.0
        %1457 = vmatpush1.msra.mxu0 %v1399
        %1458 = vmatprep.subr.mxu0 0.0
        %1459 = vmatpush1.msra.mxu0 %v1398
        %1460 = vmatprep.subr.mxu0 0.0
        %1461 = vmatpush1.msra.mxu0 %v1397
        %1462 = vmatprep.subr.mxu0 0.0
        %1463 = vmatpush2.msra.mxu0 0.0
        %1464 = vmatprep.subr.mxu0 0.0
        %1465 = vmatpush2.msra.mxu0 0.0
        %1466 = vmatprep.subr.mxu0 0.0
        %1467 = vmatpush2.msra.mxu0 0.0
        %1468 = vmatprep.subr.mxu0 0.0
        %1469 = vmatpush2.msra.mxu0 0.0
        %1470 = vmatprep.subr.mxu0 0.0
        %1471 = vmatpush2.msra.mxu0 0.0
        %1472 = vmatprep.subr.mxu0 0.0
        %1473 = vmatpush2.msra.mxu0 0.0
        %1474 = vmatprep.subr.mxu0 0.0
        %1475 = vmatpush2.msra.mxu0 0.0
        %1476 = vmatprep.subr.mxu0 0.0
        %1477 = vmatpush2.msra.mxu0 0.0
        %1478 = vmatprep.subr.mxu0 0.0
        %1479 = vmatpush2.msra.mxu0 0.0
        %1480 = vmatprep.subr.mxu0 0.0
        %1481 = vmatpush2.msra.mxu0 0.0
        %1482 = vmatprep.subr.mxu0 0.0
        %1483 = vmatpush2.msra.mxu0 0.0
        %1484 = vmatprep.subr.mxu0 0.0
        %1485 = vmatpush2.msra.mxu0 0.0
        %1486 = vmatprep.subr.mxu0 0.0
        %1487 = vmatpush2.msra.mxu0 0.0
        %1488 = vmatprep.subr.mxu0 0.0
        %1489 = vmatpush2.msra.mxu0 0.0
        %1490 = vmatprep.subr.mxu0 0.0
        %1491 = vmatpush2.msra.mxu0 0.0
        %1492 = vmatprep.subr.mxu0 0.0
        %1493 = vmatpush2.msra.mxu0 0.0
        %1494 = vmatprep.mubr.f32.mxu0 0.0
        %1495 = vmatmul.mubr.f32.gmra.mxu0 %v1425
        %v1496 = vpop.f32.mrf.mxu0
        %v1497 = vadd.f32 %v1421, %v1496
        %v1498 = vpop.f32.mrf.mxu0
        %1499 = vmatprep.mubr.f32.mxu0 0.0
        %1500 = vmatmul.mubr.f32.gmra.mxu0 %v1428
        %v1501 = vpop.f32.mrf.mxu0
        %v1502 = vadd.f32 %v1421, %v1501
        %v1503 = vpop.f32.mrf.mxu0
        %1504 = vdwg.mxu0
        %v1506 = vlaneseq
        %v1507 = vshrl.u32 %v1506, 7
        %v1508 = vsub.s32 0, %v1507
        %v1509 = vrot.slane %v1406, %v1508
        %v1512 = vsel %vm1423, %v1393, 0
        %v1515 = vsel %vm1423, %v1394, 0
        %1517 = vmatprep.subr.mxu0 0.0
        %1518 = vmatpush1.msra.mxu0 0.0
        %1519 = vmatprep.subr.mxu0 0.0
        %1520 = vmatpush1.msra.mxu0 0.0
        %1521 = vmatprep.subr.mxu0 0.0
        %1522 = vmatpush1.msra.mxu0 0.0
        %1523 = vmatprep.subr.mxu0 0.0
        %1524 = vmatpush1.msra.mxu0 0.0
        %1525 = vmatprep.subr.mxu0 0.0
        %1526 = vmatpush1.msra.mxu0 0.0
        %1527 = vmatprep.subr.mxu0 0.0
        %1528 = vmatpush1.msra.mxu0 0.0
        %1529 = vmatprep.subr.mxu0 0.0
        %1530 = vmatpush1.msra.mxu0 0.0
        %1531 = vmatprep.subr.mxu0 0.0
        %1532 = vmatpush1.msra.mxu0 0.0
        %1533 = vmatprep.subr.mxu0 0.0
        %1534 = vmatpush1.msra.mxu0 0.0
        %1535 = vmatprep.subr.mxu0 0.0
        %1536 = vmatpush1.msra.mxu0 0.0
        %1537 = vmatprep.subr.mxu0 0.0
        %1538 = vmatpush1.msra.mxu0 0.0
        %1539 = vmatprep.subr.mxu0 0.0
        %1540 = vmatpush1.msra.mxu0 0.0
        %1541 = vmatprep.subr.mxu0 0.0
        %1542 = vmatpush1.msra.mxu0 %v1405
        %1543 = vmatprep.subr.mxu0 0.0
        %1544 = vmatpush1.msra.mxu0 %v1404
        %1545 = vmatprep.subr.mxu0 0.0
        %1546 = vmatpush1.msra.mxu0 %v1403
        %1547 = vmatprep.subr.mxu0 0.0
        %1548 = vmatpush1.msra.mxu0 %v1402
        %1549 = vmatprep.subr.mxu0 0.0
        %1550 = vmatpush2.msra.mxu0 0.0
        %1551 = vmatprep.subr.mxu0 0.0
        %1552 = vmatpush2.msra.mxu0 0.0
        %1553 = vmatprep.subr.mxu0 0.0
        %1554 = vmatpush2.msra.mxu0 0.0
        %1555 = vmatprep.subr.mxu0 0.0
        %1556 = vmatpush2.msra.mxu0 0.0
        %1557 = vmatprep.subr.mxu0 0.0
        %1558 = vmatpush2.msra.mxu0 0.0
        %1559 = vmatprep.subr.mxu0 0.0
        %1560 = vmatpush2.msra.mxu0 0.0
        %1561 = vmatprep.subr.mxu0 0.0
        %1562 = vmatpush2.msra.mxu0 0.0
        %1563 = vmatprep.subr.mxu0 0.0
        %1564 = vmatpush2.msra.mxu0 0.0
        %1565 = vmatprep.subr.mxu0 0.0
        %1566 = vmatpush2.msra.mxu0 0.0
        %1567 = vmatprep.subr.mxu0 0.0
        %1568 = vmatpush2.msra.mxu0 0.0
        %1569 = vmatprep.subr.mxu0 0.0
        %1570 = vmatpush2.msra.mxu0 0.0
        %1571 = vmatprep.subr.mxu0 0.0
        %1572 = vmatpush2.msra.mxu0 0.0
        %1573 = vmatprep.subr.mxu0 0.0
        %1574 = vmatpush2.msra.mxu0 0.0
        %1575 = vmatprep.subr.mxu0 0.0
        %1576 = vmatpush2.msra.mxu0 0.0
        %1577 = vmatprep.subr.mxu0 0.0
        %1578 = vmatpush2.msra.mxu0 0.0
        %1579 = vmatprep.subr.mxu0 0.0
        %1580 = vmatpush2.msra.mxu0 0.0
        %1581 = vmatprep.mubr.f32.mxu0 0.0
        %1582 = vmatmul.mubr.f32.gmra.mxu0 %v1512
        %v1583 = vpop.f32.mrf.mxu0
        %v1584 = vadd.f32 %v1509, %v1583
        %v1585 = vpop.f32.mrf.mxu0
        %1586 = vmatprep.mubr.f32.mxu0 0.0
        %1587 = vmatmul.mubr.f32.gmra.mxu0 %v1515
        %v1588 = vpop.f32.mrf.mxu0
        %v1589 = vadd.f32 %v1509, %v1588
        %v1590 = vpop.f32.mrf.mxu0
        %1591 = vdwg.mxu0
        %v1593 = vlaneseq
        %v1594 = vshrl.u32 %v1593, 7
        %v1595 = vsub.s32 0, %v1594
        %v1596 = vrot.slane %v1411, %v1595
        %v1599 = vsel %vm1423, %v1389, 0
        %v1602 = vsel %vm1423, %v1390, 0
        %1604 = vmatprep.subr.mxu0 0.0
        %1605 = vmatpush1.msra.mxu0 0.0
        %1606 = vmatprep.subr.mxu0 0.0
        %1607 = vmatpush1.msra.mxu0 0.0
        %1608 = vmatprep.subr.mxu0 0.0
        %1609 = vmatpush1.msra.mxu0 0.0
        %1610 = vmatprep.subr.mxu0 0.0
        %1611 = vmatpush1.msra.mxu0 0.0
        %1612 = vmatprep.subr.mxu0 0.0
        %1613 = vmatpush1.msra.mxu0 0.0
        %1614 = vmatprep.subr.mxu0 0.0
        %1615 = vmatpush1.msra.mxu0 0.0
        %1616 = vmatprep.subr.mxu0 0.0
        %1617 = vmatpush1.msra.mxu0 0.0
        %1618 = vmatprep.subr.mxu0 0.0
        %1619 = vmatpush1.msra.mxu0 0.0
        %1620 = vmatprep.subr.mxu0 0.0
        %1621 = vmatpush1.msra.mxu0 0.0
        %1622 = vmatprep.subr.mxu0 0.0
        %1623 = vmatpush1.msra.mxu0 0.0
        %1624 = vmatprep.subr.mxu0 0.0
        %1625 = vmatpush1.msra.mxu0 0.0
        %1626 = vmatprep.subr.mxu0 0.0
        %1627 = vmatpush1.msra.mxu0 0.0
        %1628 = vmatprep.subr.mxu0 0.0
        %1629 = vmatpush1.msra.mxu0 %v1410
        %1630 = vmatprep.subr.mxu0 0.0
        %1631 = vmatpush1.msra.mxu0 %v1409
        %1632 = vmatprep.subr.mxu0 0.0
        %1633 = vmatpush1.msra.mxu0 %v1408
        %1634 = vmatprep.subr.mxu0 0.0
        %1635 = vmatpush1.msra.mxu0 %v1407
        %1636 = vmatprep.subr.mxu0 0.0
        %1637 = vmatpush2.msra.mxu0 0.0
        %1638 = vmatprep.subr.mxu0 0.0
        %1639 = vmatpush2.msra.mxu0 0.0
        %1640 = vmatprep.subr.mxu0 0.0
        %1641 = vmatpush2.msra.mxu0 0.0
        %1642 = vmatprep.subr.mxu0 0.0
        %1643 = vmatpush2.msra.mxu0 0.0
        %1644 = vmatprep.subr.mxu0 0.0
        %1645 = vmatpush2.msra.mxu0 0.0
        %1646 = vmatprep.subr.mxu0 0.0
        %1647 = vmatpush2.msra.mxu0 0.0
        %1648 = vmatprep.subr.mxu0 0.0
        %1649 = vmatpush2.msra.mxu0 0.0
        %1650 = vmatprep.subr.mxu0 0.0
        %1651 = vmatpush2.msra.mxu0 0.0
        %1652 = vmatprep.subr.mxu0 0.0
        %1653 = vmatpush2.msra.mxu0 0.0
        %1654 = vmatprep.subr.mxu0 0.0
        %1655 = vmatpush2.msra.mxu0 0.0
        %1656 = vmatprep.subr.mxu0 0.0
        %1657 = vmatpush2.msra.mxu0 0.0
        %1658 = vmatprep.subr.mxu0 0.0
        %1659 = vmatpush2.msra.mxu0 0.0
        %1660 = vmatprep.subr.mxu0 0.0
        %1661 = vmatpush2.msra.mxu0 0.0
        %1662 = vmatprep.subr.mxu0 0.0
        %1663 = vmatpush2.msra.mxu0 0.0
        %1664 = vmatprep.subr.mxu0 0.0
        %1665 = vmatpush2.msra.mxu0 0.0
        %1666 = vmatprep.subr.mxu0 0.0
        %1667 = vmatpush2.msra.mxu0 0.0
        %1668 = vmatprep.mubr.f32.mxu0 0.0
        %1669 = vmatmul.mubr.f32.gmra.mxu0 %v1599
        %v1670 = vpop.f32.mrf.mxu0
        %v1671 = vadd.f32 %v1596, %v1670
        %v1672 = vpop.f32.mrf.mxu0
        %1673 = vmatprep.mubr.f32.mxu0 0.0
        %1674 = vmatmul.mubr.f32.gmra.mxu0 %v1602
        %v1675 = vpop.f32.mrf.mxu0
        %v1676 = vadd.f32 %v1596, %v1675
        %v1677 = vpop.f32.mrf.mxu0
        %1678 = vdwg.mxu0
        %vm1679 = vcmask 64512
        %v1681 = vsel %vm1679, %v1497, 0
        %v1684 = vsel %vm1679, %v1584, 0
        %1686 = vmatprep.subr.mxu0 0.0
        %1687 = vmatpush1.xpose.msra.mxu0 0.0
        %1688 = vmatprep.subr.mxu0 0.0
        %1689 = vmatpush1.xpose.msra.mxu0 0.0
        %1690 = vmatprep.subr.mxu0 0.0
        %1691 = vmatpush1.xpose.msra.mxu0 0.0
        %1692 = vmatprep.subr.mxu0 0.0
        %1693 = vmatpush1.xpose.msra.mxu0 0.0
        %1694 = vmatprep.subr.mxu0 0.0
        %1695 = vmatpush1.xpose.msra.mxu0 0.0
        %1696 = vmatprep.subr.mxu0 0.0
        %1697 = vmatpush1.xpose.msra.mxu0 0.0
        %1698 = vmatprep.subr.mxu0 0.0
        %1699 = vmatpush1.xpose.msra.mxu0 0.0
        %1700 = vmatprep.subr.mxu0 0.0
        %1701 = vmatpush1.xpose.msra.mxu0 0.0
        %1702 = vmatprep.subr.mxu0 0.0
        %1703 = vmatpush1.xpose.msra.mxu0 0.0
        %1704 = vmatprep.subr.mxu0 0.0
        %1705 = vmatpush1.xpose.msra.mxu0 0.0
        %1706 = vmatprep.subr.mxu0 0.0
        %1707 = vmatpush1.xpose.msra.mxu0 0.0
        %1708 = vmatprep.subr.mxu0 0.0
        %1709 = vmatpush1.xpose.msra.mxu0 0.0
        %1710 = vmatprep.subr.mxu0 0.0
        %1711 = vmatpush1.xpose.msra.mxu0 0.0
        %1712 = vmatprep.subr.mxu0 0.0
        %1713 = vmatpush1.xpose.msra.mxu0 0.0
        %1714 = vmatprep.subr.mxu0 0.0
        %1715 = vmatpush1.xpose.msra.mxu0 0.0
        %1716 = vmatprep.subr.mxu0 0.0
        %1717 = vmatpush1.xpose.msra.mxu0 %v1684
        %1718 = vmatprep.subr.mxu0 0.0
        %1719 = vmatpush2.xpose.msra.mxu0 0.0
        %1720 = vmatprep.subr.mxu0 0.0
        %1721 = vmatpush2.xpose.msra.mxu0 0.0
        %1722 = vmatprep.subr.mxu0 0.0
        %1723 = vmatpush2.xpose.msra.mxu0 0.0
        %1724 = vmatprep.subr.mxu0 0.0
        %1725 = vmatpush2.xpose.msra.mxu0 0.0
        %1726 = vmatprep.subr.mxu0 0.0
        %1727 = vmatpush2.xpose.msra.mxu0 0.0
        %1728 = vmatprep.subr.mxu0 0.0
        %1729 = vmatpush2.xpose.msra.mxu0 0.0
        %1730 = vmatprep.subr.mxu0 0.0
        %1731 = vmatpush2.xpose.msra.mxu0 0.0
        %1732 = vmatprep.subr.mxu0 0.0
        %1733 = vmatpush2.xpose.msra.mxu0 0.0
        %1734 = vmatprep.subr.mxu0 0.0
        %1735 = vmatpush2.xpose.msra.mxu0 0.0
        %1736 = vmatprep.subr.mxu0 0.0
        %1737 = vmatpush2.xpose.msra.mxu0 0.0
        %1738 = vmatprep.subr.mxu0 0.0
        %1739 = vmatpush2.xpose.msra.mxu0 0.0
        %1740 = vmatprep.subr.mxu0 0.0
        %1741 = vmatpush2.xpose.msra.mxu0 0.0
        %1742 = vmatprep.subr.mxu0 0.0
        %1743 = vmatpush2.xpose.msra.mxu0 0.0
        %1744 = vmatprep.subr.mxu0 0.0
        %1745 = vmatpush2.xpose.msra.mxu0 0.0
        %1746 = vmatprep.subr.mxu0 0.0
        %1747 = vmatpush2.xpose.msra.mxu0 0.0
        %1748 = vmatprep.subr.mxu0 0.0
        %1749 = vmatpush2.xpose.msra.mxu0 0.0
        %1750 = vmatprep.mubr.f32.mxu0 0.0
        %1751 = vmatmul.mubr.f32.gmra.mxu0 %v1681
        %v1752 = vpop.f32.mrf.mxu0
        %v1753 = vadd.f32 0.0, %v1752
        %v1754 = vpop.f32.mrf.mxu0
        %1755 = vdwg.mxu0
        %v1757 = vsel %vm1679, %v1502, 0
        %v1760 = vsel %vm1679, %v1589, 0
        %1762 = vmatprep.subr.mxu0 0.0
        %1763 = vmatpush1.xpose.msra.mxu0 0.0
        %1764 = vmatprep.subr.mxu0 0.0
        %1765 = vmatpush1.xpose.msra.mxu0 0.0
        %1766 = vmatprep.subr.mxu0 0.0
        %1767 = vmatpush1.xpose.msra.mxu0 0.0
        %1768 = vmatprep.subr.mxu0 0.0
        %1769 = vmatpush1.xpose.msra.mxu0 0.0
        %1770 = vmatprep.subr.mxu0 0.0
        %1771 = vmatpush1.xpose.msra.mxu0 0.0
        %1772 = vmatprep.subr.mxu0 0.0
        %1773 = vmatpush1.xpose.msra.mxu0 0.0
        %1774 = vmatprep.subr.mxu0 0.0
        %1775 = vmatpush1.xpose.msra.mxu0 0.0
        %1776 = vmatprep.subr.mxu0 0.0
        %1777 = vmatpush1.xpose.msra.mxu0 0.0
        %1778 = vmatprep.subr.mxu0 0.0
        %1779 = vmatpush1.xpose.msra.mxu0 0.0
        %1780 = vmatprep.subr.mxu0 0.0
        %1781 = vmatpush1.xpose.msra.mxu0 0.0
        %1782 = vmatprep.subr.mxu0 0.0
        %1783 = vmatpush1.xpose.msra.mxu0 0.0
        %1784 = vmatprep.subr.mxu0 0.0
        %1785 = vmatpush1.xpose.msra.mxu0 0.0
        %1786 = vmatprep.subr.mxu0 0.0
        %1787 = vmatpush1.xpose.msra.mxu0 0.0
        %1788 = vmatprep.subr.mxu0 0.0
        %1789 = vmatpush1.xpose.msra.mxu0 0.0
        %1790 = vmatprep.subr.mxu0 0.0
        %1791 = vmatpush1.xpose.msra.mxu0 0.0
        %1792 = vmatprep.subr.mxu0 0.0
        %1793 = vmatpush1.xpose.msra.mxu0 %v1760
        %1794 = vmatprep.subr.mxu0 0.0
        %1795 = vmatpush2.xpose.msra.mxu0 0.0
        %1796 = vmatprep.subr.mxu0 0.0
        %1797 = vmatpush2.xpose.msra.mxu0 0.0
        %1798 = vmatprep.subr.mxu0 0.0
        %1799 = vmatpush2.xpose.msra.mxu0 0.0
        %1800 = vmatprep.subr.mxu0 0.0
        %1801 = vmatpush2.xpose.msra.mxu0 0.0
        %1802 = vmatprep.subr.mxu0 0.0
        %1803 = vmatpush2.xpose.msra.mxu0 0.0
        %1804 = vmatprep.subr.mxu0 0.0
        %1805 = vmatpush2.xpose.msra.mxu0 0.0
        %1806 = vmatprep.subr.mxu0 0.0
        %1807 = vmatpush2.xpose.msra.mxu0 0.0
        %1808 = vmatprep.subr.mxu0 0.0
        %1809 = vmatpush2.xpose.msra.mxu0 0.0
        %1810 = vmatprep.subr.mxu0 0.0
        %1811 = vmatpush2.xpose.msra.mxu0 0.0
        %1812 = vmatprep.subr.mxu0 0.0
        %1813 = vmatpush2.xpose.msra.mxu0 0.0
        %1814 = vmatprep.subr.mxu0 0.0
        %1815 = vmatpush2.xpose.msra.mxu0 0.0
        %1816 = vmatprep.subr.mxu0 0.0
        %1817 = vmatpush2.xpose.msra.mxu0 0.0
        %1818 = vmatprep.subr.mxu0 0.0
        %1819 = vmatpush2.xpose.msra.mxu0 0.0
        %1820 = vmatprep.subr.mxu0 0.0
        %1821 = vmatpush2.xpose.msra.mxu0 0.0
        %1822 = vmatprep.subr.mxu0 0.0
        %1823 = vmatpush2.xpose.msra.mxu0 0.0
        %1824 = vmatprep.subr.mxu0 0.0
        %1825 = vmatpush2.xpose.msra.mxu0 0.0
        %1826 = vmatprep.mubr.f32.mxu0 0.0
        %1827 = vmatmul.mubr.f32.gmra.mxu0 %v1757
        %v1828 = vpop.f32.mrf.mxu0
        %v1829 = vadd.f32 0.0, %v1828
        %v1830 = vpop.f32.mrf.mxu0
        %1831 = vdwg.mxu0
        %v1832 = vmul.f32 %v1753, 0.35355338
        %v1833 = vmul.f32 %v1829, 0.35355338
        %v1836 = vlaneseq
        %v1837 = vshrl.u32 %v1836, 7
        %v1838 = vsub.s32 0, %v1837
        %v1839 = vrot.slane %v1395, %v1838
        %v1840 = vlaneseq
        %v1841 = vshrl.u32 %v1840, 7
        %v1842 = vsub.s32 0, %v1841
        %v1843 = vrot.slane %v1396, %v1842
        %v1846 = vadd.f32 %v1832, %v1839
        %v1847 = vadd.f32 %v1833, %v1843
        %v1848 = vsel %vm1679, %v1846, -inf
        %1849 = vmax.xlane.f32.xlu0 %v1848
        %v1850 = vpop.xlane.xlu0 %1849
        %v1851 = vsel %vm1679, %v1847, -inf
        %1852 = vmax.xlane.f32.xlu0 %v1851
        %v1853 = vpop.xlane.xlu0 %1852
        %v1854 = vsub.f32 %v1846, %v1850
        %v1855 = vsub.f32 %v1847, %v1853
        %v1856 = vmul.f32 %v1854, 1.442695
        %v1857 = vpow.pop %v1856
        %v1858 = vmul.f32 %v1855, 1.442695
        %v1859 = vpow.pop %v1858
        %v1860 = vsel %vm1679, %v1857, 0.0
        %1861 = vadd.xlane.f32.xlu0 %v1860
        %v1862 = vpop.xlane.xlu0 %1861
        %v1863 = vsel %vm1679, %v1859, 0.0
        %1864 = vadd.xlane.f32.xlu0 %v1863
        %v1865 = vpop.xlane.xlu0 %1864
        %v1866 = vrcp.pop %v1862
        %v1867 = vrcp.pop %v1865
        %v1868 = vmul.f32 %v1857, %v1866
        %v1869 = vmul.f32 %v1859, %v1867
        %v1871 = vsel %vm1679, %v1868, 0
        %1873 = vmatprep.subr.mxu0 0.0
        %1874 = vmatpush1.msra.mxu0 0.0
        %1875 = vmatprep.subr.mxu0 0.0
        %1876 = vmatpush1.msra.mxu0 0.0
        %1877 = vmatprep.subr.mxu0 0.0
        %1878 = vmatpush1.msra.mxu0 0.0
        %1879 = vmatprep.subr.mxu0 0.0
        %1880 = vmatpush1.msra.mxu0 0.0
        %1881 = vmatprep.subr.mxu0 0.0
        %1882 = vmatpush1.msra.mxu0 0.0
        %1883 = vmatprep.subr.mxu0 0.0
        %1884 = vmatpush1.msra.mxu0 0.0
        %1885 = vmatprep.subr.mxu0 0.0
        %1886 = vmatpush1.msra.mxu0 0.0
        %1887 = vmatprep.subr.mxu0 0.0
        %1888 = vmatpush1.msra.mxu0 0.0
        %1889 = vmatprep.subr.mxu0 0.0
        %1890 = vmatpush1.msra.mxu0 0.0
        %1891 = vmatprep.subr.mxu0 0.0
        %1892 = vmatpush1.msra.mxu0 0.0
        %1893 = vmatprep.subr.mxu0 0.0
        %1894 = vmatpush1.msra.mxu0 0.0
        %1895 = vmatprep.subr.mxu0 0.0
        %1896 = vmatpush1.msra.mxu0 0.0
        %1897 = vmatprep.subr.mxu0 0.0
        %1898 = vmatpush1.msra.mxu0 0.0
        %1899 = vmatprep.subr.mxu0 0.0
        %1900 = vmatpush1.msra.mxu0 0.0
        %1901 = vmatprep.subr.mxu0 0.0
        %1902 = vmatpush1.msra.mxu0 0.0
        %1903 = vmatprep.subr.mxu0 0.0
        %1904 = vmatpush1.msra.mxu0 %v1671
        %1905 = vmatprep.subr.mxu0 0.0
        %1906 = vmatpush2.msra.mxu0 0.0
        %1907 = vmatprep.subr.mxu0 0.0
        %1908 = vmatpush2.msra.mxu0 0.0
        %1909 = vmatprep.subr.mxu0 0.0
        %1910 = vmatpush2.msra.mxu0 0.0
        %1911 = vmatprep.subr.mxu0 0.0
        %1912 = vmatpush2.msra.mxu0 0.0
        %1913 = vmatprep.subr.mxu0 0.0
        %1914 = vmatpush2.msra.mxu0 0.0
        %1915 = vmatprep.subr.mxu0 0.0
        %1916 = vmatpush2.msra.mxu0 0.0
        %1917 = vmatprep.subr.mxu0 0.0
        %1918 = vmatpush2.msra.mxu0 0.0
        %1919 = vmatprep.subr.mxu0 0.0
        %1920 = vmatpush2.msra.mxu0 0.0
        %1921 = vmatprep.subr.mxu0 0.0
        %1922 = vmatpush2.msra.mxu0 0.0
        %1923 = vmatprep.subr.mxu0 0.0
        %1924 = vmatpush2.msra.mxu0 0.0
        %1925 = vmatprep.subr.mxu0 0.0
        %1926 = vmatpush2.msra.mxu0 0.0
        %1927 = vmatprep.subr.mxu0 0.0
        %1928 = vmatpush2.msra.mxu0 0.0
        %1929 = vmatprep.subr.mxu0 0.0
        %1930 = vmatpush2.msra.mxu0 0.0
        %1931 = vmatprep.subr.mxu0 0.0
        %1932 = vmatpush2.msra.mxu0 0.0
        %1933 = vmatprep.subr.mxu0 0.0
        %1934 = vmatpush2.msra.mxu0 0.0
        %1935 = vmatprep.subr.mxu0 0.0
        %1936 = vmatpush2.msra.mxu0 0.0
        %1937 = vmatprep.mubr.f32.mxu0 0.0
        %1938 = vmatmul.mubr.f32.gmra.mxu0 %v1871
        %v1939 = vpop.f32.mrf.mxu0
        %v1940 = vadd.f32 0.0, %v1939
        %v1941 = vpop.f32.mrf.mxu0
        %1942 = vdwg.mxu0
        %v1944 = vsel %vm1679, %v1869, 0
        %1946 = vmatprep.subr.mxu0 0.0
        %1947 = vmatpush1.msra.mxu0 0.0
        %1948 = vmatprep.subr.mxu0 0.0
        %1949 = vmatpush1.msra.mxu0 0.0
        %1950 = vmatprep.subr.mxu0 0.0
        %1951 = vmatpush1.msra.mxu0 0.0
        %1952 = vmatprep.subr.mxu0 0.0
        %1953 = vmatpush1.msra.mxu0 0.0
        %1954 = vmatprep.subr.mxu0 0.0
        %1955 = vmatpush1.msra.mxu0 0.0
        %1956 = vmatprep.subr.mxu0 0.0
        %1957 = vmatpush1.msra.mxu0 0.0
        %1958 = vmatprep.subr.mxu0 0.0
        %1959 = vmatpush1.msra.mxu0 0.0
        %1960 = vmatprep.subr.mxu0 0.0
        %1961 = vmatpush1.msra.mxu0 0.0
        %1962 = vmatprep.subr.mxu0 0.0
        %1963 = vmatpush1.msra.mxu0 0.0
        %1964 = vmatprep.subr.mxu0 0.0
        %1965 = vmatpush1.msra.mxu0 0.0
        %1966 = vmatprep.subr.mxu0 0.0
        %1967 = vmatpush1.msra.mxu0 0.0
        %1968 = vmatprep.subr.mxu0 0.0
        %1969 = vmatpush1.msra.mxu0 0.0
        %1970 = vmatprep.subr.mxu0 0.0
        %1971 = vmatpush1.msra.mxu0 0.0
        %1972 = vmatprep.subr.mxu0 0.0
        %1973 = vmatpush1.msra.mxu0 0.0
        %1974 = vmatprep.subr.mxu0 0.0
        %1975 = vmatpush1.msra.mxu0 0.0
        %1976 = vmatprep.subr.mxu0 0.0
        %1977 = vmatpush1.msra.mxu0 %v1676
        %1978 = vmatprep.subr.mxu0 0.0
        %1979 = vmatpush2.msra.mxu0 0.0
        %1980 = vmatprep.subr.mxu0 0.0
        %1981 = vmatpush2.msra.mxu0 0.0
        %1982 = vmatprep.subr.mxu0 0.0
        %1983 = vmatpush2.msra.mxu0 0.0
        %1984 = vmatprep.subr.mxu0 0.0
        %1985 = vmatpush2.msra.mxu0 0.0
        %1986 = vmatprep.subr.mxu0 0.0
        %1987 = vmatpush2.msra.mxu0 0.0
        %1988 = vmatprep.subr.mxu0 0.0
        %1989 = vmatpush2.msra.mxu0 0.0
        %1990 = vmatprep.subr.mxu0 0.0
        %1991 = vmatpush2.msra.mxu0 0.0
        %1992 = vmatprep.subr.mxu0 0.0
        %1993 = vmatpush2.msra.mxu0 0.0
        %1994 = vmatprep.subr.mxu0 0.0
        %1995 = vmatpush2.msra.mxu0 0.0
        %1996 = vmatprep.subr.mxu0 0.0
        %1997 = vmatpush2.msra.mxu0 0.0
        %1998 = vmatprep.subr.mxu0 0.0
        %1999 = vmatpush2.msra.mxu0 0.0
        %2000 = vmatprep.subr.mxu0 0.0
        %2001 = vmatpush2.msra.mxu0 0.0
        %2002 = vmatprep.subr.mxu0 0.0
        %2003 = vmatpush2.msra.mxu0 0.0
        %2004 = vmatprep.subr.mxu0 0.0
        %2005 = vmatpush2.msra.mxu0 0.0
        %2006 = vmatprep.subr.mxu0 0.0
        %2007 = vmatpush2.msra.mxu0 0.0
        %2008 = vmatprep.subr.mxu0 0.0
        %2009 = vmatpush2.msra.mxu0 0.0
        %2010 = vmatprep.mubr.f32.mxu0 0.0
        %2011 = vmatmul.mubr.f32.gmra.mxu0 %v1944
        %v2012 = vpop.f32.mrf.mxu0
        %v2013 = vadd.f32 0.0, %v2012
        %v2014 = vpop.f32.mrf.mxu0
        %2015 = vdwg.mxu0
        %2016 = vrot.lane.b32.xlu0 %v1497, 120
        %v2017 = vpop.permute.xlu0 %2016
        %2018 = vrot.lane.b32.xlu0 %v1584, 120
        %v2019 = vpop.permute.xlu0 %2018
        %v2020 = vsel %vm1679, %v2017, 0
        %v2022 = vsel %vm1679, %v2019, 0
        %2024 = vmatprep.subr.mxu0 0.0
        %2025 = vmatpush1.xpose.msra.mxu0 0.0
        %2026 = vmatprep.subr.mxu0 0.0
        %2027 = vmatpush1.xpose.msra.mxu0 0.0
        %2028 = vmatprep.subr.mxu0 0.0
        %2029 = vmatpush1.xpose.msra.mxu0 0.0
        %2030 = vmatprep.subr.mxu0 0.0
        %2031 = vmatpush1.xpose.msra.mxu0 0.0
        %2032 = vmatprep.subr.mxu0 0.0
        %2033 = vmatpush1.xpose.msra.mxu0 0.0
        %2034 = vmatprep.subr.mxu0 0.0
        %2035 = vmatpush1.xpose.msra.mxu0 0.0
        %2036 = vmatprep.subr.mxu0 0.0
        %2037 = vmatpush1.xpose.msra.mxu0 0.0
        %2038 = vmatprep.subr.mxu0 0.0
        %2039 = vmatpush1.xpose.msra.mxu0 0.0
        %2040 = vmatprep.subr.mxu0 0.0
        %2041 = vmatpush1.xpose.msra.mxu0 0.0
        %2042 = vmatprep.subr.mxu0 0.0
        %2043 = vmatpush1.xpose.msra.mxu0 0.0
        %2044 = vmatprep.subr.mxu0 0.0
        %2045 = vmatpush1.xpose.msra.mxu0 0.0
        %2046 = vmatprep.subr.mxu0 0.0
        %2047 = vmatpush1.xpose.msra.mxu0 0.0
        %2048 = vmatprep.subr.mxu0 0.0
        %2049 = vmatpush1.xpose.msra.mxu0 0.0
        %2050 = vmatprep.subr.mxu0 0.0
        %2051 = vmatpush1.xpose.msra.mxu0 0.0
        %2052 = vmatprep.subr.mxu0 0.0
        %2053 = vmatpush1.xpose.msra.mxu0 0.0
        %2054 = vmatprep.subr.mxu0 0.0
        %2055 = vmatpush1.xpose.msra.mxu0 %v2022
        %2056 = vmatprep.subr.mxu0 0.0
        %2057 = vmatpush2.xpose.msra.mxu0 0.0
        %2058 = vmatprep.subr.mxu0 0.0
        %2059 = vmatpush2.xpose.msra.mxu0 0.0
        %2060 = vmatprep.subr.mxu0 0.0
        %2061 = vmatpush2.xpose.msra.mxu0 0.0
        %2062 = vmatprep.subr.mxu0 0.0
        %2063 = vmatpush2.xpose.msra.mxu0 0.0
        %2064 = vmatprep.subr.mxu0 0.0
        %2065 = vmatpush2.xpose.msra.mxu0 0.0
        %2066 = vmatprep.subr.mxu0 0.0
        %2067 = vmatpush2.xpose.msra.mxu0 0.0
        %2068 = vmatprep.subr.mxu0 0.0
        %2069 = vmatpush2.xpose.msra.mxu0 0.0
        %2070 = vmatprep.subr.mxu0 0.0
        %2071 = vmatpush2.xpose.msra.mxu0 0.0
        %2072 = vmatprep.subr.mxu0 0.0
        %2073 = vmatpush2.xpose.msra.mxu0 0.0
        %2074 = vmatprep.subr.mxu0 0.0
        %2075 = vmatpush2.xpose.msra.mxu0 0.0
        %2076 = vmatprep.subr.mxu0 0.0
        %2077 = vmatpush2.xpose.msra.mxu0 0.0
        %2078 = vmatprep.subr.mxu0 0.0
        %2079 = vmatpush2.xpose.msra.mxu0 0.0
        %2080 = vmatprep.subr.mxu0 0.0
        %2081 = vmatpush2.xpose.msra.mxu0 0.0
        %2082 = vmatprep.subr.mxu0 0.0
        %2083 = vmatpush2.xpose.msra.mxu0 0.0
        %2084 = vmatprep.subr.mxu0 0.0
        %2085 = vmatpush2.xpose.msra.mxu0 0.0
        %2086 = vmatprep.subr.mxu0 0.0
        %2087 = vmatpush2.xpose.msra.mxu0 0.0
        %2088 = vmatprep.mubr.f32.mxu0 0.0
        %2089 = vmatmul.mubr.f32.gmra.mxu0 %v2020
        %v2090 = vpop.f32.mrf.mxu0
        %v2091 = vadd.f32 0.0, %v2090
        %v2092 = vpop.f32.mrf.mxu0
        %2093 = vdwg.mxu0
        %2094 = vrot.lane.b32.xlu0 %v1502, 120
        %v2095 = vpop.permute.xlu0 %2094
        %2096 = vrot.lane.b32.xlu0 %v1589, 120
        %v2097 = vpop.permute.xlu0 %2096
        %v2098 = vsel %vm1679, %v2095, 0
        %v2100 = vsel %vm1679, %v2097, 0
        %2102 = vmatprep.subr.mxu0 0.0
        %2103 = vmatpush1.xpose.msra.mxu0 0.0
        %2104 = vmatprep.subr.mxu0 0.0
        %2105 = vmatpush1.xpose.msra.mxu0 0.0
        %2106 = vmatprep.subr.mxu0 0.0
        %2107 = vmatpush1.xpose.msra.mxu0 0.0
        %2108 = vmatprep.subr.mxu0 0.0
        %2109 = vmatpush1.xpose.msra.mxu0 0.0
        %2110 = vmatprep.subr.mxu0 0.0
        %2111 = vmatpush1.xpose.msra.mxu0 0.0
        %2112 = vmatprep.subr.mxu0 0.0
        %2113 = vmatpush1.xpose.msra.mxu0 0.0
        %2114 = vmatprep.subr.mxu0 0.0
        %2115 = vmatpush1.xpose.msra.mxu0 0.0
        %2116 = vmatprep.subr.mxu0 0.0
        %2117 = vmatpush1.xpose.msra.mxu0 0.0
        %2118 = vmatprep.subr.mxu0 0.0
        %2119 = vmatpush1.xpose.msra.mxu0 0.0
        %2120 = vmatprep.subr.mxu0 0.0
        %2121 = vmatpush1.xpose.msra.mxu0 0.0
        %2122 = vmatprep.subr.mxu0 0.0
        %2123 = vmatpush1.xpose.msra.mxu0 0.0
        %2124 = vmatprep.subr.mxu0 0.0
        %2125 = vmatpush1.xpose.msra.mxu0 0.0
        %2126 = vmatprep.subr.mxu0 0.0
        %2127 = vmatpush1.xpose.msra.mxu0 0.0
        %2128 = vmatprep.subr.mxu0 0.0
        %2129 = vmatpush1.xpose.msra.mxu0 0.0
        %2130 = vmatprep.subr.mxu0 0.0
        %2131 = vmatpush1.xpose.msra.mxu0 0.0
        %2132 = vmatprep.subr.mxu0 0.0
        %2133 = vmatpush1.xpose.msra.mxu0 %v2100
        %2134 = vmatprep.subr.mxu0 0.0
        %2135 = vmatpush2.xpose.msra.mxu0 0.0
        %2136 = vmatprep.subr.mxu0 0.0
        %2137 = vmatpush2.xpose.msra.mxu0 0.0
        %2138 = vmatprep.subr.mxu0 0.0
        %2139 = vmatpush2.xpose.msra.mxu0 0.0
        %2140 = vmatprep.subr.mxu0 0.0
        %2141 = vmatpush2.xpose.msra.mxu0 0.0
        %2142 = vmatprep.subr.mxu0 0.0
        %2143 = vmatpush2.xpose.msra.mxu0 0.0
        %2144 = vmatprep.subr.mxu0 0.0
        %2145 = vmatpush2.xpose.msra.mxu0 0.0
        %2146 = vmatprep.subr.mxu0 0.0
        %2147 = vmatpush2.xpose.msra.mxu0 0.0
        %2148 = vmatprep.subr.mxu0 0.0
        %2149 = vmatpush2.xpose.msra.mxu0 0.0
        %2150 = vmatprep.subr.mxu0 0.0
        %2151 = vmatpush2.xpose.msra.mxu0 0.0
        %2152 = vmatprep.subr.mxu0 0.0
        %2153 = vmatpush2.xpose.msra.mxu0 0.0
        %2154 = vmatprep.subr.mxu0 0.0
        %2155 = vmatpush2.xpose.msra.mxu0 0.0
        %2156 = vmatprep.subr.mxu0 0.0
        %2157 = vmatpush2.xpose.msra.mxu0 0.0
        %2158 = vmatprep.subr.mxu0 0.0
        %2159 = vmatpush2.xpose.msra.mxu0 0.0
        %2160 = vmatprep.subr.mxu0 0.0
        %2161 = vmatpush2.xpose.msra.mxu0 0.0
        %2162 = vmatprep.subr.mxu0 0.0
        %2163 = vmatpush2.xpose.msra.mxu0 0.0
        %2164 = vmatprep.subr.mxu0 0.0
        %2165 = vmatpush2.xpose.msra.mxu0 0.0
        %2166 = vmatprep.mubr.f32.mxu0 0.0
        %2167 = vmatmul.mubr.f32.gmra.mxu0 %v2098
        %v2168 = vpop.f32.mrf.mxu0
        %v2169 = vadd.f32 0.0, %v2168
        %v2170 = vpop.f32.mrf.mxu0
        %2171 = vdwg.mxu0
        %v2172 = vmul.f32 %v2091, 0.35355338
        %v2173 = vmul.f32 %v2169, 0.35355338
        %v2174 = vadd.f32 %v2172, %v1839
        %v2175 = vadd.f32 %v2173, %v1843
        %v2176 = vsel %vm1679, %v2174, -inf
        %2177 = vmax.xlane.f32.xlu0 %v2176
        %v2178 = vpop.xlane.xlu0 %2177
        %v2179 = vsel %vm1679, %v2175, -inf
        %2180 = vmax.xlane.f32.xlu0 %v2179
        %v2181 = vpop.xlane.xlu0 %2180
        %v2182 = vsub.f32 %v2174, %v2178
        %v2183 = vsub.f32 %v2175, %v2181
        %v2184 = vmul.f32 %v2182, 1.442695
        %v2185 = vpow.pop %v2184
        %v2186 = vmul.f32 %v2183, 1.442695
        %v2187 = vpow.pop %v2186
        %v2188 = vsel %vm1679, %v2185, 0.0
        %2189 = vadd.xlane.f32.xlu0 %v2188
        %v2190 = vpop.xlane.xlu0 %2189
        %v2191 = vsel %vm1679, %v2187, 0.0
        %2192 = vadd.xlane.f32.xlu0 %v2191
        %v2193 = vpop.xlane.xlu0 %2192
        %v2194 = vrcp.pop %v2190
        %v2195 = vrcp.pop %v2193
        %v2196 = vmul.f32 %v2185, %v2194
        %v2197 = vmul.f32 %v2187, %v2195
        %2199 = vrot.lane.b32.xlu0 %v1671, 120
        %v2200 = vpop.permute.xlu0 %2199
        %v2203 = vsel %vm1679, %v2196, 0
        %2205 = vmatprep.subr.mxu0 0.0
        %2206 = vmatpush1.msra.mxu0 0.0
        %2207 = vmatprep.subr.mxu0 0.0
        %2208 = vmatpush1.msra.mxu0 0.0
        %2209 = vmatprep.subr.mxu0 0.0
        %2210 = vmatpush1.msra.mxu0 0.0
        %2211 = vmatprep.subr.mxu0 0.0
        %2212 = vmatpush1.msra.mxu0 0.0
        %2213 = vmatprep.subr.mxu0 0.0
        %2214 = vmatpush1.msra.mxu0 0.0
        %2215 = vmatprep.subr.mxu0 0.0
        %2216 = vmatpush1.msra.mxu0 0.0
        %2217 = vmatprep.subr.mxu0 0.0
        %2218 = vmatpush1.msra.mxu0 0.0
        %2219 = vmatprep.subr.mxu0 0.0
        %2220 = vmatpush1.msra.mxu0 0.0
        %2221 = vmatprep.subr.mxu0 0.0
        %2222 = vmatpush1.msra.mxu0 0.0
        %2223 = vmatprep.subr.mxu0 0.0
        %2224 = vmatpush1.msra.mxu0 0.0
        %2225 = vmatprep.subr.mxu0 0.0
        %2226 = vmatpush1.msra.mxu0 0.0
        %2227 = vmatprep.subr.mxu0 0.0
        %2228 = vmatpush1.msra.mxu0 0.0
        %2229 = vmatprep.subr.mxu0 0.0
        %2230 = vmatpush1.msra.mxu0 0.0
        %2231 = vmatprep.subr.mxu0 0.0
        %2232 = vmatpush1.msra.mxu0 0.0
        %2233 = vmatprep.subr.mxu0 0.0
        %2234 = vmatpush1.msra.mxu0 0.0
        %2235 = vmatprep.subr.mxu0 0.0
        %2236 = vmatpush1.msra.mxu0 %v2200
        %2237 = vmatprep.subr.mxu0 0.0
        %2238 = vmatpush2.msra.mxu0 0.0
        %2239 = vmatprep.subr.mxu0 0.0
        %2240 = vmatpush2.msra.mxu0 0.0
        %2241 = vmatprep.subr.mxu0 0.0
        %2242 = vmatpush2.msra.mxu0 0.0
        %2243 = vmatprep.subr.mxu0 0.0
        %2244 = vmatpush2.msra.mxu0 0.0
        %2245 = vmatprep.subr.mxu0 0.0
        %2246 = vmatpush2.msra.mxu0 0.0
        %2247 = vmatprep.subr.mxu0 0.0
        %2248 = vmatpush2.msra.mxu0 0.0
        %2249 = vmatprep.subr.mxu0 0.0
        %2250 = vmatpush2.msra.mxu0 0.0
        %2251 = vmatprep.subr.mxu0 0.0
        %2252 = vmatpush2.msra.mxu0 0.0
        %2253 = vmatprep.subr.mxu0 0.0
        %2254 = vmatpush2.msra.mxu0 0.0
        %2255 = vmatprep.subr.mxu0 0.0
        %2256 = vmatpush2.msra.mxu0 0.0
        %2257 = vmatprep.subr.mxu0 0.0
        %2258 = vmatpush2.msra.mxu0 0.0
        %2259 = vmatprep.subr.mxu0 0.0
        %2260 = vmatpush2.msra.mxu0 0.0
        %2261 = vmatprep.subr.mxu0 0.0
        %2262 = vmatpush2.msra.mxu0 0.0
        %2263 = vmatprep.subr.mxu0 0.0
        %2264 = vmatpush2.msra.mxu0 0.0
        %2265 = vmatprep.subr.mxu0 0.0
        %2266 = vmatpush2.msra.mxu0 0.0
        %2267 = vmatprep.subr.mxu0 0.0
        %2268 = vmatpush2.msra.mxu0 0.0
        %2269 = vmatprep.mubr.f32.mxu0 0.0
        %2270 = vmatmul.mubr.f32.gmra.mxu0 %v2203
        %v2271 = vpop.f32.mrf.mxu0
        %v2272 = vadd.f32 0.0, %v2271
        %v2273 = vpop.f32.mrf.mxu0
        %2274 = vdwg.mxu0
        %2276 = vrot.lane.b32.xlu0 %v1676, 120
        %v2277 = vpop.permute.xlu0 %2276
        %v2280 = vsel %vm1679, %v2197, 0
        %2282 = vmatprep.subr.mxu0 0.0
        %2283 = vmatpush1.msra.mxu0 0.0
        %2284 = vmatprep.subr.mxu0 0.0
        %2285 = vmatpush1.msra.mxu0 0.0
        %2286 = vmatprep.subr.mxu0 0.0
        %2287 = vmatpush1.msra.mxu0 0.0
        %2288 = vmatprep.subr.mxu0 0.0
        %2289 = vmatpush1.msra.mxu0 0.0
        %2290 = vmatprep.subr.mxu0 0.0
        %2291 = vmatpush1.msra.mxu0 0.0
        %2292 = vmatprep.subr.mxu0 0.0
        %2293 = vmatpush1.msra.mxu0 0.0
        %2294 = vmatprep.subr.mxu0 0.0
        %2295 = vmatpush1.msra.mxu0 0.0
        %2296 = vmatprep.subr.mxu0 0.0
        %2297 = vmatpush1.msra.mxu0 0.0
        %2298 = vmatprep.subr.mxu0 0.0
        %2299 = vmatpush1.msra.mxu0 0.0
        %2300 = vmatprep.subr.mxu0 0.0
        %2301 = vmatpush1.msra.mxu0 0.0
        %2302 = vmatprep.subr.mxu0 0.0
        %2303 = vmatpush1.msra.mxu0 0.0
        %2304 = vmatprep.subr.mxu0 0.0
        %2305 = vmatpush1.msra.mxu0 0.0
        %2306 = vmatprep.subr.mxu0 0.0
        %2307 = vmatpush1.msra.mxu0 0.0
        %2308 = vmatprep.subr.mxu0 0.0
        %2309 = vmatpush1.msra.mxu0 0.0
        %2310 = vmatprep.subr.mxu0 0.0
        %2311 = vmatpush1.msra.mxu0 0.0
        %2312 = vmatprep.subr.mxu0 0.0
        %2313 = vmatpush1.msra.mxu0 %v2277
        %2314 = vmatprep.subr.mxu0 0.0
        %2315 = vmatpush2.msra.mxu0 0.0
        %2316 = vmatprep.subr.mxu0 0.0
        %2317 = vmatpush2.msra.mxu0 0.0
        %2318 = vmatprep.subr.mxu0 0.0
        %2319 = vmatpush2.msra.mxu0 0.0
        %2320 = vmatprep.subr.mxu0 0.0
        %2321 = vmatpush2.msra.mxu0 0.0
        %2322 = vmatprep.subr.mxu0 0.0
        %2323 = vmatpush2.msra.mxu0 0.0
        %2324 = vmatprep.subr.mxu0 0.0
        %2325 = vmatpush2.msra.mxu0 0.0
        %2326 = vmatprep.subr.mxu0 0.0
        %2327 = vmatpush2.msra.mxu0 0.0
        %2328 = vmatprep.subr.mxu0 0.0
        %2329 = vmatpush2.msra.mxu0 0.0
        %2330 = vmatprep.subr.mxu0 0.0
        %2331 = vmatpush2.msra.mxu0 0.0
        %2332 = vmatprep.subr.mxu0 0.0
        %2333 = vmatpush2.msra.mxu0 0.0
        %2334 = vmatprep.subr.mxu0 0.0
        %2335 = vmatpush2.msra.mxu0 0.0
        %2336 = vmatprep.subr.mxu0 0.0
        %2337 = vmatpush2.msra.mxu0 0.0
        %2338 = vmatprep.subr.mxu0 0.0
        %2339 = vmatpush2.msra.mxu0 0.0
        %2340 = vmatprep.subr.mxu0 0.0
        %2341 = vmatpush2.msra.mxu0 0.0
        %2342 = vmatprep.subr.mxu0 0.0
        %2343 = vmatpush2.msra.mxu0 0.0
        %2344 = vmatprep.subr.mxu0 0.0
        %2345 = vmatpush2.msra.mxu0 0.0
        %2346 = vmatprep.mubr.f32.mxu0 0.0
        %2347 = vmatmul.mubr.f32.gmra.mxu0 %v2280
        %v2348 = vpop.f32.mrf.mxu0
        %v2349 = vadd.f32 0.0, %v2348
        %v2350 = vpop.f32.mrf.mxu0
        %2351 = vdwg.mxu0
        %2352 = vrot.lane.b32.xlu0 %v1497, 112
        %v2353 = vpop.permute.xlu0 %2352
        %2354 = vrot.lane.b32.xlu0 %v1584, 112
        %v2355 = vpop.permute.xlu0 %2354
        %v2356 = vsel %vm1679, %v2353, 0
        %v2358 = vsel %vm1679, %v2355, 0
        %2360 = vmatprep.subr.mxu0 0.0
        %2361 = vmatpush1.xpose.msra.mxu0 0.0
        %2362 = vmatprep.subr.mxu0 0.0
        %2363 = vmatpush1.xpose.msra.mxu0 0.0
        %2364 = vmatprep.subr.mxu0 0.0
        %2365 = vmatpush1.xpose.msra.mxu0 0.0
        %2366 = vmatprep.subr.mxu0 0.0
        %2367 = vmatpush1.xpose.msra.mxu0 0.0
        %2368 = vmatprep.subr.mxu0 0.0
        %2369 = vmatpush1.xpose.msra.mxu0 0.0
        %2370 = vmatprep.subr.mxu0 0.0
        %2371 = vmatpush1.xpose.msra.mxu0 0.0
        %2372 = vmatprep.subr.mxu0 0.0
        %2373 = vmatpush1.xpose.msra.mxu0 0.0
        %2374 = vmatprep.subr.mxu0 0.0
        %2375 = vmatpush1.xpose.msra.mxu0 0.0
        %2376 = vmatprep.subr.mxu0 0.0
        %2377 = vmatpush1.xpose.msra.mxu0 0.0
        %2378 = vmatprep.subr.mxu0 0.0
        %2379 = vmatpush1.xpose.msra.mxu0 0.0
        %2380 = vmatprep.subr.mxu0 0.0
        %2381 = vmatpush1.xpose.msra.mxu0 0.0
        %2382 = vmatprep.subr.mxu0 0.0
        %2383 = vmatpush1.xpose.msra.mxu0 0.0
        %2384 = vmatprep.subr.mxu0 0.0
        %2385 = vmatpush1.xpose.msra.mxu0 0.0
        %2386 = vmatprep.subr.mxu0 0.0
        %2387 = vmatpush1.xpose.msra.mxu0 0.0
        %2388 = vmatprep.subr.mxu0 0.0
        %2389 = vmatpush1.xpose.msra.mxu0 0.0
        %2390 = vmatprep.subr.mxu0 0.0
        %2391 = vmatpush1.xpose.msra.mxu0 %v2358
        %2392 = vmatprep.subr.mxu0 0.0
        %2393 = vmatpush2.xpose.msra.mxu0 0.0
        %2394 = vmatprep.subr.mxu0 0.0
        %2395 = vmatpush2.xpose.msra.mxu0 0.0
        %2396 = vmatprep.subr.mxu0 0.0
        %2397 = vmatpush2.xpose.msra.mxu0 0.0
        %2398 = vmatprep.subr.mxu0 0.0
        %2399 = vmatpush2.xpose.msra.mxu0 0.0
        %2400 = vmatprep.subr.mxu0 0.0
        %2401 = vmatpush2.xpose.msra.mxu0 0.0
        %2402 = vmatprep.subr.mxu0 0.0
        %2403 = vmatpush2.xpose.msra.mxu0 0.0
        %2404 = vmatprep.subr.mxu0 0.0
        %2405 = vmatpush2.xpose.msra.mxu0 0.0
        %2406 = vmatprep.subr.mxu0 0.0
        %2407 = vmatpush2.xpose.msra.mxu0 0.0
        %2408 = vmatprep.subr.mxu0 0.0
        %2409 = vmatpush2.xpose.msra.mxu0 0.0
        %2410 = vmatprep.subr.mxu0 0.0
        %2411 = vmatpush2.xpose.msra.mxu0 0.0
        %2412 = vmatprep.subr.mxu0 0.0
        %2413 = vmatpush2.xpose.msra.mxu0 0.0
        %2414 = vmatprep.subr.mxu0 0.0
        %2415 = vmatpush2.xpose.msra.mxu0 0.0
        %2416 = vmatprep.subr.mxu0 0.0
        %2417 = vmatpush2.xpose.msra.mxu0 0.0
        %2418 = vmatprep.subr.mxu0 0.0
        %2419 = vmatpush2.xpose.msra.mxu0 0.0
        %2420 = vmatprep.subr.mxu0 0.0
        %2421 = vmatpush2.xpose.msra.mxu0 0.0
        %2422 = vmatprep.subr.mxu0 0.0
        %2423 = vmatpush2.xpose.msra.mxu0 0.0
        %2424 = vmatprep.mubr.f32.mxu0 0.0
        %2425 = vmatmul.mubr.f32.gmra.mxu0 %v2356
        %v2426 = vpop.f32.mrf.mxu0
        %v2427 = vadd.f32 0.0, %v2426
        %v2428 = vpop.f32.mrf.mxu0
        %2429 = vdwg.mxu0
        %2430 = vrot.lane.b32.xlu0 %v1502, 112
        %v2431 = vpop.permute.xlu0 %2430
        %2432 = vrot.lane.b32.xlu0 %v1589, 112
        %v2433 = vpop.permute.xlu0 %2432
        %v2434 = vsel %vm1679, %v2431, 0
        %v2436 = vsel %vm1679, %v2433, 0
        %2438 = vmatprep.subr.mxu0 0.0
        %2439 = vmatpush1.xpose.msra.mxu0 0.0
        %2440 = vmatprep.subr.mxu0 0.0
        %2441 = vmatpush1.xpose.msra.mxu0 0.0
        %2442 = vmatprep.subr.mxu0 0.0
        %2443 = vmatpush1.xpose.msra.mxu0 0.0
        %2444 = vmatprep.subr.mxu0 0.0
        %2445 = vmatpush1.xpose.msra.mxu0 0.0
        %2446 = vmatprep.subr.mxu0 0.0
        %2447 = vmatpush1.xpose.msra.mxu0 0.0
        %2448 = vmatprep.subr.mxu0 0.0
        %2449 = vmatpush1.xpose.msra.mxu0 0.0
        %2450 = vmatprep.subr.mxu0 0.0
        %2451 = vmatpush1.xpose.msra.mxu0 0.0
        %2452 = vmatprep.subr.mxu0 0.0
        %2453 = vmatpush1.xpose.msra.mxu0 0.0
        %2454 = vmatprep.subr.mxu0 0.0
        %2455 = vmatpush1.xpose.msra.mxu0 0.0
        %2456 = vmatprep.subr.mxu0 0.0
        %2457 = vmatpush1.xpose.msra.mxu0 0.0
        %2458 = vmatprep.subr.mxu0 0.0
        %2459 = vmatpush1.xpose.msra.mxu0 0.0
        %2460 = vmatprep.subr.mxu0 0.0
        %2461 = vmatpush1.xpose.msra.mxu0 0.0
        %2462 = vmatprep.subr.mxu0 0.0
        %2463 = vmatpush1.xpose.msra.mxu0 0.0
        %2464 = vmatprep.subr.mxu0 0.0
        %2465 = vmatpush1.xpose.msra.mxu0 0.0
        %2466 = vmatprep.subr.mxu0 0.0
        %2467 = vmatpush1.xpose.msra.mxu0 0.0
        %2468 = vmatprep.subr.mxu0 0.0
        %2469 = vmatpush1.xpose.msra.mxu0 %v2436
        %2470 = vmatprep.subr.mxu0 0.0
        %2471 = vmatpush2.xpose.msra.mxu0 0.0
        %2472 = vmatprep.subr.mxu0 0.0
        %2473 = vmatpush2.xpose.msra.mxu0 0.0
        %2474 = vmatprep.subr.mxu0 0.0
        %2475 = vmatpush2.xpose.msra.mxu0 0.0
        %2476 = vmatprep.subr.mxu0 0.0
        %2477 = vmatpush2.xpose.msra.mxu0 0.0
        %2478 = vmatprep.subr.mxu0 0.0
        %2479 = vmatpush2.xpose.msra.mxu0 0.0
        %2480 = vmatprep.subr.mxu0 0.0
        %2481 = vmatpush2.xpose.msra.mxu0 0.0
        %2482 = vmatprep.subr.mxu0 0.0
        %2483 = vmatpush2.xpose.msra.mxu0 0.0
        %2484 = vmatprep.subr.mxu0 0.0
        %2485 = vmatpush2.xpose.msra.mxu0 0.0
        %2486 = vmatprep.subr.mxu0 0.0
        %2487 = vmatpush2.xpose.msra.mxu0 0.0
        %2488 = vmatprep.subr.mxu0 0.0
        %2489 = vmatpush2.xpose.msra.mxu0 0.0
        %2490 = vmatprep.subr.mxu0 0.0
        %2491 = vmatpush2.xpose.msra.mxu0 0.0
        %2492 = vmatprep.subr.mxu0 0.0
        %2493 = vmatpush2.xpose.msra.mxu0 0.0
        %2494 = vmatprep.subr.mxu0 0.0
        %2495 = vmatpush2.xpose.msra.mxu0 0.0
        %2496 = vmatprep.subr.mxu0 0.0
        %2497 = vmatpush2.xpose.msra.mxu0 0.0
        %2498 = vmatprep.subr.mxu0 0.0
        %2499 = vmatpush2.xpose.msra.mxu0 0.0
        %2500 = vmatprep.subr.mxu0 0.0
        %2501 = vmatpush2.xpose.msra.mxu0 0.0
        %2502 = vmatprep.mubr.f32.mxu0 0.0
        %2503 = vmatmul.mubr.f32.gmra.mxu0 %v2434
        %v2504 = vpop.f32.mrf.mxu0
        %v2505 = vadd.f32 0.0, %v2504
        %v2506 = vpop.f32.mrf.mxu0
        %2507 = vdwg.mxu0
        %v2508 = vmul.f32 %v2427, 0.35355338
        %v2509 = vmul.f32 %v2505, 0.35355338
        %v2510 = vadd.f32 %v2508, %v1839
        %v2511 = vadd.f32 %v2509, %v1843
        %v2512 = vsel %vm1679, %v2510, -inf
        %2513 = vmax.xlane.f32.xlu0 %v2512
        %v2514 = vpop.xlane.xlu0 %2513
        %v2515 = vsel %vm1679, %v2511, -inf
        %2516 = vmax.xlane.f32.xlu0 %v2515
        %v2517 = vpop.xlane.xlu0 %2516
        %v2518 = vsub.f32 %v2510, %v2514
        %v2519 = vsub.f32 %v2511, %v2517
        %v2520 = vmul.f32 %v2518, 1.442695
        %v2521 = vpow.pop %v2520
        %v2522 = vmul.f32 %v2519, 1.442695
        %v2523 = vpow.pop %v2522
        %v2524 = vsel %vm1679, %v2521, 0.0
        %2525 = vadd.xlane.f32.xlu0 %v2524
        %v2526 = vpop.xlane.xlu0 %2525
        %v2527 = vsel %vm1679, %v2523, 0.0
        %2528 = vadd.xlane.f32.xlu0 %v2527
        %v2529 = vpop.xlane.xlu0 %2528
        %v2530 = vrcp.pop %v2526
        %v2531 = vrcp.pop %v2529
        %v2532 = vmul.f32 %v2521, %v2530
        %v2533 = vmul.f32 %v2523, %v2531
        %2534 = vrot.lane.b32.xlu0 %v1671, 112
        %v2535 = vpop.permute.xlu0 %2534
        %v2538 = vsel %vm1679, %v2532, 0
        %2540 = vmatprep.subr.mxu0 0.0
        %2541 = vmatpush1.msra.mxu0 0.0
        %2542 = vmatprep.subr.mxu0 0.0
        %2543 = vmatpush1.msra.mxu0 0.0
        %2544 = vmatprep.subr.mxu0 0.0
        %2545 = vmatpush1.msra.mxu0 0.0
        %2546 = vmatprep.subr.mxu0 0.0
        %2547 = vmatpush1.msra.mxu0 0.0
        %2548 = vmatprep.subr.mxu0 0.0
        %2549 = vmatpush1.msra.mxu0 0.0
        %2550 = vmatprep.subr.mxu0 0.0
        %2551 = vmatpush1.msra.mxu0 0.0
        %2552 = vmatprep.subr.mxu0 0.0
        %2553 = vmatpush1.msra.mxu0 0.0
        %2554 = vmatprep.subr.mxu0 0.0
        %2555 = vmatpush1.msra.mxu0 0.0
        %2556 = vmatprep.subr.mxu0 0.0
        %2557 = vmatpush1.msra.mxu0 0.0
        %2558 = vmatprep.subr.mxu0 0.0
        %2559 = vmatpush1.msra.mxu0 0.0
        %2560 = vmatprep.subr.mxu0 0.0
        %2561 = vmatpush1.msra.mxu0 0.0
        %2562 = vmatprep.subr.mxu0 0.0
        %2563 = vmatpush1.msra.mxu0 0.0
        %2564 = vmatprep.subr.mxu0 0.0
        %2565 = vmatpush1.msra.mxu0 0.0
        %2566 = vmatprep.subr.mxu0 0.0
        %2567 = vmatpush1.msra.mxu0 0.0
        %2568 = vmatprep.subr.mxu0 0.0
        %2569 = vmatpush1.msra.mxu0 0.0
        %2570 = vmatprep.subr.mxu0 0.0
        %2571 = vmatpush1.msra.mxu0 %v2535
        %2572 = vmatprep.subr.mxu0 0.0
        %2573 = vmatpush2.msra.mxu0 0.0
        %2574 = vmatprep.subr.mxu0 0.0
        %2575 = vmatpush2.msra.mxu0 0.0
        %2576 = vmatprep.subr.mxu0 0.0
        %2577 = vmatpush2.msra.mxu0 0.0
        %2578 = vmatprep.subr.mxu0 0.0
        %2579 = vmatpush2.msra.mxu0 0.0
        %2580 = vmatprep.subr.mxu0 0.0
        %2581 = vmatpush2.msra.mxu0 0.0
        %2582 = vmatprep.subr.mxu0 0.0
        %2583 = vmatpush2.msra.mxu0 0.0
        %2584 = vmatprep.subr.mxu0 0.0
        %2585 = vmatpush2.msra.mxu0 0.0
        %2586 = vmatprep.subr.mxu0 0.0
        %2587 = vmatpush2.msra.mxu0 0.0
        %2588 = vmatprep.subr.mxu0 0.0
        %2589 = vmatpush2.msra.mxu0 0.0
        %2590 = vmatprep.subr.mxu0 0.0
        %2591 = vmatpush2.msra.mxu0 0.0
        %2592 = vmatprep.subr.mxu0 0.0
        %2593 = vmatpush2.msra.mxu0 0.0
        %2594 = vmatprep.subr.mxu0 0.0
        %2595 = vmatpush2.msra.mxu0 0.0
        %2596 = vmatprep.subr.mxu0 0.0
        %2597 = vmatpush2.msra.mxu0 0.0
        %2598 = vmatprep.subr.mxu0 0.0
        %2599 = vmatpush2.msra.mxu0 0.0
        %2600 = vmatprep.subr.mxu0 0.0
        %2601 = vmatpush2.msra.mxu0 0.0
        %2602 = vmatprep.subr.mxu0 0.0
        %2603 = vmatpush2.msra.mxu0 0.0
        %2604 = vmatprep.mubr.f32.mxu0 0.0
        %2605 = vmatmul.mubr.f32.gmra.mxu0 %v2538
        %v2606 = vpop.f32.mrf.mxu0
        %v2607 = vadd.f32 0.0, %v2606
        %v2608 = vpop.f32.mrf.mxu0
        %2609 = vdwg.mxu0
        %2610 = vrot.lane.b32.xlu0 %v1676, 112
        %v2611 = vpop.permute.xlu0 %2610
        %v2614 = vsel %vm1679, %v2533, 0
        %2616 = vmatprep.subr.mxu0 0.0
        %2617 = vmatpush1.msra.mxu0 0.0
        %2618 = vmatprep.subr.mxu0 0.0
        %2619 = vmatpush1.msra.mxu0 0.0
        %2620 = vmatprep.subr.mxu0 0.0
        %2621 = vmatpush1.msra.mxu0 0.0
        %2622 = vmatprep.subr.mxu0 0.0
        %2623 = vmatpush1.msra.mxu0 0.0
        %2624 = vmatprep.subr.mxu0 0.0
        %2625 = vmatpush1.msra.mxu0 0.0
        %2626 = vmatprep.subr.mxu0 0.0
        %2627 = vmatpush1.msra.mxu0 0.0
        %2628 = vmatprep.subr.mxu0 0.0
        %2629 = vmatpush1.msra.mxu0 0.0
        %2630 = vmatprep.subr.mxu0 0.0
        %2631 = vmatpush1.msra.mxu0 0.0
        %2632 = vmatprep.subr.mxu0 0.0
        %2633 = vmatpush1.msra.mxu0 0.0
        %2634 = vmatprep.subr.mxu0 0.0
        %2635 = vmatpush1.msra.mxu0 0.0
        %2636 = vmatprep.subr.mxu0 0.0
        %2637 = vmatpush1.msra.mxu0 0.0
        %2638 = vmatprep.subr.mxu0 0.0
        %2639 = vmatpush1.msra.mxu0 0.0
        %2640 = vmatprep.subr.mxu0 0.0
        %2641 = vmatpush1.msra.mxu0 0.0
        %2642 = vmatprep.subr.mxu0 0.0
        %2643 = vmatpush1.msra.mxu0 0.0
        %2644 = vmatprep.subr.mxu0 0.0
        %2645 = vmatpush1.msra.mxu0 0.0
        %2646 = vmatprep.subr.mxu0 0.0
        %2647 = vmatpush1.msra.mxu0 %v2611
        %2648 = vmatprep.subr.mxu0 0.0
        %2649 = vmatpush2.msra.mxu0 0.0
        %2650 = vmatprep.subr.mxu0 0.0
        %2651 = vmatpush2.msra.mxu0 0.0
        %2652 = vmatprep.subr.mxu0 0.0
        %2653 = vmatpush2.msra.mxu0 0.0
        %2654 = vmatprep.subr.mxu0 0.0
        %2655 = vmatpush2.msra.mxu0 0.0
        %2656 = vmatprep.subr.mxu0 0.0
        %2657 = vmatpush2.msra.mxu0 0.0
        %2658 = vmatprep.subr.mxu0 0.0
        %2659 = vmatpush2.msra.mxu0 0.0
        %2660 = vmatprep.subr.mxu0 0.0
        %2661 = vmatpush2.msra.mxu0 0.0
        %2662 = vmatprep.subr.mxu0 0.0
        %2663 = vmatpush2.msra.mxu0 0.0
        %2664 = vmatprep.subr.mxu0 0.0
        %2665 = vmatpush2.msra.mxu0 0.0
        %2666 = vmatprep.subr.mxu0 0.0
        %2667 = vmatpush2.msra.mxu0 0.0
        %2668 = vmatprep.subr.mxu0 0.0
        %2669 = vmatpush2.msra.mxu0 0.0
        %2670 = vmatprep.subr.mxu0 0.0
        %2671 = vmatpush2.msra.mxu0 0.0
        %2672 = vmatprep.subr.mxu0 0.0
        %2673 = vmatpush2.msra.mxu0 0.0
        %2674 = vmatprep.subr.mxu0 0.0
        %2675 = vmatpush2.msra.mxu0 0.0
        %2676 = vmatprep.subr.mxu0 0.0
        %2677 = vmatpush2.msra.mxu0 0.0
        %2678 = vmatprep.subr.mxu0 0.0
        %2679 = vmatpush2.msra.mxu0 0.0
        %2680 = vmatprep.mubr.f32.mxu0 0.0
        %2681 = vmatmul.mubr.f32.gmra.mxu0 %v2614
        %v2682 = vpop.f32.mrf.mxu0
        %v2683 = vadd.f32 0.0, %v2682
        %v2684 = vpop.f32.mrf.mxu0
        %2685 = vdwg.mxu0
        %2686 = vrot.lane.b32.xlu0 %v1497, 104
        %v2687 = vpop.permute.xlu0 %2686
        %2688 = vrot.lane.b32.xlu0 %v1584, 104
        %v2689 = vpop.permute.xlu0 %2688
        %v2690 = vsel %vm1679, %v2687, 0
        %v2692 = vsel %vm1679, %v2689, 0
        %2694 = vmatprep.subr.mxu0 0.0
        %2695 = vmatpush1.xpose.msra.mxu0 0.0
        %2696 = vmatprep.subr.mxu0 0.0
        %2697 = vmatpush1.xpose.msra.mxu0 0.0
        %2698 = vmatprep.subr.mxu0 0.0
        %2699 = vmatpush1.xpose.msra.mxu0 0.0
        %2700 = vmatprep.subr.mxu0 0.0
        %2701 = vmatpush1.xpose.msra.mxu0 0.0
        %2702 = vmatprep.subr.mxu0 0.0
        %2703 = vmatpush1.xpose.msra.mxu0 0.0
        %2704 = vmatprep.subr.mxu0 0.0
        %2705 = vmatpush1.xpose.msra.mxu0 0.0
        %2706 = vmatprep.subr.mxu0 0.0
        %2707 = vmatpush1.xpose.msra.mxu0 0.0
        %2708 = vmatprep.subr.mxu0 0.0
        %2709 = vmatpush1.xpose.msra.mxu0 0.0
        %2710 = vmatprep.subr.mxu0 0.0
        %2711 = vmatpush1.xpose.msra.mxu0 0.0
        %2712 = vmatprep.subr.mxu0 0.0
        %2713 = vmatpush1.xpose.msra.mxu0 0.0
        %2714 = vmatprep.subr.mxu0 0.0
        %2715 = vmatpush1.xpose.msra.mxu0 0.0
        %2716 = vmatprep.subr.mxu0 0.0
        %2717 = vmatpush1.xpose.msra.mxu0 0.0
        %2718 = vmatprep.subr.mxu0 0.0
        %2719 = vmatpush1.xpose.msra.mxu0 0.0
        %2720 = vmatprep.subr.mxu0 0.0
        %2721 = vmatpush1.xpose.msra.mxu0 0.0
        %2722 = vmatprep.subr.mxu0 0.0
        %2723 = vmatpush1.xpose.msra.mxu0 0.0
        %2724 = vmatprep.subr.mxu0 0.0
        %2725 = vmatpush1.xpose.msra.mxu0 %v2692
        %2726 = vmatprep.subr.mxu0 0.0
        %2727 = vmatpush2.xpose.msra.mxu0 0.0
        %2728 = vmatprep.subr.mxu0 0.0
        %2729 = vmatpush2.xpose.msra.mxu0 0.0
        %2730 = vmatprep.subr.mxu0 0.0
        %2731 = vmatpush2.xpose.msra.mxu0 0.0
        %2732 = vmatprep.subr.mxu0 0.0
        %2733 = vmatpush2.xpose.msra.mxu0 0.0
        %2734 = vmatprep.subr.mxu0 0.0
        %2735 = vmatpush2.xpose.msra.mxu0 0.0
        %2736 = vmatprep.subr.mxu0 0.0
        %2737 = vmatpush2.xpose.msra.mxu0 0.0
        %2738 = vmatprep.subr.mxu0 0.0
        %2739 = vmatpush2.xpose.msra.mxu0 0.0
        %2740 = vmatprep.subr.mxu0 0.0
        %2741 = vmatpush2.xpose.msra.mxu0 0.0
        %2742 = vmatprep.subr.mxu0 0.0
        %2743 = vmatpush2.xpose.msra.mxu0 0.0
        %2744 = vmatprep.subr.mxu0 0.0
        %2745 = vmatpush2.xpose.msra.mxu0 0.0
        %2746 = vmatprep.subr.mxu0 0.0
        %2747 = vmatpush2.xpose.msra.mxu0 0.0
        %2748 = vmatprep.subr.mxu0 0.0
        %2749 = vmatpush2.xpose.msra.mxu0 0.0
        %2750 = vmatprep.subr.mxu0 0.0
        %2751 = vmatpush2.xpose.msra.mxu0 0.0
        %2752 = vmatprep.subr.mxu0 0.0
        %2753 = vmatpush2.xpose.msra.mxu0 0.0
        %2754 = vmatprep.subr.mxu0 0.0
        %2755 = vmatpush2.xpose.msra.mxu0 0.0
        %2756 = vmatprep.subr.mxu0 0.0
        %2757 = vmatpush2.xpose.msra.mxu0 0.0
        %2758 = vmatprep.mubr.f32.mxu0 0.0
        %2759 = vmatmul.mubr.f32.gmra.mxu0 %v2690
        %v2760 = vpop.f32.mrf.mxu0
        %v2761 = vadd.f32 0.0, %v2760
        %v2762 = vpop.f32.mrf.mxu0
        %2763 = vdwg.mxu0
        %2764 = vrot.lane.b32.xlu0 %v1502, 104
        %v2765 = vpop.permute.xlu0 %2764
        %2766 = vrot.lane.b32.xlu0 %v1589, 104
        %v2767 = vpop.permute.xlu0 %2766
        %v2768 = vsel %vm1679, %v2765, 0
        %v2770 = vsel %vm1679, %v2767, 0
        %2772 = vmatprep.subr.mxu0 0.0
        %2773 = vmatpush1.xpose.msra.mxu0 0.0
        %2774 = vmatprep.subr.mxu0 0.0
        %2775 = vmatpush1.xpose.msra.mxu0 0.0
        %2776 = vmatprep.subr.mxu0 0.0
        %2777 = vmatpush1.xpose.msra.mxu0 0.0
        %2778 = vmatprep.subr.mxu0 0.0
        %2779 = vmatpush1.xpose.msra.mxu0 0.0
        %2780 = vmatprep.subr.mxu0 0.0
        %2781 = vmatpush1.xpose.msra.mxu0 0.0
        %2782 = vmatprep.subr.mxu0 0.0
        %2783 = vmatpush1.xpose.msra.mxu0 0.0
        %2784 = vmatprep.subr.mxu0 0.0
        %2785 = vmatpush1.xpose.msra.mxu0 0.0
        %2786 = vmatprep.subr.mxu0 0.0
        %2787 = vmatpush1.xpose.msra.mxu0 0.0
        %2788 = vmatprep.subr.mxu0 0.0
        %2789 = vmatpush1.xpose.msra.mxu0 0.0
        %2790 = vmatprep.subr.mxu0 0.0
        %2791 = vmatpush1.xpose.msra.mxu0 0.0
        %2792 = vmatprep.subr.mxu0 0.0
        %2793 = vmatpush1.xpose.msra.mxu0 0.0
        %2794 = vmatprep.subr.mxu0 0.0
        %2795 = vmatpush1.xpose.msra.mxu0 0.0
        %2796 = vmatprep.subr.mxu0 0.0
        %2797 = vmatpush1.xpose.msra.mxu0 0.0
        %2798 = vmatprep.subr.mxu0 0.0
        %2799 = vmatpush1.xpose.msra.mxu0 0.0
        %2800 = vmatprep.subr.mxu0 0.0
        %2801 = vmatpush1.xpose.msra.mxu0 0.0
        %2802 = vmatprep.subr.mxu0 0.0
        %2803 = vmatpush1.xpose.msra.mxu0 %v2770
        %2804 = vmatprep.subr.mxu0 0.0
        %2805 = vmatpush2.xpose.msra.mxu0 0.0
        %2806 = vmatprep.subr.mxu0 0.0
        %2807 = vmatpush2.xpose.msra.mxu0 0.0
        %2808 = vmatprep.subr.mxu0 0.0
        %2809 = vmatpush2.xpose.msra.mxu0 0.0
        %2810 = vmatprep.subr.mxu0 0.0
        %2811 = vmatpush2.xpose.msra.mxu0 0.0
        %2812 = vmatprep.subr.mxu0 0.0
        %2813 = vmatpush2.xpose.msra.mxu0 0.0
        %2814 = vmatprep.subr.mxu0 0.0
        %2815 = vmatpush2.xpose.msra.mxu0 0.0
        %2816 = vmatprep.subr.mxu0 0.0
        %2817 = vmatpush2.xpose.msra.mxu0 0.0
        %2818 = vmatprep.subr.mxu0 0.0
        %2819 = vmatpush2.xpose.msra.mxu0 0.0
        %2820 = vmatprep.subr.mxu0 0.0
        %2821 = vmatpush2.xpose.msra.mxu0 0.0
        %2822 = vmatprep.subr.mxu0 0.0
        %2823 = vmatpush2.xpose.msra.mxu0 0.0
        %2824 = vmatprep.subr.mxu0 0.0
        %2825 = vmatpush2.xpose.msra.mxu0 0.0
        %2826 = vmatprep.subr.mxu0 0.0
        %2827 = vmatpush2.xpose.msra.mxu0 0.0
        %2828 = vmatprep.subr.mxu0 0.0
        %2829 = vmatpush2.xpose.msra.mxu0 0.0
        %2830 = vmatprep.subr.mxu0 0.0
        %2831 = vmatpush2.xpose.msra.mxu0 0.0
        %2832 = vmatprep.subr.mxu0 0.0
        %2833 = vmatpush2.xpose.msra.mxu0 0.0
        %2834 = vmatprep.subr.mxu0 0.0
        %2835 = vmatpush2.xpose.msra.mxu0 0.0
        %2836 = vmatprep.mubr.f32.mxu0 0.0
        %2837 = vmatmul.mubr.f32.gmra.mxu0 %v2768
        %v2838 = vpop.f32.mrf.mxu0
        %v2839 = vadd.f32 0.0, %v2838
        %v2840 = vpop.f32.mrf.mxu0
        %2841 = vdwg.mxu0
        %v2842 = vmul.f32 %v2761, 0.35355338
        %v2843 = vmul.f32 %v2839, 0.35355338
        %v2844 = vadd.f32 %v2842, %v1839
        %v2845 = vadd.f32 %v2843, %v1843
        %v2846 = vsel %vm1679, %v2844, -inf
        %2847 = vmax.xlane.f32.xlu0 %v2846
        %v2848 = vpop.xlane.xlu0 %2847
        %v2849 = vsel %vm1679, %v2845, -inf
        %2850 = vmax.xlane.f32.xlu0 %v2849
        %v2851 = vpop.xlane.xlu0 %2850
        %v2852 = vsub.f32 %v2844, %v2848
        %v2853 = vsub.f32 %v2845, %v2851
        %v2854 = vmul.f32 %v2852, 1.442695
        %v2855 = vpow.pop %v2854
        %v2856 = vmul.f32 %v2853, 1.442695
        %v2857 = vpow.pop %v2856
        %v2858 = vsel %vm1679, %v2855, 0.0
        %2859 = vadd.xlane.f32.xlu0 %v2858
        %v2860 = vpop.xlane.xlu0 %2859
        %v2861 = vsel %vm1679, %v2857, 0.0
        %2862 = vadd.xlane.f32.xlu0 %v2861
        %v2863 = vpop.xlane.xlu0 %2862
        %v2864 = vrcp.pop %v2860
        %v2865 = vrcp.pop %v2863
        %v2866 = vmul.f32 %v2855, %v2864
        %v2867 = vmul.f32 %v2857, %v2865
        %2868 = vrot.lane.b32.xlu0 %v1671, 104
        %v2869 = vpop.permute.xlu0 %2868
        %v2872 = vsel %vm1679, %v2866, 0
        %2874 = vmatprep.subr.mxu0 0.0
        %2875 = vmatpush1.msra.mxu0 0.0
        %2876 = vmatprep.subr.mxu0 0.0
        %2877 = vmatpush1.msra.mxu0 0.0
        %2878 = vmatprep.subr.mxu0 0.0
        %2879 = vmatpush1.msra.mxu0 0.0
        %2880 = vmatprep.subr.mxu0 0.0
        %2881 = vmatpush1.msra.mxu0 0.0
        %2882 = vmatprep.subr.mxu0 0.0
        %2883 = vmatpush1.msra.mxu0 0.0
        %2884 = vmatprep.subr.mxu0 0.0
        %2885 = vmatpush1.msra.mxu0 0.0
        %2886 = vmatprep.subr.mxu0 0.0
        %2887 = vmatpush1.msra.mxu0 0.0
        %2888 = vmatprep.subr.mxu0 0.0
        %2889 = vmatpush1.msra.mxu0 0.0
        %2890 = vmatprep.subr.mxu0 0.0
        %2891 = vmatpush1.msra.mxu0 0.0
        %2892 = vmatprep.subr.mxu0 0.0
        %2893 = vmatpush1.msra.mxu0 0.0
        %2894 = vmatprep.subr.mxu0 0.0
        %2895 = vmatpush1.msra.mxu0 0.0
        %2896 = vmatprep.subr.mxu0 0.0
        %2897 = vmatpush1.msra.mxu0 0.0
        %2898 = vmatprep.subr.mxu0 0.0
        %2899 = vmatpush1.msra.mxu0 0.0
        %2900 = vmatprep.subr.mxu0 0.0
        %2901 = vmatpush1.msra.mxu0 0.0
        %2902 = vmatprep.subr.mxu0 0.0
        %2903 = vmatpush1.msra.mxu0 0.0
        %2904 = vmatprep.subr.mxu0 0.0
        %2905 = vmatpush1.msra.mxu0 %v2869
        %2906 = vmatprep.subr.mxu0 0.0
        %2907 = vmatpush2.msra.mxu0 0.0
        %2908 = vmatprep.subr.mxu0 0.0
        %2909 = vmatpush2.msra.mxu0 0.0
        %2910 = vmatprep.subr.mxu0 0.0
        %2911 = vmatpush2.msra.mxu0 0.0
        %2912 = vmatprep.subr.mxu0 0.0
        %2913 = vmatpush2.msra.mxu0 0.0
        %2914 = vmatprep.subr.mxu0 0.0
        %2915 = vmatpush2.msra.mxu0 0.0
        %2916 = vmatprep.subr.mxu0 0.0
        %2917 = vmatpush2.msra.mxu0 0.0
        %2918 = vmatprep.subr.mxu0 0.0
        %2919 = vmatpush2.msra.mxu0 0.0
        %2920 = vmatprep.subr.mxu0 0.0
        %2921 = vmatpush2.msra.mxu0 0.0
        %2922 = vmatprep.subr.mxu0 0.0
        %2923 = vmatpush2.msra.mxu0 0.0
        %2924 = vmatprep.subr.mxu0 0.0
        %2925 = vmatpush2.msra.mxu0 0.0
        %2926 = vmatprep.subr.mxu0 0.0
        %2927 = vmatpush2.msra.mxu0 0.0
        %2928 = vmatprep.subr.mxu0 0.0
        %2929 = vmatpush2.msra.mxu0 0.0
        %2930 = vmatprep.subr.mxu0 0.0
        %2931 = vmatpush2.msra.mxu0 0.0
        %2932 = vmatprep.subr.mxu0 0.0
        %2933 = vmatpush2.msra.mxu0 0.0
        %2934 = vmatprep.subr.mxu0 0.0
        %2935 = vmatpush2.msra.mxu0 0.0
        %2936 = vmatprep.subr.mxu0 0.0
        %2937 = vmatpush2.msra.mxu0 0.0
        %2938 = vmatprep.mubr.f32.mxu0 0.0
        %2939 = vmatmul.mubr.f32.gmra.mxu0 %v2872
        %v2940 = vpop.f32.mrf.mxu0
        %v2941 = vadd.f32 0.0, %v2940
        %v2942 = vpop.f32.mrf.mxu0
        %2943 = vdwg.mxu0
        %2944 = vrot.lane.b32.xlu0 %v1676, 104
        %v2945 = vpop.permute.xlu0 %2944
        %v2948 = vsel %vm1679, %v2867, 0
        %2950 = vmatprep.subr.mxu0 0.0
        %2951 = vmatpush1.msra.mxu0 0.0
        %2952 = vmatprep.subr.mxu0 0.0
        %2953 = vmatpush1.msra.mxu0 0.0
        %2954 = vmatprep.subr.mxu0 0.0
        %2955 = vmatpush1.msra.mxu0 0.0
        %2956 = vmatprep.subr.mxu0 0.0
        %2957 = vmatpush1.msra.mxu0 0.0
        %2958 = vmatprep.subr.mxu0 0.0
        %2959 = vmatpush1.msra.mxu0 0.0
        %2960 = vmatprep.subr.mxu0 0.0
        %2961 = vmatpush1.msra.mxu0 0.0
        %2962 = vmatprep.subr.mxu0 0.0
        %2963 = vmatpush1.msra.mxu0 0.0
        %2964 = vmatprep.subr.mxu0 0.0
        %2965 = vmatpush1.msra.mxu0 0.0
        %2966 = vmatprep.subr.mxu0 0.0
        %2967 = vmatpush1.msra.mxu0 0.0
        %2968 = vmatprep.subr.mxu0 0.0
        %2969 = vmatpush1.msra.mxu0 0.0
        %2970 = vmatprep.subr.mxu0 0.0
        %2971 = vmatpush1.msra.mxu0 0.0
        %2972 = vmatprep.subr.mxu0 0.0
        %2973 = vmatpush1.msra.mxu0 0.0
        %2974 = vmatprep.subr.mxu0 0.0
        %2975 = vmatpush1.msra.mxu0 0.0
        %2976 = vmatprep.subr.mxu0 0.0
        %2977 = vmatpush1.msra.mxu0 0.0
        %2978 = vmatprep.subr.mxu0 0.0
        %2979 = vmatpush1.msra.mxu0 0.0
        %2980 = vmatprep.subr.mxu0 0.0
        %2981 = vmatpush1.msra.mxu0 %v2945
        %2982 = vmatprep.subr.mxu0 0.0
        %2983 = vmatpush2.msra.mxu0 0.0
        %2984 = vmatprep.subr.mxu0 0.0
        %2985 = vmatpush2.msra.mxu0 0.0
        %2986 = vmatprep.subr.mxu0 0.0
        %2987 = vmatpush2.msra.mxu0 0.0
        %2988 = vmatprep.subr.mxu0 0.0
        %2989 = vmatpush2.msra.mxu0 0.0
        %2990 = vmatprep.subr.mxu0 0.0
        %2991 = vmatpush2.msra.mxu0 0.0
        %2992 = vmatprep.subr.mxu0 0.0
        %2993 = vmatpush2.msra.mxu0 0.0
        %2994 = vmatprep.subr.mxu0 0.0
        %2995 = vmatpush2.msra.mxu0 0.0
        %2996 = vmatprep.subr.mxu0 0.0
        %2997 = vmatpush2.msra.mxu0 0.0
        %2998 = vmatprep.subr.mxu0 0.0
        %2999 = vmatpush2.msra.mxu0 0.0
        %3000 = vmatprep.subr.mxu0 0.0
        %3001 = vmatpush2.msra.mxu0 0.0
        %3002 = vmatprep.subr.mxu0 0.0
        %3003 = vmatpush2.msra.mxu0 0.0
        %3004 = vmatprep.subr.mxu0 0.0
        %3005 = vmatpush2.msra.mxu0 0.0
        %3006 = vmatprep.subr.mxu0 0.0
        %3007 = vmatpush2.msra.mxu0 0.0
        %3008 = vmatprep.subr.mxu0 0.0
        %3009 = vmatpush2.msra.mxu0 0.0
        %3010 = vmatprep.subr.mxu0 0.0
        %3011 = vmatpush2.msra.mxu0 0.0
        %3012 = vmatprep.subr.mxu0 0.0
        %3013 = vmatpush2.msra.mxu0 0.0
        %3014 = vmatprep.mubr.f32.mxu0 0.0
        %3015 = vmatmul.mubr.f32.gmra.mxu0 %v2948
        %v3016 = vpop.f32.mrf.mxu0
        %v3017 = vadd.f32 0.0, %v3016
        %v3018 = vpop.f32.mrf.mxu0
        %3019 = vdwg.mxu0
        %3022 = vrot.lane.b32.xlu0 %v2272, 8
        %v3023 = vpop.permute.xlu0 %3022
        %3024 = vrot.lane.b32.xlu0 %v2349, 8
        %v3025 = vpop.permute.xlu0 %3024
        %3030 = vrot.lane.b32.xlu0 %v2607, 16
        %v3031 = vpop.permute.xlu0 %3030
        %3032 = vrot.lane.b32.xlu0 %v2683, 16
        %v3033 = vpop.permute.xlu0 %3032
        %3038 = vrot.lane.b32.xlu0 %v2941, 24
        %v3039 = vpop.permute.xlu0 %3038
        %3040 = vrot.lane.b32.xlu0 %v3017, 24
        %v3041 = vpop.permute.xlu0 %3040
        %v3044 = vsel %vm1679, %v1940, %v3023
        %v3045 = vsel %vm1679, %v2013, %v3025
        %vm3046 = vcmask 130048
        %v3047 = vsel %vm3046, %v3044, %v3031
        %v3048 = vsel %vm3046, %v3045, %v3033
        %vm3049 = vcmask 195584
        %v3050 = vsel %vm3049, %v3047, %v3039
        %v3051 = vsel %vm3049, %v3048, %v3041
        %v3053 = vlaneseq
        %v3054 = vshrl.u32 %v3053, 7
        %v3055 = vsub.s32 0, %v3054
        %v3056 = vrot.slane %v1416, %v3055
        %v3059 = vsel %vm1423, %v3050, 0
        %v3062 = vsel %vm1423, %v3051, 0
        %3064 = vmatprep.subr.mxu0 0.0
        %3065 = vmatpush1.msra.mxu0 0.0
        %3066 = vmatprep.subr.mxu0 0.0
        %3067 = vmatpush1.msra.mxu0 0.0
        %3068 = vmatprep.subr.mxu0 0.0
        %3069 = vmatpush1.msra.mxu0 0.0
        %3070 = vmatprep.subr.mxu0 0.0
        %3071 = vmatpush1.msra.mxu0 0.0
        %3072 = vmatprep.subr.mxu0 0.0
        %3073 = vmatpush1.msra.mxu0 0.0
        %3074 = vmatprep.subr.mxu0 0.0
        %3075 = vmatpush1.msra.mxu0 0.0
        %3076 = vmatprep.subr.mxu0 0.0
        %3077 = vmatpush1.msra.mxu0 0.0
        %3078 = vmatprep.subr.mxu0 0.0
        %3079 = vmatpush1.msra.mxu0 0.0
        %3080 = vmatprep.subr.mxu0 0.0
        %3081 = vmatpush1.msra.mxu0 0.0
        %3082 = vmatprep.subr.mxu0 0.0
        %3083 = vmatpush1.msra.mxu0 0.0
        %3084 = vmatprep.subr.mxu0 0.0
        %3085 = vmatpush1.msra.mxu0 0.0
        %3086 = vmatprep.subr.mxu0 0.0
        %3087 = vmatpush1.msra.mxu0 0.0
        %3088 = vmatprep.subr.mxu0 0.0
        %3089 = vmatpush1.msra.mxu0 %v1415
        %3090 = vmatprep.subr.mxu0 0.0
        %3091 = vmatpush1.msra.mxu0 %v1414
        %3092 = vmatprep.subr.mxu0 0.0
        %3093 = vmatpush1.msra.mxu0 %v1413
        %3094 = vmatprep.subr.mxu0 0.0
        %3095 = vmatpush1.msra.mxu0 %v1412
        %3096 = vmatprep.subr.mxu0 0.0
        %3097 = vmatpush2.msra.mxu0 0.0
        %3098 = vmatprep.subr.mxu0 0.0
        %3099 = vmatpush2.msra.mxu0 0.0
        %3100 = vmatprep.subr.mxu0 0.0
        %3101 = vmatpush2.msra.mxu0 0.0
        %3102 = vmatprep.subr.mxu0 0.0
        %3103 = vmatpush2.msra.mxu0 0.0
        %3104 = vmatprep.subr.mxu0 0.0
        %3105 = vmatpush2.msra.mxu0 0.0
        %3106 = vmatprep.subr.mxu0 0.0
        %3107 = vmatpush2.msra.mxu0 0.0
        %3108 = vmatprep.subr.mxu0 0.0
        %3109 = vmatpush2.msra.mxu0 0.0
        %3110 = vmatprep.subr.mxu0 0.0
        %3111 = vmatpush2.msra.mxu0 0.0
        %3112 = vmatprep.subr.mxu0 0.0
        %3113 = vmatpush2.msra.mxu0 0.0
        %3114 = vmatprep.subr.mxu0 0.0
        %3115 = vmatpush2.msra.mxu0 0.0
        %3116 = vmatprep.subr.mxu0 0.0
        %3117 = vmatpush2.msra.mxu0 0.0
        %3118 = vmatprep.subr.mxu0 0.0
        %3119 = vmatpush2.msra.mxu0 0.0
        %3120 = vmatprep.subr.mxu0 0.0
        %3121 = vmatpush2.msra.mxu0 0.0
        %3122 = vmatprep.subr.mxu0 0.0
        %3123 = vmatpush2.msra.mxu0 0.0
        %3124 = vmatprep.subr.mxu0 0.0
        %3125 = vmatpush2.msra.mxu0 0.0
        %3126 = vmatprep.subr.mxu0 0.0
        %3127 = vmatpush2.msra.mxu0 0.0
        %3128 = vmatprep.mubr.f32.mxu0 0.0
        %3129 = vmatmul.mubr.f32.gmra.mxu0 %v3059
        %v3130 = vpop.f32.mrf.mxu0
        %v3131 = vadd.f32 %v3056, %v3130
        %v3132 = vpop.f32.mrf.mxu0
        %3133 = vmatprep.mubr.f32.mxu0 0.0
        %3134 = vmatmul.mubr.f32.gmra.mxu0 %v3062
        %v3135 = vpop.f32.mrf.mxu0
        %v3136 = vadd.f32 %v3056, %v3135
        %v3137 = vpop.f32.mrf.mxu0
        %3138 = vdwg.mxu0
        %v3139 = vld [vmem:[%s57] sm:$0x1]
        %v3140 = vld [vmem:[%s59] sm:$0x1]
        %v3141 = vsel %vm1423, %v3131, 0.0
        %3142 = vadd.xlane.f32.xlu0 %v3141
        %v3143 = vpop.xlane.xlu0 %3142
        %v3144 = vsel %vm1423, %v3136, 0.0
        %3145 = vadd.xlane.f32.xlu0 %v3144
        %v3146 = vpop.xlane.xlu0 %3145
        %v3147 = vrcp.pop 32.0
        %v3148 = vmul.f32 %v3143, %v3147
        %v3149 = vmul.f32 %v3146, %v3147
        %v3150 = vsub.f32 %v3131, %v3148
        %v3151 = vsub.f32 %v3136, %v3149
        %v3152 = vmul.f32 %v3150, %v3150
        %v3153 = vmul.f32 %v3151, %v3151
        %v3154 = vsel %vm1423, %v3152, 0.0
        %3155 = vadd.xlane.f32.xlu0 %v3154
        %v3156 = vpop.xlane.xlu0 %3155
        %v3157 = vsel %vm1423, %v3153, 0.0
        %3158 = vadd.xlane.f32.xlu0 %v3157
        %v3159 = vpop.xlane.xlu0 %3158
        %v3160 = vmul.f32 %v3156, %v3147
        %v3161 = vmul.f32 %v3159, %v3147
        %v3162 = vadd.f32 %v3160, 1e-05
        %v3163 = vadd.f32 %v3161, 1e-05
        %v3164 = vrsqrt.pop %v3162
        %v3165 = vrsqrt.pop %v3163
        %v3166 = vmul.f32 %v3150, %v3164
        %v3167 = vmul.f32 %v3151, %v3165
        %v3169 = vlaneseq
        %v3170 = vshrl.u32 %v3169, 7
        %v3171 = vsub.s32 0, %v3170
        %v3172 = vrot.slane %v3139, %v3171
        %v3174 = vmul.f32 %v3166, %v3172
        %v3175 = vmul.f32 %v3167, %v3172
        %v3177 = vlaneseq
        %v3178 = vshrl.u32 %v3177, 7
        %v3179 = vsub.s32 0, %v3178
        %v3180 = vrot.slane %v3140, %v3179
        %v3182 = vadd.f32 %v3174, %v3180
        %v3183 = vadd.f32 %v3175, %v3180
        %v3184 = vld [vmem:[%s1354] sm:$0xff]
        %v3185 = vld [vmem:[%s1354 + $0x8] sm:$0xff]
        %v3186 = vadd.f32 %v3182, %v3184
        %v3187 = vadd.f32 %v3183, %v3185
        %v3188 = vld [vmem:[%s1372] sm:$0xff]
        %v3189 = vld [vmem:[%s1372 + $0x8] sm:$0xff]
        %v3190 = vld [vmem:[%s1372 + $0x10] sm:$0xff]
        %v3191 = vld [vmem:[%s1372 + $0x18] sm:$0xff]
        %v3192 = vld [vmem:[%s1378] sm:$0xff]
        %v3193 = vld [vmem:[%s1378 + $0x8] sm:$0xff]
        %v3194 = vld [vmem:[%s1378 + $0x10] sm:$0xff]
        %v3195 = vld [vmem:[%s1378 + $0x18] sm:$0xff]
        %v3196 = vadd.f32 %v3188, %v3192
        %v3197 = vadd.f32 %v3189, %v3193
        %v3198 = vadd.f32 %v3190, %v3194
        %v3199 = vadd.f32 %v3191, %v3195
        %v3200 = vld [vmem:[%s1180] sm:$0x1]
        %v3201 = vld [vmem:[%s1180 + $0x1] sm:$0x1]
        %v3202 = vld [vmem:[#allocation14] sm:$0xff]
        %v3203 = vld [vmem:[#allocation14 + $0x8] sm:$0xff]
        %v3204 = vld [vmem:[#allocation14 + $0x10] sm:$0xff]
        %v3205 = vld [vmem:[#allocation14 + $0x18] sm:$0xff]
        %v3206 = vld [vmem:[#allocation16] sm:$0x1]
        %v3207 = vld [vmem:[%s37] sm:$0xff]
        %v3208 = vld [vmem:[%s37 + $0x8] sm:$0xff]
        %v3209 = vld [vmem:[%s37 + $0x10] sm:$0xff]
        %v3210 = vld [vmem:[%s37 + $0x18] sm:$0xff]
        %v3211 = vld [vmem:[#allocation17] sm:$0x1]
        %v3212 = vld [vmem:[#allocation19] sm:$0xff]
        %v3213 = vld [vmem:[#allocation19 + $0x8] sm:$0xff]
        %v3214 = vld [vmem:[#allocation19 + $0x10] sm:$0xff]
        %v3215 = vld [vmem:[#allocation19 + $0x18] sm:$0xff]
        %v3216 = vld [vmem:[%s43] sm:$0x1]
        %v3217 = vld [vmem:[#allocation20] sm:$0xff]
        %v3218 = vld [vmem:[#allocation20 + $0x8] sm:$0xff]
        %v3219 = vld [vmem:[#allocation20 + $0x10] sm:$0xff]
        %v3220 = vld [vmem:[#allocation20 + $0x18] sm:$0xff]
        %v3221 = vld [vmem:[%s47] sm:$0x1]
        %v3223 = vlaneseq
        %v3224 = vshrl.u32 %v3223, 7
        %v3225 = vsub.s32 0, %v3224
        %v3226 = vrot.slane %v3206, %v3225
        %v3229 = vsel %vm1423, %v3186, 0
        %v3232 = vsel %vm1423, %v3187, 0
        %3234 = vmatprep.subr.mxu0 0.0
        %3235 = vmatpush1.msra.mxu0 0.0
        %3236 = vmatprep.subr.mxu0 0.0
        %3237 = vmatpush1.msra.mxu0 0.0
        %3238 = vmatprep.subr.mxu0 0.0
        %3239 = vmatpush1.msra.mxu0 0.0
        %3240 = vmatprep.subr.mxu0 0.0
        %3241 = vmatpush1.msra.mxu0 0.0
        %3242 = vmatprep.subr.mxu0 0.0
        %3243 = vmatpush1.msra.mxu0 0.0
        %3244 = vmatprep.subr.mxu0 0.0
        %3245 = vmatpush1.msra.mxu0 0.0
        %3246 = vmatprep.subr.mxu0 0.0
        %3247 = vmatpush1.msra.mxu0 0.0
        %3248 = vmatprep.subr.mxu0 0.0
        %3249 = vmatpush1.msra.mxu0 0.0
        %3250 = vmatprep.subr.mxu0 0.0
        %3251 = vmatpush1.msra.mxu0 0.0
        %3252 = vmatprep.subr.mxu0 0.0
        %3253 = vmatpush1.msra.mxu0 0.0
        %3254 = vmatprep.subr.mxu0 0.0
        %3255 = vmatpush1.msra.mxu0 0.0
        %3256 = vmatprep.subr.mxu0 0.0
        %3257 = vmatpush1.msra.mxu0 0.0
        %3258 = vmatprep.subr.mxu0 0.0
        %3259 = vmatpush1.msra.mxu0 %v3205
        %3260 = vmatprep.subr.mxu0 0.0
        %3261 = vmatpush1.msra.mxu0 %v3204
        %3262 = vmatprep.subr.mxu0 0.0
        %3263 = vmatpush1.msra.mxu0 %v3203
        %3264 = vmatprep.subr.mxu0 0.0
        %3265 = vmatpush1.msra.mxu0 %v3202
        %3266 = vmatprep.subr.mxu0 0.0
        %3267 = vmatpush2.msra.mxu0 0.0
        %3268 = vmatprep.subr.mxu0 0.0
        %3269 = vmatpush2.msra.mxu0 0.0
        %3270 = vmatprep.subr.mxu0 0.0
        %3271 = vmatpush2.msra.mxu0 0.0
        %3272 = vmatprep.subr.mxu0 0.0
        %3273 = vmatpush2.msra.mxu0 0.0
        %3274 = vmatprep.subr.mxu0 0.0
        %3275 = vmatpush2.msra.mxu0 0.0
        %3276 = vmatprep.subr.mxu0 0.0
        %3277 = vmatpush2.msra.mxu0 0.0
        %3278 = vmatprep.subr.mxu0 0.0
        %3279 = vmatpush2.msra.mxu0 0.0
        %3280 = vmatprep.subr.mxu0 0.0
        %3281 = vmatpush2.msra.mxu0 0.0
        %3282 = vmatprep.subr.mxu0 0.0
        %3283 = vmatpush2.msra.mxu0 0.0
        %3284 = vmatprep.subr.mxu0 0.0
        %3285 = vmatpush2.msra.mxu0 0.0
        %3286 = vmatprep.subr.mxu0 0.0
        %3287 = vmatpush2.msra.mxu0 0.0
        %3288 = vmatprep.subr.mxu0 0.0
        %3289 = vmatpush2.msra.mxu0 0.0
        %3290 = vmatprep.subr.mxu0 0.0
        %3291 = vmatpush2.msra.mxu0 0.0
        %3292 = vmatprep.subr.mxu0 0.0
        %3293 = vmatpush2.msra.mxu0 0.0
        %3294 = vmatprep.subr.mxu0 0.0
        %3295 = vmatpush2.msra.mxu0 0.0
        %3296 = vmatprep.subr.mxu0 0.0
        %3297 = vmatpush2.msra.mxu0 0.0
        %3298 = vmatprep.mubr.f32.mxu0 0.0
        %3299 = vmatmul.mubr.f32.gmra.mxu0 %v3229
        %v3300 = vpop.f32.mrf.mxu0
        %v3301 = vadd.f32 %v3226, %v3300
        %v3302 = vpop.f32.mrf.mxu0
        %3303 = vmatprep.mubr.f32.mxu0 0.0
        %3304 = vmatmul.mubr.f32.gmra.mxu0 %v3232
        %v3305 = vpop.f32.mrf.mxu0
        %v3306 = vadd.f32 %v3226, %v3305
        %v3307 = vpop.f32.mrf.mxu0
        %3308 = vdwg.mxu0
        %v3310 = vlaneseq
        %v3311 = vshrl.u32 %v3310, 7
        %v3312 = vsub.s32 0, %v3311
        %v3313 = vrot.slane %v3211, %v3312
        %v3316 = vsel %vm1423, %v3196, 0
        %v3319 = vsel %vm1423, %v3197, 0
        %v3322 = vsel %vm1423, %v3198, 0
        %v3325 = vsel %vm1423, %v3199, 0
        %3327 = vmatprep.subr.mxu0 0.0
        %3328 = vmatpush1.msra.mxu0 0.0
        %3329 = vmatprep.subr.mxu0 0.0
        %3330 = vmatpush1.msra.mxu0 0.0
        %3331 = vmatprep.subr.mxu0 0.0
        %3332 = vmatpush1.msra.mxu0 0.0
        %3333 = vmatprep.subr.mxu0 0.0
        %3334 = vmatpush1.msra.mxu0 0.0
        %3335 = vmatprep.subr.mxu0 0.0
        %3336 = vmatpush1.msra.mxu0 0.0
        %3337 = vmatprep.subr.mxu0 0.0
        %3338 = vmatpush1.msra.mxu0 0.0
        %3339 = vmatprep.subr.mxu0 0.0
        %3340 = vmatpush1.msra.mxu0 0.0
        %3341 = vmatprep.subr.mxu0 0.0
        %3342 = vmatpush1.msra.mxu0 0.0
        %3343 = vmatprep.subr.mxu0 0.0
        %3344 = vmatpush1.msra.mxu0 0.0
        %3345 = vmatprep.subr.mxu0 0.0
        %3346 = vmatpush1.msra.mxu0 0.0
        %3347 = vmatprep.subr.mxu0 0.0
        %3348 = vmatpush1.msra.mxu0 0.0
        %3349 = vmatprep.subr.mxu0 0.0
        %3350 = vmatpush1.msra.mxu0 0.0
        %3351 = vmatprep.subr.mxu0 0.0
        %3352 = vmatpush1.msra.mxu0 %v3210
        %3353 = vmatprep.subr.mxu0 0.0
        %3354 = vmatpush1.msra.mxu0 %v3209
        %3355 = vmatprep.subr.mxu0 0.0
        %3356 = vmatpush1.msra.mxu0 %v3208
        %3357 = vmatprep.subr.mxu0 0.0
        %3358 = vmatpush1.msra.mxu0 %v3207
        %3359 = vmatprep.subr.mxu0 0.0
        %3360 = vmatpush2.msra.mxu0 0.0
        %3361 = vmatprep.subr.mxu0 0.0
        %3362 = vmatpush2.msra.mxu0 0.0
        %3363 = vmatprep.subr.mxu0 0.0
        %3364 = vmatpush2.msra.mxu0 0.0
        %3365 = vmatprep.subr.mxu0 0.0
        %3366 = vmatpush2.msra.mxu0 0.0
        %3367 = vmatprep.subr.mxu0 0.0
        %3368 = vmatpush2.msra.mxu0 0.0
        %3369 = vmatprep.subr.mxu0 0.0
        %3370 = vmatpush2.msra.mxu0 0.0
        %3371 = vmatprep.subr.mxu0 0.0
        %3372 = vmatpush2.msra.mxu0 0.0
        %3373 = vmatprep.subr.mxu0 0.0
        %3374 = vmatpush2.msra.mxu0 0.0
        %3375 = vmatprep.subr.mxu0 0.0
        %3376 = vmatpush2.msra.mxu0 0.0
        %3377 = vmatprep.subr.mxu0 0.0
        %3378 = vmatpush2.msra.mxu0 0.0
        %3379 = vmatprep.subr.mxu0 0.0
        %3380 = vmatpush2.msra.mxu0 0.0
        %3381 = vmatprep.subr.mxu0 0.0
        %3382 = vmatpush2.msra.mxu0 0.0
        %3383 = vmatprep.subr.mxu0 0.0
        %3384 = vmatpush2.msra.mxu0 0.0
        %3385 = vmatprep.subr.mxu0 0.0
        %3386 = vmatpush2.msra.mxu0 0.0
        %3387 = vmatprep.subr.mxu0 0.0
        %3388 = vmatpush2.msra.mxu0 0.0
        %3389 = vmatprep.subr.mxu0 0.0
        %3390 = vmatpush2.msra.mxu0 0.0
        %3391 = vmatprep.mubr.f32.mxu0 0.0
        %3392 = vmatmul.mubr.f32.gmra.mxu0 %v3316
        %v3393 = vpop.f32.mrf.mxu0
        %v3394 = vadd.f32 %v3313, %v3393
        %v3395 = vpop.f32.mrf.mxu0
        %3396 = vmatprep.mubr.f32.mxu0 0.0
        %3397 = vmatmul.mubr.f32.gmra.mxu0 %v3319
        %v3398 = vpop.f32.mrf.mxu0
        %v3399 = vadd.f32 %v3313, %v3398
        %v3400 = vpop.f32.mrf.mxu0
        %3401 = vmatprep.mubr.f32.mxu0 0.0
        %3402 = vmatmul.mubr.f32.gmra.mxu0 %v3322
        %v3403 = vpop.f32.mrf.mxu0
        %v3404 = vadd.f32 %v3313, %v3403
        %v3405 = vpop.f32.mrf.mxu0
        %3406 = vmatprep.mubr.f32.mxu0 0.0
        %3407 = vmatmul.mubr.f32.gmra.mxu0 %v3325
        %v3408 = vpop.f32.mrf.mxu0
        %v3409 = vadd.f32 %v3313, %v3408
        %v3410 = vpop.f32.mrf.mxu0
        %3411 = vdwg.mxu0
        %v3413 = vlaneseq
        %v3414 = vshrl.u32 %v3413, 7
        %v3415 = vsub.s32 0, %v3414
        %v3416 = vrot.slane %v3216, %v3415
        %v3419 = vsel %vm1423, %v3188, 0
        %v3422 = vsel %vm1423, %v3189, 0
        %v3425 = vsel %vm1423, %v3190, 0
        %v3428 = vsel %vm1423, %v3191, 0
        %3430 = vmatprep.subr.mxu0 0.0
        %3431 = vmatpush1.msra.mxu0 0.0
        %3432 = vmatprep.subr.mxu0 0.0
        %3433 = vmatpush1.msra.mxu0 0.0
        %3434 = vmatprep.subr.mxu0 0.0
        %3435 = vmatpush1.msra.mxu0 0.0
        %3436 = vmatprep.subr.mxu0 0.0
        %3437 = vmatpush1.msra.mxu0 0.0
        %3438 = vmatprep.subr.mxu0 0.0
        %3439 = vmatpush1.msra.mxu0 0.0
        %3440 = vmatprep.subr.mxu0 0.0
        %3441 = vmatpush1.msra.mxu0 0.0
        %3442 = vmatprep.subr.mxu0 0.0
        %3443 = vmatpush1.msra.mxu0 0.0
        %3444 = vmatprep.subr.mxu0 0.0
        %3445 = vmatpush1.msra.mxu0 0.0
        %3446 = vmatprep.subr.mxu0 0.0
        %3447 = vmatpush1.msra.mxu0 0.0
        %3448 = vmatprep.subr.mxu0 0.0
        %3449 = vmatpush1.msra.mxu0 0.0
        %3450 = vmatprep.subr.mxu0 0.0
        %3451 = vmatpush1.msra.mxu0 0.0
        %3452 = vmatprep.subr.mxu0 0.0
        %3453 = vmatpush1.msra.mxu0 0.0
        %3454 = vmatprep.subr.mxu0 0.0
        %3455 = vmatpush1.msra.mxu0 %v3215
        %3456 = vmatprep.subr.mxu0 0.0
        %3457 = vmatpush1.msra.mxu0 %v3214
        %3458 = vmatprep.subr.mxu0 0.0
        %3459 = vmatpush1.msra.mxu0 %v3213
        %3460 = vmatprep.subr.mxu0 0.0
        %3461 = vmatpush1.msra.mxu0 %v3212
        %3462 = vmatprep.subr.mxu0 0.0
        %3463 = vmatpush2.msra.mxu0 0.0
        %3464 = vmatprep.subr.mxu0 0.0
        %3465 = vmatpush2.msra.mxu0 0.0
        %3466 = vmatprep.subr.mxu0 0.0
        %3467 = vmatpush2.msra.mxu0 0.0
        %3468 = vmatprep.subr.mxu0 0.0
        %3469 = vmatpush2.msra.mxu0 0.0
        %3470 = vmatprep.subr.mxu0 0.0
        %3471 = vmatpush2.msra.mxu0 0.0
        %3472 = vmatprep.subr.mxu0 0.0
        %3473 = vmatpush2.msra.mxu0 0.0
        %3474 = vmatprep.subr.mxu0 0.0
        %3475 = vmatpush2.msra.mxu0 0.0
        %3476 = vmatprep.subr.mxu0 0.0
        %3477 = vmatpush2.msra.mxu0 0.0
        %3478 = vmatprep.subr.mxu0 0.0
        %3479 = vmatpush2.msra.mxu0 0.0
        %3480 = vmatprep.subr.mxu0 0.0
        %3481 = vmatpush2.msra.mxu0 0.0
        %3482 = vmatprep.subr.mxu0 0.0
        %3483 = vmatpush2.msra.mxu0 0.0
        %3484 = vmatprep.subr.mxu0 0.0
        %3485 = vmatpush2.msra.mxu0 0.0
        %3486 = vmatprep.subr.mxu0 0.0
        %3487 = vmatpush2.msra.mxu0 0.0
        %3488 = vmatprep.subr.mxu0 0.0
        %3489 = vmatpush2.msra.mxu0 0.0
        %3490 = vmatprep.subr.mxu0 0.0
        %3491 = vmatpush2.msra.mxu0 0.0
        %3492 = vmatprep.subr.mxu0 0.0
        %3493 = vmatpush2.msra.mxu0 0.0
        %3494 = vmatprep.mubr.f32.mxu0 0.0
        %3495 = vmatmul.mubr.f32.gmra.mxu0 %v3419
        %v3496 = vpop.f32.mrf.mxu0
        %v3497 = vadd.f32 %v3416, %v3496
        %v3498 = vpop.f32.mrf.mxu0
        %3499 = vmatprep.mubr.f32.mxu0 0.0
        %3500 = vmatmul.mubr.f32.gmra.mxu0 %v3422
        %v3501 = vpop.f32.mrf.mxu0
        %v3502 = vadd.f32 %v3416, %v3501
        %v3503 = vpop.f32.mrf.mxu0
        %3504 = vmatprep.mubr.f32.mxu0 0.0
        %3505 = vmatmul.mubr.f32.gmra.mxu0 %v3425
        %v3506 = vpop.f32.mrf.mxu0
        %v3507 = vadd.f32 %v3416, %v3506
        %v3508 = vpop.f32.mrf.mxu0
        %3509 = vmatprep.mubr.f32.mxu0 0.0
        %3510 = vmatmul.mubr.f32.gmra.mxu0 %v3428
        %v3511 = vpop.f32.mrf.mxu0
        %v3512 = vadd.f32 %v3416, %v3511
        %v3513 = vpop.f32.mrf.mxu0
        %3514 = vdwg.mxu0
        %v3516 = vsel %vm1679, %v3301, 0
        %v3519 = vsel %vm1679, %v3394, 0
        %v3522 = vsel %vm1679, %v3399, 0
        %3524 = vmatprep.subr.mxu0 0.0
        %3525 = vmatpush1.xpose.msra.mxu0 0.0
        %3526 = vmatprep.subr.mxu0 0.0
        %3527 = vmatpush1.xpose.msra.mxu0 0.0
        %3528 = vmatprep.subr.mxu0 0.0
        %3529 = vmatpush1.xpose.msra.mxu0 0.0
        %3530 = vmatprep.subr.mxu0 0.0
        %3531 = vmatpush1.xpose.msra.mxu0 0.0
        %3532 = vmatprep.subr.mxu0 0.0
        %3533 = vmatpush1.xpose.msra.mxu0 0.0
        %3534 = vmatprep.subr.mxu0 0.0
        %3535 = vmatpush1.xpose.msra.mxu0 0.0
        %3536 = vmatprep.subr.mxu0 0.0
        %3537 = vmatpush1.xpose.msra.mxu0 0.0
        %3538 = vmatprep.subr.mxu0 0.0
        %3539 = vmatpush1.xpose.msra.mxu0 0.0
        %3540 = vmatprep.subr.mxu0 0.0
        %3541 = vmatpush1.xpose.msra.mxu0 0.0
        %3542 = vmatprep.subr.mxu0 0.0
        %3543 = vmatpush1.xpose.msra.mxu0 0.0
        %3544 = vmatprep.subr.mxu0 0.0
        %3545 = vmatpush1.xpose.msra.mxu0 0.0
        %3546 = vmatprep.subr.mxu0 0.0
        %3547 = vmatpush1.xpose.msra.mxu0 0.0
        %3548 = vmatprep.subr.mxu0 0.0
        %3549 = vmatpush1.xpose.msra.mxu0 0.0
        %3550 = vmatprep.subr.mxu0 0.0
        %3551 = vmatpush1.xpose.msra.mxu0 0.0
        %3552 = vmatprep.subr.mxu0 0.0
        %3553 = vmatpush1.xpose.msra.mxu0 %v3522
        %3554 = vmatprep.subr.mxu0 0.0
        %3555 = vmatpush1.xpose.msra.mxu0 %v3519
        %3556 = vmatprep.subr.mxu0 0.0
        %3557 = vmatpush2.xpose.msra.mxu0 0.0
        %3558 = vmatprep.subr.mxu0 0.0
        %3559 = vmatpush2.xpose.msra.mxu0 0.0
        %3560 = vmatprep.subr.mxu0 0.0
        %3561 = vmatpush2.xpose.msra.mxu0 0.0
        %3562 = vmatprep.subr.mxu0 0.0
        %3563 = vmatpush2.xpose.msra.mxu0 0.0
        %3564 = vmatprep.subr.mxu0 0.0
        %3565 = vmatpush2.xpose.msra.mxu0 0.0
        %3566 = vmatprep.subr.mxu0 0.0
        %3567 = vmatpush2.xpose.msra.mxu0 0.0
        %3568 = vmatprep.subr.mxu0 0.0
        %3569 = vmatpush2.xpose.msra.mxu0 0.0
        %3570 = vmatprep.subr.mxu0 0.0
        %3571 = vmatpush2.xpose.msra.mxu0 0.0
        %3572 = vmatprep.subr.mxu0 0.0
        %3573 = vmatpush2.xpose.msra.mxu0 0.0
        %3574 = vmatprep.subr.mxu0 0.0
        %3575 = vmatpush2.xpose.msra.mxu0 0.0
        %3576 = vmatprep.subr.mxu0 0.0
        %3577 = vmatpush2.xpose.msra.mxu0 0.0
        %3578 = vmatprep.subr.mxu0 0.0
        %3579 = vmatpush2.xpose.msra.mxu0 0.0
        %3580 = vmatprep.subr.mxu0 0.0
        %3581 = vmatpush2.xpose.msra.mxu0 0.0
        %3582 = vmatprep.subr.mxu0 0.0
        %3583 = vmatpush2.xpose.msra.mxu0 0.0
        %3584 = vmatprep.subr.mxu0 0.0
        %3585 = vmatpush2.xpose.msra.mxu0 0.0
        %3586 = vmatprep.subr.mxu0 0.0
        %3587 = vmatpush2.xpose.msra.mxu0 0.0
        %3588 = vmatprep.mubr.f32.mxu0 0.0
        %3589 = vmatmul.mubr.f32.gmra.mxu0 %v3516
        %v3590 = vpop.f32.mrf.mxu0
        %v3591 = vadd.f32 0.0, %v3590
        %v3592 = vpop.f32.mrf.mxu0
        %3593 = vdwg.mxu0
        %v3595 = vsel %vm1679, %v3306, 0
        %v3598 = vsel %vm1679, %v3404, 0
        %v3601 = vsel %vm1679, %v3409, 0
        %3603 = vmatprep.subr.mxu0 0.0
        %3604 = vmatpush1.xpose.msra.mxu0 0.0
        %3605 = vmatprep.subr.mxu0 0.0
        %3606 = vmatpush1.xpose.msra.mxu0 0.0
        %3607 = vmatprep.subr.mxu0 0.0
        %3608 = vmatpush1.xpose.msra.mxu0 0.0
        %3609 = vmatprep.subr.mxu0 0.0
        %3610 = vmatpush1.xpose.msra.mxu0 0.0
        %3611 = vmatprep.subr.mxu0 0.0
        %3612 = vmatpush1.xpose.msra.mxu0 0.0
        %3613 = vmatprep.subr.mxu0 0.0
        %3614 = vmatpush1.xpose.msra.mxu0 0.0
        %3615 = vmatprep.subr.mxu0 0.0
        %3616 = vmatpush1.xpose.msra.mxu0 0.0
        %3617 = vmatprep.subr.mxu0 0.0
        %3618 = vmatpush1.xpose.msra.mxu0 0.0
        %3619 = vmatprep.subr.mxu0 0.0
        %3620 = vmatpush1.xpose.msra.mxu0 0.0
        %3621 = vmatprep.subr.mxu0 0.0
        %3622 = vmatpush1.xpose.msra.mxu0 0.0
        %3623 = vmatprep.subr.mxu0 0.0
        %3624 = vmatpush1.xpose.msra.mxu0 0.0
        %3625 = vmatprep.subr.mxu0 0.0
        %3626 = vmatpush1.xpose.msra.mxu0 0.0
        %3627 = vmatprep.subr.mxu0 0.0
        %3628 = vmatpush1.xpose.msra.mxu0 0.0
        %3629 = vmatprep.subr.mxu0 0.0
        %3630 = vmatpush1.xpose.msra.mxu0 0.0
        %3631 = vmatprep.subr.mxu0 0.0
        %3632 = vmatpush1.xpose.msra.mxu0 %v3601
        %3633 = vmatprep.subr.mxu0 0.0
        %3634 = vmatpush1.xpose.msra.mxu0 %v3598
        %3635 = vmatprep.subr.mxu0 0.0
        %3636 = vmatpush2.xpose.msra.mxu0 0.0
        %3637 = vmatprep.subr.mxu0 0.0
        %3638 = vmatpush2.xpose.msra.mxu0 0.0
        %3639 = vmatprep.subr.mxu0 0.0
        %3640 = vmatpush2.xpose.msra.mxu0 0.0
        %3641 = vmatprep.subr.mxu0 0.0
        %3642 = vmatpush2.xpose.msra.mxu0 0.0
        %3643 = vmatprep.subr.mxu0 0.0
        %3644 = vmatpush2.xpose.msra.mxu0 0.0
        %3645 = vmatprep.subr.mxu0 0.0
        %3646 = vmatpush2.xpose.msra.mxu0 0.0
        %3647 = vmatprep.subr.mxu0 0.0
        %3648 = vmatpush2.xpose.msra.mxu0 0.0
        %3649 = vmatprep.subr.mxu0 0.0
        %3650 = vmatpush2.xpose.msra.mxu0 0.0
        %3651 = vmatprep.subr.mxu0 0.0
        %3652 = vmatpush2.xpose.msra.mxu0 0.0
        %3653 = vmatprep.subr.mxu0 0.0
        %3654 = vmatpush2.xpose.msra.mxu0 0.0
        %3655 = vmatprep.subr.mxu0 0.0
        %3656 = vmatpush2.xpose.msra.mxu0 0.0
        %3657 = vmatprep.subr.mxu0 0.0
        %3658 = vmatpush2.xpose.msra.mxu0 0.0
        %3659 = vmatprep.subr.mxu0 0.0
        %3660 = vmatpush2.xpose.msra.mxu0 0.0
        %3661 = vmatprep.subr.mxu0 0.0
        %3662 = vmatpush2.xpose.msra.mxu0 0.0
        %3663 = vmatprep.subr.mxu0 0.0
        %3664 = vmatpush2.xpose.msra.mxu0 0.0
        %3665 = vmatprep.subr.mxu0 0.0
        %3666 = vmatpush2.xpose.msra.mxu0 0.0
        %3667 = vmatprep.mubr.f32.mxu0 0.0
        %3668 = vmatmul.mubr.f32.gmra.mxu0 %v3595
        %v3669 = vpop.f32.mrf.mxu0
        %v3670 = vadd.f32 0.0, %v3669
        %v3671 = vpop.f32.mrf.mxu0
        %3672 = vdwg.mxu0
        %v3673 = vmul.f32 %v3591, 0.35355338
        %v3674 = vmul.f32 %v3670, 0.35355338
        %v3677 = vlaneseq
        %v3678 = vshrl.u32 %v3677, 7
        %v3679 = vsub.s32 0, %v3678
        %v3680 = vrot.slane %v3200, %v3679
        %v3681 = vlaneseq
        %v3682 = vshrl.u32 %v3681, 7
        %v3683 = vsub.s32 0, %v3682
        %v3684 = vrot.slane %v3201, %v3683
        %v3687 = vadd.f32 %v3673, %v3680
        %v3688 = vadd.f32 %v3674, %v3684
        %v3689 = vsel %vm3046, %v3687, -inf
        %3690 = vmax.xlane.f32.xlu0 %v3689
        %v3691 = vpop.xlane.xlu0 %3690
        %v3692 = vsel %vm3046, %v3688, -inf
        %3693 = vmax.xlane.f32.xlu0 %v3692
        %v3694 = vpop.xlane.xlu0 %3693
        %v3695 = vsub.f32 %v3687, %v3691
        %v3696 = vsub.f32 %v3688, %v3694
        %v3697 = vmul.f32 %v3695, 1.442695
        %v3698 = vpow.pop %v3697
        %v3699 = vmul.f32 %v3696, 1.442695
        %v3700 = vpow.pop %v3699
        %v3701 = vsel %vm3046, %v3698, 0.0
        %3702 = vadd.xlane.f32.xlu0 %v3701
        %v3703 = vpop.xlane.xlu0 %3702
        %v3704 = vsel %vm3046, %v3700, 0.0
        %3705 = vadd.xlane.f32.xlu0 %v3704
        %v3706 = vpop.xlane.xlu0 %3705
        %v3707 = vrcp.pop %v3703
        %v3708 = vrcp.pop %v3706
        %v3709 = vmul.f32 %v3698, %v3707
        %v3710 = vmul.f32 %v3700, %v3708
        %v3712 = vsel %vm3046, %v3709, 0
        %3714 = vmatprep.subr.mxu0 0.0
        %3715 = vmatpush1.msra.mxu0 0.0
        %3716 = vmatprep.subr.mxu0 0.0
        %3717 = vmatpush1.msra.mxu0 0.0
        %3718 = vmatprep.subr.mxu0 0.0
        %3719 = vmatpush1.msra.mxu0 0.0
        %3720 = vmatprep.subr.mxu0 0.0
        %3721 = vmatpush1.msra.mxu0 0.0
        %3722 = vmatprep.subr.mxu0 0.0
        %3723 = vmatpush1.msra.mxu0 0.0
        %3724 = vmatprep.subr.mxu0 0.0
        %3725 = vmatpush1.msra.mxu0 0.0
        %3726 = vmatprep.subr.mxu0 0.0
        %3727 = vmatpush1.msra.mxu0 0.0
        %3728 = vmatprep.subr.mxu0 0.0
        %3729 = vmatpush1.msra.mxu0 0.0
        %3730 = vmatprep.subr.mxu0 0.0
        %3731 = vmatpush1.msra.mxu0 0.0
        %3732 = vmatprep.subr.mxu0 0.0
        %3733 = vmatpush1.msra.mxu0 0.0
        %3734 = vmatprep.subr.mxu0 0.0
        %3735 = vmatpush1.msra.mxu0 0.0
        %3736 = vmatprep.subr.mxu0 0.0
        %3737 = vmatpush1.msra.mxu0 0.0
        %3738 = vmatprep.subr.mxu0 0.0
        %3739 = vmatpush1.msra.mxu0 0.0
        %3740 = vmatprep.subr.mxu0 0.0
        %3741 = vmatpush1.msra.mxu0 0.0
        %3742 = vmatprep.subr.mxu0 0.0
        %3743 = vmatpush1.msra.mxu0 %v3502
        %3744 = vmatprep.subr.mxu0 0.0
        %3745 = vmatpush1.msra.mxu0 %v3497
        %3746 = vmatprep.subr.mxu0 0.0
        %3747 = vmatpush2.msra.mxu0 0.0
        %3748 = vmatprep.subr.mxu0 0.0
        %3749 = vmatpush2.msra.mxu0 0.0
        %3750 = vmatprep.subr.mxu0 0.0
        %3751 = vmatpush2.msra.mxu0 0.0
        %3752 = vmatprep.subr.mxu0 0.0
        %3753 = vmatpush2.msra.mxu0 0.0
        %3754 = vmatprep.subr.mxu0 0.0
        %3755 = vmatpush2.msra.mxu0 0.0
        %3756 = vmatprep.subr.mxu0 0.0
        %3757 = vmatpush2.msra.mxu0 0.0
        %3758 = vmatprep.subr.mxu0 0.0
        %3759 = vmatpush2.msra.mxu0 0.0
        %3760 = vmatprep.subr.mxu0 0.0
        %3761 = vmatpush2.msra.mxu0 0.0
        %3762 = vmatprep.subr.mxu0 0.0
        %3763 = vmatpush2.msra.mxu0 0.0
        %3764 = vmatprep.subr.mxu0 0.0
        %3765 = vmatpush2.msra.mxu0 0.0
        %3766 = vmatprep.subr.mxu0 0.0
        %3767 = vmatpush2.msra.mxu0 0.0
        %3768 = vmatprep.subr.mxu0 0.0
        %3769 = vmatpush2.msra.mxu0 0.0
        %3770 = vmatprep.subr.mxu0 0.0
        %3771 = vmatpush2.msra.mxu0 0.0
        %3772 = vmatprep.subr.mxu0 0.0
        %3773 = vmatpush2.msra.mxu0 0.0
        %3774 = vmatprep.subr.mxu0 0.0
        %3775 = vmatpush2.msra.mxu0 0.0
        %3776 = vmatprep.subr.mxu0 0.0
        %3777 = vmatpush2.msra.mxu0 0.0
        %3778 = vmatprep.mubr.f32.mxu0 0.0
        %3779 = vmatmul.mubr.f32.gmra.mxu0 %v3712
        %v3780 = vpop.f32.mrf.mxu0
        %v3781 = vadd.f32 0.0, %v3780
        %v3782 = vpop.f32.mrf.mxu0
        %3783 = vdwg.mxu0
        %v3785 = vsel %vm3046, %v3710, 0
        %3787 = vmatprep.subr.mxu0 0.0
        %3788 = vmatpush1.msra.mxu0 0.0
        %3789 = vmatprep.subr.mxu0 0.0
        %3790 = vmatpush1.msra.mxu0 0.0
        %3791 = vmatprep.subr.mxu0 0.0
        %3792 = vmatpush1.msra.mxu0 0.0
        %3793 = vmatprep.subr.mxu0 0.0
        %3794 = vmatpush1.msra.mxu0 0.0
        %3795 = vmatprep.subr.mxu0 0.0
        %3796 = vmatpush1.msra.mxu0 0.0
        %3797 = vmatprep.subr.mxu0 0.0
        %3798 = vmatpush1.msra.mxu0 0.0
        %3799 = vmatprep.subr.mxu0 0.0
        %3800 = vmatpush1.msra.mxu0 0.0
        %3801 = vmatprep.subr.mxu0 0.0
        %3802 = vmatpush1.msra.mxu0 0.0
        %3803 = vmatprep.subr.mxu0 0.0
        %3804 = vmatpush1.msra.mxu0 0.0
        %3805 = vmatprep.subr.mxu0 0.0
        %3806 = vmatpush1.msra.mxu0 0.0
        %3807 = vmatprep.subr.mxu0 0.0
        %3808 = vmatpush1.msra.mxu0 0.0
        %3809 = vmatprep.subr.mxu0 0.0
        %3810 = vmatpush1.msra.mxu0 0.0
        %3811 = vmatprep.subr.mxu0 0.0
        %3812 = vmatpush1.msra.mxu0 0.0
        %3813 = vmatprep.subr.mxu0 0.0
        %3814 = vmatpush1.msra.mxu0 0.0
        %3815 = vmatprep.subr.mxu0 0.0
        %3816 = vmatpush1.msra.mxu0 %v3512
        %3817 = vmatprep.subr.mxu0 0.0
        %3818 = vmatpush1.msra.mxu0 %v3507
        %3819 = vmatprep.subr.mxu0 0.0
        %3820 = vmatpush2.msra.mxu0 0.0
        %3821 = vmatprep.subr.mxu0 0.0
        %3822 = vmatpush2.msra.mxu0 0.0
        %3823 = vmatprep.subr.mxu0 0.0
        %3824 = vmatpush2.msra.mxu0 0.0
        %3825 = vmatprep.subr.mxu0 0.0
        %3826 = vmatpush2.msra.mxu0 0.0
        %3827 = vmatprep.subr.mxu0 0.0
        %3828 = vmatpush2.msra.mxu0 0.0
        %3829 = vmatprep.subr.mxu0 0.0
        %3830 = vmatpush2.msra.mxu0 0.0
        %3831 = vmatprep.subr.mxu0 0.0
        %3832 = vmatpush2.msra.mxu0 0.0
        %3833 = vmatprep.subr.mxu0 0.0
        %3834 = vmatpush2.msra.mxu0 0.0
        %3835 = vmatprep.subr.mxu0 0.0
        %3836 = vmatpush2.msra.mxu0 0.0
        %3837 = vmatprep.subr.mxu0 0.0
        %3838 = vmatpush2.msra.mxu0 0.0
        %3839 = vmatprep.subr.mxu0 0.0
        %3840 = vmatpush2.msra.mxu0 0.0
        %3841 = vmatprep.subr.mxu0 0.0
        %3842 = vmatpush2.msra.mxu0 0.0
        %3843 = vmatprep.subr.mxu0 0.0
        %3844 = vmatpush2.msra.mxu0 0.0
        %3845 = vmatprep.subr.mxu0 0.0
        %3846 = vmatpush2.msra.mxu0 0.0
        %3847 = vmatprep.subr.mxu0 0.0
        %3848 = vmatpush2.msra.mxu0 0.0
        %3849 = vmatprep.subr.mxu0 0.0
        %3850 = vmatpush2.msra.mxu0 0.0
        %3851 = vmatprep.mubr.f32.mxu0 0.0
        %3852 = vmatmul.mubr.f32.gmra.mxu0 %v3785
        %v3853 = vpop.f32.mrf.mxu0
        %v3854 = vadd.f32 0.0, %v3853
        %v3855 = vpop.f32.mrf.mxu0
        %3856 = vdwg.mxu0
        %3857 = vrot.lane.b32.xlu0 %v3301, 120
        %v3858 = vpop.permute.xlu0 %3857
        %3859 = vrot.lane.b32.xlu0 %v3394, 120
        %v3860 = vpop.permute.xlu0 %3859
        %3861 = vrot.lane.b32.xlu0 %v3399, 120
        %v3862 = vpop.permute.xlu0 %3861
        %v3863 = vsel %vm1679, %v3858, 0
        %v3865 = vsel %vm1679, %v3860, 0
        %v3867 = vsel %vm1679, %v3862, 0
        %3869 = vmatprep.subr.mxu0 0.0
        %3870 = vmatpush1.xpose.msra.mxu0 0.0
        %3871 = vmatprep.subr.mxu0 0.0
        %3872 = vmatpush1.xpose.msra.mxu0 0.0
        %3873 = vmatprep.subr.mxu0 0.0
        %3874 = vmatpush1.xpose.msra.mxu0 0.0
        %3875 = vmatprep.subr.mxu0 0.0
        %3876 = vmatpush1.xpose.msra.mxu0 0.0
        %3877 = vmatprep.subr.mxu0 0.0
        %3878 = vmatpush1.xpose.msra.mxu0 0.0
        %3879 = vmatprep.subr.mxu0 0.0
        %3880 = vmatpush1.xpose.msra.mxu0 0.0
        %3881 = vmatprep.subr.mxu0 0.0
        %3882 = vmatpush1.xpose.msra.mxu0 0.0
        %3883 = vmatprep.subr.mxu0 0.0
        %3884 = vmatpush1.xpose.msra.mxu0 0.0
        %3885 = vmatprep.subr.mxu0 0.0
        %3886 = vmatpush1.xpose.msra.mxu0 0.0
        %3887 = vmatprep.subr.mxu0 0.0
        %3888 = vmatpush1.xpose.msra.mxu0 0.0
        %3889 = vmatprep.subr.mxu0 0.0
        %3890 = vmatpush1.xpose.msra.mxu0 0.0
        %3891 = vmatprep.subr.mxu0 0.0
        %3892 = vmatpush1.xpose.msra.mxu0 0.0
        %3893 = vmatprep.subr.mxu0 0.0
        %3894 = vmatpush1.xpose.msra.mxu0 0.0
        %3895 = vmatprep.subr.mxu0 0.0
        %3896 = vmatpush1.xpose.msra.mxu0 0.0
        %3897 = vmatprep.subr.mxu0 0.0
        %3898 = vmatpush1.xpose.msra.mxu0 %v3867
        %3899 = vmatprep.subr.mxu0 0.0
        %3900 = vmatpush1.xpose.msra.mxu0 %v3865
        %3901 = vmatprep.subr.mxu0 0.0
        %3902 = vmatpush2.xpose.msra.mxu0 0.0
        %3903 = vmatprep.subr.mxu0 0.0
        %3904 = vmatpush2.xpose.msra.mxu0 0.0
        %3905 = vmatprep.subr.mxu0 0.0
        %3906 = vmatpush2.xpose.msra.mxu0 0.0
        %3907 = vmatprep.subr.mxu0 0.0
        %3908 = vmatpush2.xpose.msra.mxu0 0.0
        %3909 = vmatprep.subr.mxu0 0.0
        %3910 = vmatpush2.xpose.msra.mxu0 0.0
        %3911 = vmatprep.subr.mxu0 0.0
        %3912 = vmatpush2.xpose.msra.mxu0 0.0
        %3913 = vmatprep.subr.mxu0 0.0
        %3914 = vmatpush2.xpose.msra.mxu0 0.0
        %3915 = vmatprep.subr.mxu0 0.0
        %3916 = vmatpush2.xpose.msra.mxu0 0.0
        %3917 = vmatprep.subr.mxu0 0.0
        %3918 = vmatpush2.xpose.msra.mxu0 0.0
        %3919 = vmatprep.subr.mxu0 0.0
        %3920 = vmatpush2.xpose.msra.mxu0 0.0
        %3921 = vmatprep.subr.mxu0 0.0
        %3922 = vmatpush2.xpose.msra.mxu0 0.0
        %3923 = vmatprep.subr.mxu0 0.0
        %3924 = vmatpush2.xpose.msra.mxu0 0.0
        %3925 = vmatprep.subr.mxu0 0.0
        %3926 = vmatpush2.xpose.msra.mxu0 0.0
        %3927 = vmatprep.subr.mxu0 0.0
        %3928 = vmatpush2.xpose.msra.mxu0 0.0
        %3929 = vmatprep.subr.mxu0 0.0
        %3930 = vmatpush2.xpose.msra.mxu0 0.0
        %3931 = vmatprep.subr.mxu0 0.0
        %3932 = vmatpush2.xpose.msra.mxu0 0.0
        %3933 = vmatprep.mubr.f32.mxu0 0.0
        %3934 = vmatmul.mubr.f32.gmra.mxu0 %v3863
        %v3935 = vpop.f32.mrf.mxu0
        %v3936 = vadd.f32 0.0, %v3935
        %v3937 = vpop.f32.mrf.mxu0
        %3938 = vdwg.mxu0
        %3939 = vrot.lane.b32.xlu0 %v3306, 120
        %v3940 = vpop.permute.xlu0 %3939
        %3941 = vrot.lane.b32.xlu0 %v3404, 120
        %v3942 = vpop.permute.xlu0 %3941
        %3943 = vrot.lane.b32.xlu0 %v3409, 120
        %v3944 = vpop.permute.xlu0 %3943
        %v3945 = vsel %vm1679, %v3940, 0
        %v3947 = vsel %vm1679, %v3942, 0
        %v3949 = vsel %vm1679, %v3944, 0
        %3951 = vmatprep.subr.mxu0 0.0
        %3952 = vmatpush1.xpose.msra.mxu0 0.0
        %3953 = vmatprep.subr.mxu0 0.0
        %3954 = vmatpush1.xpose.msra.mxu0 0.0
        %3955 = vmatprep.subr.mxu0 0.0
        %3956 = vmatpush1.xpose.msra.mxu0 0.0
        %3957 = vmatprep.subr.mxu0 0.0
        %3958 = vmatpush1.xpose.msra.mxu0 0.0
        %3959 = vmatprep.subr.mxu0 0.0
        %3960 = vmatpush1.xpose.msra.mxu0 0.0
        %3961 = vmatprep.subr.mxu0 0.0
        %3962 = vmatpush1.xpose.msra.mxu0 0.0
        %3963 = vmatprep.subr.mxu0 0.0
        %3964 = vmatpush1.xpose.msra.mxu0 0.0
        %3965 = vmatprep.subr.mxu0 0.0
        %3966 = vmatpush1.xpose.msra.mxu0 0.0
        %3967 = vmatprep.subr.mxu0 0.0
        %3968 = vmatpush1.xpose.msra.mxu0 0.0
        %3969 = vmatprep.subr.mxu0 0.0
        %3970 = vmatpush1.xpose.msra.mxu0 0.0
        %3971 = vmatprep.subr.mxu0 0.0
        %3972 = vmatpush1.xpose.msra.mxu0 0.0
        %3973 = vmatprep.subr.mxu0 0.0
        %3974 = vmatpush1.xpose.msra.mxu0 0.0
        %3975 = vmatprep.subr.mxu0 0.0
        %3976 = vmatpush1.xpose.msra.mxu0 0.0
        %3977 = vmatprep.subr.mxu0 0.0
        %3978 = vmatpush1.xpose.msra.mxu0 0.0
        %3979 = vmatprep.subr.mxu0 0.0
        %3980 = vmatpush1.xpose.msra.mxu0 %v3949
        %3981 = vmatprep.subr.mxu0 0.0
        %3982 = vmatpush1.xpose.msra.mxu0 %v3947
        %3983 = vmatprep.subr.mxu0 0.0
        %3984 = vmatpush2.xpose.msra.mxu0 0.0
        %3985 = vmatprep.subr.mxu0 0.0
        %3986 = vmatpush2.xpose.msra.mxu0 0.0
        %3987 = vmatprep.subr.mxu0 0.0
        %3988 = vmatpush2.xpose.msra.mxu0 0.0
        %3989 = vmatprep.subr.mxu0 0.0
        %3990 = vmatpush2.xpose.msra.mxu0 0.0
        %3991 = vmatprep.subr.mxu0 0.0
        %3992 = vmatpush2.xpose.msra.mxu0 0.0
        %3993 = vmatprep.subr.mxu0 0.0
        %3994 = vmatpush2.xpose.msra.mxu0 0.0
        %3995 = vmatprep.subr.mxu0 0.0
        %3996 = vmatpush2.xpose.msra.mxu0 0.0
        %3997 = vmatprep.subr.mxu0 0.0
        %3998 = vmatpush2.xpose.msra.mxu0 0.0
        %3999 = vmatprep.subr.mxu0 0.0
        %4000 = vmatpush2.xpose.msra.mxu0 0.0
        %4001 = vmatprep.subr.mxu0 0.0
        %4002 = vmatpush2.xpose.msra.mxu0 0.0
        %4003 = vmatprep.subr.mxu0 0.0
        %4004 = vmatpush2.xpose.msra.mxu0 0.0
        %4005 = vmatprep.subr.mxu0 0.0
        %4006 = vmatpush2.xpose.msra.mxu0 0.0
        %4007 = vmatprep.subr.mxu0 0.0
        %4008 = vmatpush2.xpose.msra.mxu0 0.0
        %4009 = vmatprep.subr.mxu0 0.0
        %4010 = vmatpush2.xpose.msra.mxu0 0.0
        %4011 = vmatprep.subr.mxu0 0.0
        %4012 = vmatpush2.xpose.msra.mxu0 0.0
        %4013 = vmatprep.subr.mxu0 0.0
        %4014 = vmatpush2.xpose.msra.mxu0 0.0
        %4015 = vmatprep.mubr.f32.mxu0 0.0
        %4016 = vmatmul.mubr.f32.gmra.mxu0 %v3945
        %v4017 = vpop.f32.mrf.mxu0
        %v4018 = vadd.f32 0.0, %v4017
        %v4019 = vpop.f32.mrf.mxu0
        %4020 = vdwg.mxu0
        %v4021 = vmul.f32 %v3936, 0.35355338
        %v4022 = vmul.f32 %v4018, 0.35355338
        %v4023 = vadd.f32 %v4021, %v3680
        %v4024 = vadd.f32 %v4022, %v3684
        %v4025 = vsel %vm3046, %v4023, -inf
        %4026 = vmax.xlane.f32.xlu0 %v4025
        %v4027 = vpop.xlane.xlu0 %4026
        %v4028 = vsel %vm3046, %v4024, -inf
        %4029 = vmax.xlane.f32.xlu0 %v4028
        %v4030 = vpop.xlane.xlu0 %4029
        %v4031 = vsub.f32 %v4023, %v4027
        %v4032 = vsub.f32 %v4024, %v4030
        %v4033 = vmul.f32 %v4031, 1.442695
        %v4034 = vpow.pop %v4033
        %v4035 = vmul.f32 %v4032, 1.442695
        %v4036 = vpow.pop %v4035
        %v4037 = vsel %vm3046, %v4034, 0.0
        %4038 = vadd.xlane.f32.xlu0 %v4037
        %v4039 = vpop.xlane.xlu0 %4038
        %v4040 = vsel %vm3046, %v4036, 0.0
        %4041 = vadd.xlane.f32.xlu0 %v4040
        %v4042 = vpop.xlane.xlu0 %4041
        %v4043 = vrcp.pop %v4039
        %v4044 = vrcp.pop %v4042
        %v4045 = vmul.f32 %v4034, %v4043
        %v4046 = vmul.f32 %v4036, %v4044
        %4049 = vrot.lane.b32.xlu0 %v3497, 120
        %v4050 = vpop.permute.xlu0 %4049
        %4051 = vrot.lane.b32.xlu0 %v3502, 120
        %v4052 = vpop.permute.xlu0 %4051
        %v4056 = vsel %vm3046, %v4045, 0
        %4058 = vmatprep.subr.mxu0 0.0
        %4059 = vmatpush1.msra.mxu0 0.0
        %4060 = vmatprep.subr.mxu0 0.0
        %4061 = vmatpush1.msra.mxu0 0.0
        %4062 = vmatprep.subr.mxu0 0.0
        %4063 = vmatpush1.msra.mxu0 0.0
        %4064 = vmatprep.subr.mxu0 0.0
        %4065 = vmatpush1.msra.mxu0 0.0
        %4066 = vmatprep.subr.mxu0 0.0
        %4067 = vmatpush1.msra.mxu0 0.0
        %4068 = vmatprep.subr.mxu0 0.0
        %4069 = vmatpush1.msra.mxu0 0.0
        %4070 = vmatprep.subr.mxu0 0.0
        %4071 = vmatpush1.msra.mxu0 0.0
        %4072 = vmatprep.subr.mxu0 0.0
        %4073 = vmatpush1.msra.mxu0 0.0
        %4074 = vmatprep.subr.mxu0 0.0
        %4075 = vmatpush1.msra.mxu0 0.0
        %4076 = vmatprep.subr.mxu0 0.0
        %4077 = vmatpush1.msra.mxu0 0.0
        %4078 = vmatprep.subr.mxu0 0.0
        %4079 = vmatpush1.msra.mxu0 0.0
        %4080 = vmatprep.subr.mxu0 0.0
        %4081 = vmatpush1.msra.mxu0 0.0
        %4082 = vmatprep.subr.mxu0 0.0
        %4083 = vmatpush1.msra.mxu0 0.0
        %4084 = vmatprep.subr.mxu0 0.0
        %4085 = vmatpush1.msra.mxu0 0.0
        %4086 = vmatprep.subr.mxu0 0.0
        %4087 = vmatpush1.msra.mxu0 %v4052
        %4088 = vmatprep.subr.mxu0 0.0
        %4089 = vmatpush1.msra.mxu0 %v4050
        %4090 = vmatprep.subr.mxu0 0.0
        %4091 = vmatpush2.msra.mxu0 0.0
        %4092 = vmatprep.subr.mxu0 0.0
        %4093 = vmatpush2.msra.mxu0 0.0
        %4094 = vmatprep.subr.mxu0 0.0
        %4095 = vmatpush2.msra.mxu0 0.0
        %4096 = vmatprep.subr.mxu0 0.0
        %4097 = vmatpush2.msra.mxu0 0.0
        %4098 = vmatprep.subr.mxu0 0.0
        %4099 = vmatpush2.msra.mxu0 0.0
        %4100 = vmatprep.subr.mxu0 0.0
        %4101 = vmatpush2.msra.mxu0 0.0
        %4102 = vmatprep.subr.mxu0 0.0
        %4103 = vmatpush2.msra.mxu0 0.0
        %4104 = vmatprep.subr.mxu0 0.0
        %4105 = vmatpush2.msra.mxu0 0.0
        %4106 = vmatprep.subr.mxu0 0.0
        %4107 = vmatpush2.msra.mxu0 0.0
        %4108 = vmatprep.subr.mxu0 0.0
        %4109 = vmatpush2.msra.mxu0 0.0
        %4110 = vmatprep.subr.mxu0 0.0
        %4111 = vmatpush2.msra.mxu0 0.0
        %4112 = vmatprep.subr.mxu0 0.0
        %4113 = vmatpush2.msra.mxu0 0.0
        %4114 = vmatprep.subr.mxu0 0.0
        %4115 = vmatpush2.msra.mxu0 0.0
        %4116 = vmatprep.subr.mxu0 0.0
        %4117 = vmatpush2.msra.mxu0 0.0
        %4118 = vmatprep.subr.mxu0 0.0
        %4119 = vmatpush2.msra.mxu0 0.0
        %4120 = vmatprep.subr.mxu0 0.0
        %4121 = vmatpush2.msra.mxu0 0.0
        %4122 = vmatprep.mubr.f32.mxu0 0.0
        %4123 = vmatmul.mubr.f32.gmra.mxu0 %v4056
        %v4124 = vpop.f32.mrf.mxu0
        %v4125 = vadd.f32 0.0, %v4124
        %v4126 = vpop.f32.mrf.mxu0
        %4127 = vdwg.mxu0
        %4130 = vrot.lane.b32.xlu0 %v3507, 120
        %v4131 = vpop.permute.xlu0 %4130
        %4132 = vrot.lane.b32.xlu0 %v3512, 120
        %v4133 = vpop.permute.xlu0 %4132
        %v4137 = vsel %vm3046, %v4046, 0
        %4139 = vmatprep.subr.mxu0 0.0
        %4140 = vmatpush1.msra.mxu0 0.0
        %4141 = vmatprep.subr.mxu0 0.0
        %4142 = vmatpush1.msra.mxu0 0.0
        %4143 = vmatprep.subr.mxu0 0.0
        %4144 = vmatpush1.msra.mxu0 0.0
        %4145 = vmatprep.subr.mxu0 0.0
        %4146 = vmatpush1.msra.mxu0 0.0
        %4147 = vmatprep.subr.mxu0 0.0
        %4148 = vmatpush1.msra.mxu0 0.0
        %4149 = vmatprep.subr.mxu0 0.0
        %4150 = vmatpush1.msra.mxu0 0.0
        %4151 = vmatprep.subr.mxu0 0.0
        %4152 = vmatpush1.msra.mxu0 0.0
        %4153 = vmatprep.subr.mxu0 0.0
        %4154 = vmatpush1.msra.mxu0 0.0
        %4155 = vmatprep.subr.mxu0 0.0
        %4156 = vmatpush1.msra.mxu0 0.0
        %4157 = vmatprep.subr.mxu0 0.0
        %4158 = vmatpush1.msra.mxu0 0.0
        %4159 = vmatprep.subr.mxu0 0.0
        %4160 = vmatpush1.msra.mxu0 0.0
        %4161 = vmatprep.subr.mxu0 0.0
        %4162 = vmatpush1.msra.mxu0 0.0
        %4163 = vmatprep.subr.mxu0 0.0
        %4164 = vmatpush1.msra.mxu0 0.0
        %4165 = vmatprep.subr.mxu0 0.0
        %4166 = vmatpush1.msra.mxu0 0.0
        %4167 = vmatprep.subr.mxu0 0.0
        %4168 = vmatpush1.msra.mxu0 %v4133
        %4169 = vmatprep.subr.mxu0 0.0
        %4170 = vmatpush1.msra.mxu0 %v4131
        %4171 = vmatprep.subr.mxu0 0.0
        %4172 = vmatpush2.msra.mxu0 0.0
        %4173 = vmatprep.subr.mxu0 0.0
        %4174 = vmatpush2.msra.mxu0 0.0
        %4175 = vmatprep.subr.mxu0 0.0
        %4176 = vmatpush2.msra.mxu0 0.0
        %4177 = vmatprep.subr.mxu0 0.0
        %4178 = vmatpush2.msra.mxu0 0.0
        %4179 = vmatprep.subr.mxu0 0.0
        %4180 = vmatpush2.msra.mxu0 0.0
        %4181 = vmatprep.subr.mxu0 0.0
        %4182 = vmatpush2.msra.mxu0 0.0
        %4183 = vmatprep.subr.mxu0 0.0
        %4184 = vmatpush2.msra.mxu0 0.0
        %4185 = vmatprep.subr.mxu0 0.0
        %4186 = vmatpush2.msra.mxu0 0.0
        %4187 = vmatprep.subr.mxu0 0.0
        %4188 = vmatpush2.msra.mxu0 0.0
        %4189 = vmatprep.subr.mxu0 0.0
        %4190 = vmatpush2.msra.mxu0 0.0
        %4191 = vmatprep.subr.mxu0 0.0
        %4192 = vmatpush2.msra.mxu0 0.0
        %4193 = vmatprep.subr.mxu0 0.0
        %4194 = vmatpush2.msra.mxu0 0.0
        %4195 = vmatprep.subr.mxu0 0.0
        %4196 = vmatpush2.msra.mxu0 0.0
        %4197 = vmatprep.subr.mxu0 0.0
        %4198 = vmatpush2.msra.mxu0 0.0
        %4199 = vmatprep.subr.mxu0 0.0
        %4200 = vmatpush2.msra.mxu0 0.0
        %4201 = vmatprep.subr.mxu0 0.0
        %4202 = vmatpush2.msra.mxu0 0.0
        %4203 = vmatprep.mubr.f32.mxu0 0.0
        %4204 = vmatmul.mubr.f32.gmra.mxu0 %v4137
        %v4205 = vpop.f32.mrf.mxu0
        %v4206 = vadd.f32 0.0, %v4205
        %v4207 = vpop.f32.mrf.mxu0
        %4208 = vdwg.mxu0
        %4209 = vrot.lane.b32.xlu0 %v3301, 112
        %v4210 = vpop.permute.xlu0 %4209
        %4211 = vrot.lane.b32.xlu0 %v3394, 112
        %v4212 = vpop.permute.xlu0 %4211
        %4213 = vrot.lane.b32.xlu0 %v3399, 112
        %v4214 = vpop.permute.xlu0 %4213
        %v4215 = vsel %vm1679, %v4210, 0
        %v4217 = vsel %vm1679, %v4212, 0
        %v4219 = vsel %vm1679, %v4214, 0
        %4221 = vmatprep.subr.mxu0 0.0
        %4222 = vmatpush1.xpose.msra.mxu0 0.0
        %4223 = vmatprep.subr.mxu0 0.0
        %4224 = vmatpush1.xpose.msra.mxu0 0.0
        %4225 = vmatprep.subr.mxu0 0.0
        %4226 = vmatpush1.xpose.msra.mxu0 0.0
        %4227 = vmatprep.subr.mxu0 0.0
        %4228 = vmatpush1.xpose.msra.mxu0 0.0
        %4229 = vmatprep.subr.mxu0 0.0
        %4230 = vmatpush1.xpose.msra.mxu0 0.0
        %4231 = vmatprep.subr.mxu0 0.0
        %4232 = vmatpush1.xpose.msra.mxu0 0.0
        %4233 = vmatprep.subr.mxu0 0.0
        %4234 = vmatpush1.xpose.msra.mxu0 0.0
        %4235 = vmatprep.subr.mxu0 0.0
        %4236 = vmatpush1.xpose.msra.mxu0 0.0
        %4237 = vmatprep.subr.mxu0 0.0
        %4238 = vmatpush1.xpose.msra.mxu0 0.0
        %4239 = vmatprep.subr.mxu0 0.0
        %4240 = vmatpush1.xpose.msra.mxu0 0.0
        %4241 = vmatprep.subr.mxu0 0.0
        %4242 = vmatpush1.xpose.msra.mxu0 0.0
        %4243 = vmatprep.subr.mxu0 0.0
        %4244 = vmatpush1.xpose.msra.mxu0 0.0
        %4245 = vmatprep.subr.mxu0 0.0
        %4246 = vmatpush1.xpose.msra.mxu0 0.0
        %4247 = vmatprep.subr.mxu0 0.0
        %4248 = vmatpush1.xpose.msra.mxu0 0.0
        %4249 = vmatprep.subr.mxu0 0.0
        %4250 = vmatpush1.xpose.msra.mxu0 %v4219
        %4251 = vmatprep.subr.mxu0 0.0
        %4252 = vmatpush1.xpose.msra.mxu0 %v4217
        %4253 = vmatprep.subr.mxu0 0.0
        %4254 = vmatpush2.xpose.msra.mxu0 0.0
        %4255 = vmatprep.subr.mxu0 0.0
        %4256 = vmatpush2.xpose.msra.mxu0 0.0
        %4257 = vmatprep.subr.mxu0 0.0
        %4258 = vmatpush2.xpose.msra.mxu0 0.0
        %4259 = vmatprep.subr.mxu0 0.0
        %4260 = vmatpush2.xpose.msra.mxu0 0.0
        %4261 = vmatprep.subr.mxu0 0.0
        %4262 = vmatpush2.xpose.msra.mxu0 0.0
        %4263 = vmatprep.subr.mxu0 0.0
        %4264 = vmatpush2.xpose.msra.mxu0 0.0
        %4265 = vmatprep.subr.mxu0 0.0
        %4266 = vmatpush2.xpose.msra.mxu0 0.0
        %4267 = vmatprep.subr.mxu0 0.0
        %4268 = vmatpush2.xpose.msra.mxu0 0.0
        %4269 = vmatprep.subr.mxu0 0.0
        %4270 = vmatpush2.xpose.msra.mxu0 0.0
        %4271 = vmatprep.subr.mxu0 0.0
        %4272 = vmatpush2.xpose.msra.mxu0 0.0
        %4273 = vmatprep.subr.mxu0 0.0
        %4274 = vmatpush2.xpose.msra.mxu0 0.0
        %4275 = vmatprep.subr.mxu0 0.0
        %4276 = vmatpush2.xpose.msra.mxu0 0.0
        %4277 = vmatprep.subr.mxu0 0.0
        %4278 = vmatpush2.xpose.msra.mxu0 0.0
        %4279 = vmatprep.subr.mxu0 0.0
        %4280 = vmatpush2.xpose.msra.mxu0 0.0
        %4281 = vmatprep.subr.mxu0 0.0
        %4282 = vmatpush2.xpose.msra.mxu0 0.0
        %4283 = vmatprep.subr.mxu0 0.0
        %4284 = vmatpush2.xpose.msra.mxu0 0.0
        %4285 = vmatprep.mubr.f32.mxu0 0.0
        %4286 = vmatmul.mubr.f32.gmra.mxu0 %v4215
        %v4287 = vpop.f32.mrf.mxu0
        %v4288 = vadd.f32 0.0, %v4287
        %v4289 = vpop.f32.mrf.mxu0
        %4290 = vdwg.mxu0
        %4291 = vrot.lane.b32.xlu0 %v3306, 112
        %v4292 = vpop.permute.xlu0 %4291
        %4293 = vrot.lane.b32.xlu0 %v3404, 112
        %v4294 = vpop.permute.xlu0 %4293
        %4295 = vrot.lane.b32.xlu0 %v3409, 112
        %v4296 = vpop.permute.xlu0 %4295
        %v4297 = vsel %vm1679, %v4292, 0
        %v4299 = vsel %vm1679, %v4294, 0
        %v4301 = vsel %vm1679, %v4296, 0
        %4303 = vmatprep.subr.mxu0 0.0
        %4304 = vmatpush1.xpose.msra.mxu0 0.0
        %4305 = vmatprep.subr.mxu0 0.0
        %4306 = vmatpush1.xpose.msra.mxu0 0.0
        %4307 = vmatprep.subr.mxu0 0.0
        %4308 = vmatpush1.xpose.msra.mxu0 0.0
        %4309 = vmatprep.subr.mxu0 0.0
        %4310 = vmatpush1.xpose.msra.mxu0 0.0
        %4311 = vmatprep.subr.mxu0 0.0
        %4312 = vmatpush1.xpose.msra.mxu0 0.0
        %4313 = vmatprep.subr.mxu0 0.0
        %4314 = vmatpush1.xpose.msra.mxu0 0.0
        %4315 = vmatprep.subr.mxu0 0.0
        %4316 = vmatpush1.xpose.msra.mxu0 0.0
        %4317 = vmatprep.subr.mxu0 0.0
        %4318 = vmatpush1.xpose.msra.mxu0 0.0
        %4319 = vmatprep.subr.mxu0 0.0
        %4320 = vmatpush1.xpose.msra.mxu0 0.0
        %4321 = vmatprep.subr.mxu0 0.0
        %4322 = vmatpush1.xpose.msra.mxu0 0.0
        %4323 = vmatprep.subr.mxu0 0.0
        %4324 = vmatpush1.xpose.msra.mxu0 0.0
        %4325 = vmatprep.subr.mxu0 0.0
        %4326 = vmatpush1.xpose.msra.mxu0 0.0
        %4327 = vmatprep.subr.mxu0 0.0
        %4328 = vmatpush1.xpose.msra.mxu0 0.0
        %4329 = vmatprep.subr.mxu0 0.0
        %4330 = vmatpush1.xpose.msra.mxu0 0.0
        %4331 = vmatprep.subr.mxu0 0.0
        %4332 = vmatpush1.xpose.msra.mxu0 %v4301
        %4333 = vmatprep.subr.mxu0 0.0
        %4334 = vmatpush1.xpose.msra.mxu0 %v4299
        %4335 = vmatprep.subr.mxu0 0.0
        %4336 = vmatpush2.xpose.msra.mxu0 0.0
        %4337 = vmatprep.subr.mxu0 0.0
        %4338 = vmatpush2.xpose.msra.mxu0 0.0
        %4339 = vmatprep.subr.mxu0 0.0
        %4340 = vmatpush2.xpose.msra.mxu0 0.0
        %4341 = vmatprep.subr.mxu0 0.0
        %4342 = vmatpush2.xpose.msra.mxu0 0.0
        %4343 = vmatprep.subr.mxu0 0.0
        %4344 = vmatpush2.xpose.msra.mxu0 0.0
        %4345 = vmatprep.subr.mxu0 0.0
        %4346 = vmatpush2.xpose.msra.mxu0 0.0
        %4347 = vmatprep.subr.mxu0 0.0
        %4348 = vmatpush2.xpose.msra.mxu0 0.0
        %4349 = vmatprep.subr.mxu0 0.0
        %4350 = vmatpush2.xpose.msra.mxu0 0.0
        %4351 = vmatprep.subr.mxu0 0.0
        %4352 = vmatpush2.xpose.msra.mxu0 0.0
        %4353 = vmatprep.subr.mxu0 0.0
        %4354 = vmatpush2.xpose.msra.mxu0 0.0
        %4355 = vmatprep.subr.mxu0 0.0
        %4356 = vmatpush2.xpose.msra.mxu0 0.0
        %4357 = vmatprep.subr.mxu0 0.0
        %4358 = vmatpush2.xpose.msra.mxu0 0.0
        %4359 = vmatprep.subr.mxu0 0.0
        %4360 = vmatpush2.xpose.msra.mxu0 0.0
        %4361 = vmatprep.subr.mxu0 0.0
        %4362 = vmatpush2.xpose.msra.mxu0 0.0
        %4363 = vmatprep.subr.mxu0 0.0
        %4364 = vmatpush2.xpose.msra.mxu0 0.0
        %4365 = vmatprep.subr.mxu0 0.0
        %4366 = vmatpush2.xpose.msra.mxu0 0.0
        %4367 = vmatprep.mubr.f32.mxu0 0.0
        %4368 = vmatmul.mubr.f32.gmra.mxu0 %v4297
        %v4369 = vpop.f32.mrf.mxu0
        %v4370 = vadd.f32 0.0, %v4369
        %v4371 = vpop.f32.mrf.mxu0
        %4372 = vdwg.mxu0
        %v4373 = vmul.f32 %v4288, 0.35355338
        %v4374 = vmul.f32 %v4370, 0.35355338
        %v4375 = vadd.f32 %v4373, %v3680
        %v4376 = vadd.f32 %v4374, %v3684
        %v4377 = vsel %vm3046, %v4375, -inf
        %4378 = vmax.xlane.f32.xlu0 %v4377
        %v4379 = vpop.xlane.xlu0 %4378
        %v4380 = vsel %vm3046, %v4376, -inf
        %4381 = vmax.xlane.f32.xlu0 %v4380
        %v4382 = vpop.xlane.xlu0 %4381
        %v4383 = vsub.f32 %v4375, %v4379
        %v4384 = vsub.f32 %v4376, %v4382
        %v4385 = vmul.f32 %v4383, 1.442695
        %v4386 = vpow.pop %v4385
        %v4387 = vmul.f32 %v4384, 1.442695
        %v4388 = vpow.pop %v4387
        %v4389 = vsel %vm3046, %v4386, 0.0
        %4390 = vadd.xlane.f32.xlu0 %v4389
        %v4391 = vpop.xlane.xlu0 %4390
        %v4392 = vsel %vm3046, %v4388, 0.0
        %4393 = vadd.xlane.f32.xlu0 %v4392
        %v4394 = vpop.xlane.xlu0 %4393
        %v4395 = vrcp.pop %v4391
        %v4396 = vrcp.pop %v4394
        %v4397 = vmul.f32 %v4386, %v4395
        %v4398 = vmul.f32 %v4388, %v4396
        %4399 = vrot.lane.b32.xlu0 %v3497, 112
        %v4400 = vpop.permute.xlu0 %4399
        %4401 = vrot.lane.b32.xlu0 %v3502, 112
        %v4402 = vpop.permute.xlu0 %4401
        %v4406 = vsel %vm3046, %v4397, 0
        %4408 = vmatprep.subr.mxu0 0.0
        %4409 = vmatpush1.msra.mxu0 0.0
        %4410 = vmatprep.subr.mxu0 0.0
        %4411 = vmatpush1.msra.mxu0 0.0
        %4412 = vmatprep.subr.mxu0 0.0
        %4413 = vmatpush1.msra.mxu0 0.0
        %4414 = vmatprep.subr.mxu0 0.0
        %4415 = vmatpush1.msra.mxu0 0.0
        %4416 = vmatprep.subr.mxu0 0.0
        %4417 = vmatpush1.msra.mxu0 0.0
        %4418 = vmatprep.subr.mxu0 0.0
        %4419 = vmatpush1.msra.mxu0 0.0
        %4420 = vmatprep.subr.mxu0 0.0
        %4421 = vmatpush1.msra.mxu0 0.0
        %4422 = vmatprep.subr.mxu0 0.0
        %4423 = vmatpush1.msra.mxu0 0.0
        %4424 = vmatprep.subr.mxu0 0.0
        %4425 = vmatpush1.msra.mxu0 0.0
        %4426 = vmatprep.subr.mxu0 0.0
        %4427 = vmatpush1.msra.mxu0 0.0
        %4428 = vmatprep.subr.mxu0 0.0
        %4429 = vmatpush1.msra.mxu0 0.0
        %4430 = vmatprep.subr.mxu0 0.0
        %4431 = vmatpush1.msra.mxu0 0.0
        %4432 = vmatprep.subr.mxu0 0.0
        %4433 = vmatpush1.msra.mxu0 0.0
        %4434 = vmatprep.subr.mxu0 0.0
        %4435 = vmatpush1.msra.mxu0 0.0
        %4436 = vmatprep.subr.mxu0 0.0
        %4437 = vmatpush1.msra.mxu0 %v4402
        %4438 = vmatprep.subr.mxu0 0.0
        %4439 = vmatpush1.msra.mxu0 %v4400
        %4440 = vmatprep.subr.mxu0 0.0
        %4441 = vmatpush2.msra.mxu0 0.0
        %4442 = vmatprep.subr.mxu0 0.0
        %4443 = vmatpush2.msra.mxu0 0.0
        %4444 = vmatprep.subr.mxu0 0.0
        %4445 = vmatpush2.msra.mxu0 0.0
        %4446 = vmatprep.subr.mxu0 0.0
        %4447 = vmatpush2.msra.mxu0 0.0
        %4448 = vmatprep.subr.mxu0 0.0
        %4449 = vmatpush2.msra.mxu0 0.0
        %4450 = vmatprep.subr.mxu0 0.0
        %4451 = vmatpush2.msra.mxu0 0.0
        %4452 = vmatprep.subr.mxu0 0.0
        %4453 = vmatpush2.msra.mxu0 0.0
        %4454 = vmatprep.subr.mxu0 0.0
        %4455 = vmatpush2.msra.mxu0 0.0
        %4456 = vmatprep.subr.mxu0 0.0
        %4457 = vmatpush2.msra.mxu0 0.0
        %4458 = vmatprep.subr.mxu0 0.0
        %4459 = vmatpush2.msra.mxu0 0.0
        %4460 = vmatprep.subr.mxu0 0.0
        %4461 = vmatpush2.msra.mxu0 0.0
        %4462 = vmatprep.subr.mxu0 0.0
        %4463 = vmatpush2.msra.mxu0 0.0
        %4464 = vmatprep.subr.mxu0 0.0
        %4465 = vmatpush2.msra.mxu0 0.0
        %4466 = vmatprep.subr.mxu0 0.0
        %4467 = vmatpush2.msra.mxu0 0.0
        %4468 = vmatprep.subr.mxu0 0.0
        %4469 = vmatpush2.msra.mxu0 0.0
        %4470 = vmatprep.subr.mxu0 0.0
        %4471 = vmatpush2.msra.mxu0 0.0
        %4472 = vmatprep.mubr.f32.mxu0 0.0
        %4473 = vmatmul.mubr.f32.gmra.mxu0 %v4406
        %v4474 = vpop.f32.mrf.mxu0
        %v4475 = vadd.f32 0.0, %v4474
        %v4476 = vpop.f32.mrf.mxu0
        %4477 = vdwg.mxu0
        %4478 = vrot.lane.b32.xlu0 %v3507, 112
        %v4479 = vpop.permute.xlu0 %4478
        %4480 = vrot.lane.b32.xlu0 %v3512, 112
        %v4481 = vpop.permute.xlu0 %4480
        %v4485 = vsel %vm3046, %v4398, 0
        %4487 = vmatprep.subr.mxu0 0.0
        %4488 = vmatpush1.msra.mxu0 0.0
        %4489 = vmatprep.subr.mxu0 0.0
        %4490 = vmatpush1.msra.mxu0 0.0
        %4491 = vmatprep.subr.mxu0 0.0
        %4492 = vmatpush1.msra.mxu0 0.0
        %4493 = vmatprep.subr.mxu0 0.0
        %4494 = vmatpush1.msra.mxu0 0.0
        %4495 = vmatprep.subr.mxu0 0.0
        %4496 = vmatpush1.msra.mxu0 0.0
        %4497 = vmatprep.subr.mxu0 0.0
        %4498 = vmatpush1.msra.mxu0 0.0
        %4499 = vmatprep.subr.mxu0 0.0
        %4500 = vmatpush1.msra.mxu0 0.0
        %4501 = vmatprep.subr.mxu0 0.0
        %4502 = vmatpush1.msra.mxu0 0.0
        %4503 = vmatprep.subr.mxu0 0.0
        %4504 = vmatpush1.msra.mxu0 0.0
        %4505 = vmatprep.subr.mxu0 0.0
        %4506 = vmatpush1.msra.mxu0 0.0
        %4507 = vmatprep.subr.mxu0 0.0
        %4508 = vmatpush1.msra.mxu0 0.0
        %4509 = vmatprep.subr.mxu0 0.0
        %4510 = vmatpush1.msra.mxu0 0.0
        %4511 = vmatprep.subr.mxu0 0.0
        %4512 = vmatpush1.msra.mxu0 0.0
        %4513 = vmatprep.subr.mxu0 0.0
        %4514 = vmatpush1.msra.mxu0 0.0
        %4515 = vmatprep.subr.mxu0 0.0
        %4516 = vmatpush1.msra.mxu0 %v4481
        %4517 = vmatprep.subr.mxu0 0.0
        %4518 = vmatpush1.msra.mxu0 %v4479
        %4519 = vmatprep.subr.mxu0 0.0
        %4520 = vmatpush2.msra.mxu0 0.0
        %4521 = vmatprep.subr.mxu0 0.0
        %4522 = vmatpush2.msra.mxu0 0.0
        %4523 = vmatprep.subr.mxu0 0.0
        %4524 = vmatpush2.msra.mxu0 0.0
        %4525 = vmatprep.subr.mxu0 0.0
        %4526 = vmatpush2.msra.mxu0 0.0
        %4527 = vmatprep.subr.mxu0 0.0
        %4528 = vmatpush2.msra.mxu0 0.0
        %4529 = vmatprep.subr.mxu0 0.0
        %4530 = vmatpush2.msra.mxu0 0.0
        %4531 = vmatprep.subr.mxu0 0.0
        %4532 = vmatpush2.msra.mxu0 0.0
        %4533 = vmatprep.subr.mxu0 0.0
        %4534 = vmatpush2.msra.mxu0 0.0
        %4535 = vmatprep.subr.mxu0 0.0
        %4536 = vmatpush2.msra.mxu0 0.0
        %4537 = vmatprep.subr.mxu0 0.0
        %4538 = vmatpush2.msra.mxu0 0.0
        %4539 = vmatprep.subr.mxu0 0.0
        %4540 = vmatpush2.msra.mxu0 0.0
        %4541 = vmatprep.subr.mxu0 0.0
        %4542 = vmatpush2.msra.mxu0 0.0
        %4543 = vmatprep.subr.mxu0 0.0
        %4544 = vmatpush2.msra.mxu0 0.0
        %4545 = vmatprep.subr.mxu0 0.0
        %4546 = vmatpush2.msra.mxu0 0.0
        %4547 = vmatprep.subr.mxu0 0.0
        %4548 = vmatpush2.msra.mxu0 0.0
        %4549 = vmatprep.subr.mxu0 0.0
        %4550 = vmatpush2.msra.mxu0 0.0
        %4551 = vmatprep.mubr.f32.mxu0 0.0
        %4552 = vmatmul.mubr.f32.gmra.mxu0 %v4485
        %v4553 = vpop.f32.mrf.mxu0
        %v4554 = vadd.f32 0.0, %v4553
        %v4555 = vpop.f32.mrf.mxu0
        %4556 = vdwg.mxu0
        %4557 = vrot.lane.b32.xlu0 %v3301, 104
        %v4558 = vpop.permute.xlu0 %4557
        %4559 = vrot.lane.b32.xlu0 %v3394, 104
        %v4560 = vpop.permute.xlu0 %4559
        %4561 = vrot.lane.b32.xlu0 %v3399, 104
        %v4562 = vpop.permute.xlu0 %4561
        %v4563 = vsel %vm1679, %v4558, 0
        %v4565 = vsel %vm1679, %v4560, 0
        %v4567 = vsel %vm1679, %v4562, 0
        %4569 = vmatprep.subr.mxu0 0.0
        %4570 = vmatpush1.xpose.msra.mxu0 0.0
        %4571 = vmatprep.subr.mxu0 0.0
        %4572 = vmatpush1.xpose.msra.mxu0 0.0
        %4573 = vmatprep.subr.mxu0 0.0
        %4574 = vmatpush1.xpose.msra.mxu0 0.0
        %4575 = vmatprep.subr.mxu0 0.0
        %4576 = vmatpush1.xpose.msra.mxu0 0.0
        %4577 = vmatprep.subr.mxu0 0.0
        %4578 = vmatpush1.xpose.msra.mxu0 0.0
        %4579 = vmatprep.subr.mxu0 0.0
        %4580 = vmatpush1.xpose.msra.mxu0 0.0
        %4581 = vmatprep.subr.mxu0 0.0
        %4582 = vmatpush1.xpose.msra.mxu0 0.0
        %4583 = vmatprep.subr.mxu0 0.0
        %4584 = vmatpush1.xpose.msra.mxu0 0.0
        %4585 = vmatprep.subr.mxu0 0.0
        %4586 = vmatpush1.xpose.msra.mxu0 0.0
        %4587 = vmatprep.subr.mxu0 0.0
        %4588 = vmatpush1.xpose.msra.mxu0 0.0
        %4589 = vmatprep.subr.mxu0 0.0
        %4590 = vmatpush1.xpose.msra.mxu0 0.0
        %4591 = vmatprep.subr.mxu0 0.0
        %4592 = vmatpush1.xpose.msra.mxu0 0.0
        %4593 = vmatprep.subr.mxu0 0.0
        %4594 = vmatpush1.xpose.msra.mxu0 0.0
        %4595 = vmatprep.subr.mxu0 0.0
        %4596 = vmatpush1.xpose.msra.mxu0 0.0
        %4597 = vmatprep.subr.mxu0 0.0
        %4598 = vmatpush1.xpose.msra.mxu0 %v4567
        %4599 = vmatprep.subr.mxu0 0.0
        %4600 = vmatpush1.xpose.msra.mxu0 %v4565
        %4601 = vmatprep.subr.mxu0 0.0
        %4602 = vmatpush2.xpose.msra.mxu0 0.0
        %4603 = vmatprep.subr.mxu0 0.0
        %4604 = vmatpush2.xpose.msra.mxu0 0.0
        %4605 = vmatprep.subr.mxu0 0.0
        %4606 = vmatpush2.xpose.msra.mxu0 0.0
        %4607 = vmatprep.subr.mxu0 0.0
        %4608 = vmatpush2.xpose.msra.mxu0 0.0
        %4609 = vmatprep.subr.mxu0 0.0
        %4610 = vmatpush2.xpose.msra.mxu0 0.0
        %4611 = vmatprep.subr.mxu0 0.0
        %4612 = vmatpush2.xpose.msra.mxu0 0.0
        %4613 = vmatprep.subr.mxu0 0.0
        %4614 = vmatpush2.xpose.msra.mxu0 0.0
        %4615 = vmatprep.subr.mxu0 0.0
        %4616 = vmatpush2.xpose.msra.mxu0 0.0
        %4617 = vmatprep.subr.mxu0 0.0
        %4618 = vmatpush2.xpose.msra.mxu0 0.0
        %4619 = vmatprep.subr.mxu0 0.0
        %4620 = vmatpush2.xpose.msra.mxu0 0.0
        %4621 = vmatprep.subr.mxu0 0.0
        %4622 = vmatpush2.xpose.msra.mxu0 0.0
        %4623 = vmatprep.subr.mxu0 0.0
        %4624 = vmatpush2.xpose.msra.mxu0 0.0
        %4625 = vmatprep.subr.mxu0 0.0
        %4626 = vmatpush2.xpose.msra.mxu0 0.0
        %4627 = vmatprep.subr.mxu0 0.0
        %4628 = vmatpush2.xpose.msra.mxu0 0.0
        %4629 = vmatprep.subr.mxu0 0.0
        %4630 = vmatpush2.xpose.msra.mxu0 0.0
        %4631 = vmatprep.subr.mxu0 0.0
        %4632 = vmatpush2.xpose.msra.mxu0 0.0
        %4633 = vmatprep.mubr.f32.mxu0 0.0
        %4634 = vmatmul.mubr.f32.gmra.mxu0 %v4563
        %v4635 = vpop.f32.mrf.mxu0
        %v4636 = vadd.f32 0.0, %v4635
        %v4637 = vpop.f32.mrf.mxu0
        %4638 = vdwg.mxu0
        %4639 = vrot.lane.b32.xlu0 %v3306, 104
        %v4640 = vpop.permute.xlu0 %4639
        %4641 = vrot.lane.b32.xlu0 %v3404, 104
        %v4642 = vpop.permute.xlu0 %4641
        %4643 = vrot.lane.b32.xlu0 %v3409, 104
        %v4644 = vpop.permute.xlu0 %4643
        %v4645 = vsel %vm1679, %v4640, 0
        %v4647 = vsel %vm1679, %v4642, 0
        %v4649 = vsel %vm1679, %v4644, 0
        %4651 = vmatprep.subr.mxu0 0.0
        %4652 = vmatpush1.xpose.msra.mxu0 0.0
        %4653 = vmatprep.subr.mxu0 0.0
        %4654 = vmatpush1.xpose.msra.mxu0 0.0
        %4655 = vmatprep.subr.mxu0 0.0
        %4656 = vmatpush1.xpose.msra.mxu0 0.0
        %4657 = vmatprep.subr.mxu0 0.0
        %4658 = vmatpush1.xpose.msra.mxu0 0.0
        %4659 = vmatprep.subr.mxu0 0.0
        %4660 = vmatpush1.xpose.msra.mxu0 0.0
        %4661 = vmatprep.subr.mxu0 0.0
        %4662 = vmatpush1.xpose.msra.mxu0 0.0
        %4663 = vmatprep.subr.mxu0 0.0
        %4664 = vmatpush1.xpose.msra.mxu0 0.0
        %4665 = vmatprep.subr.mxu0 0.0
        %4666 = vmatpush1.xpose.msra.mxu0 0.0
        %4667 = vmatprep.subr.mxu0 0.0
        %4668 = vmatpush1.xpose.msra.mxu0 0.0
        %4669 = vmatprep.subr.mxu0 0.0
        %4670 = vmatpush1.xpose.msra.mxu0 0.0
        %4671 = vmatprep.subr.mxu0 0.0
        %4672 = vmatpush1.xpose.msra.mxu0 0.0
        %4673 = vmatprep.subr.mxu0 0.0
        %4674 = vmatpush1.xpose.msra.mxu0 0.0
        %4675 = vmatprep.subr.mxu0 0.0
        %4676 = vmatpush1.xpose.msra.mxu0 0.0
        %4677 = vmatprep.subr.mxu0 0.0
        %4678 = vmatpush1.xpose.msra.mxu0 0.0
        %4679 = vmatprep.subr.mxu0 0.0
        %4680 = vmatpush1.xpose.msra.mxu0 %v4649
        %4681 = vmatprep.subr.mxu0 0.0
        %4682 = vmatpush1.xpose.msra.mxu0 %v4647
        %4683 = vmatprep.subr.mxu0 0.0
        %4684 = vmatpush2.xpose.msra.mxu0 0.0
        %4685 = vmatprep.subr.mxu0 0.0
        %4686 = vmatpush2.xpose.msra.mxu0 0.0
        %4687 = vmatprep.subr.mxu0 0.0
        %4688 = vmatpush2.xpose.msra.mxu0 0.0
        %4689 = vmatprep.subr.mxu0 0.0
        %4690 = vmatpush2.xpose.msra.mxu0 0.0
        %4691 = vmatprep.subr.mxu0 0.0
        %4692 = vmatpush2.xpose.msra.mxu0 0.0
        %4693 = vmatprep.subr.mxu0 0.0
        %4694 = vmatpush2.xpose.msra.mxu0 0.0
        %4695 = vmatprep.subr.mxu0 0.0
        %4696 = vmatpush2.xpose.msra.mxu0 0.0
        %4697 = vmatprep.subr.mxu0 0.0
        %4698 = vmatpush2.xpose.msra.mxu0 0.0
        %4699 = vmatprep.subr.mxu0 0.0
        %4700 = vmatpush2.xpose.msra.mxu0 0.0
        %4701 = vmatprep.subr.mxu0 0.0
        %4702 = vmatpush2.xpose.msra.mxu0 0.0
        %4703 = vmatprep.subr.mxu0 0.0
        %4704 = vmatpush2.xpose.msra.mxu0 0.0
        %4705 = vmatprep.subr.mxu0 0.0
        %4706 = vmatpush2.xpose.msra.mxu0 0.0
        %4707 = vmatprep.subr.mxu0 0.0
        %4708 = vmatpush2.xpose.msra.mxu0 0.0
        %4709 = vmatprep.subr.mxu0 0.0
        %4710 = vmatpush2.xpose.msra.mxu0 0.0
        %4711 = vmatprep.subr.mxu0 0.0
        %4712 = vmatpush2.xpose.msra.mxu0 0.0
        %4713 = vmatprep.subr.mxu0 0.0
        %4714 = vmatpush2.xpose.msra.mxu0 0.0
        %4715 = vmatprep.mubr.f32.mxu0 0.0
        %4716 = vmatmul.mubr.f32.gmra.mxu0 %v4645
        %v4717 = vpop.f32.mrf.mxu0
        %v4718 = vadd.f32 0.0, %v4717
        %v4719 = vpop.f32.mrf.mxu0
        %4720 = vdwg.mxu0
        %v4721 = vmul.f32 %v4636, 0.35355338
        %v4722 = vmul.f32 %v4718, 0.35355338
        %v4723 = vadd.f32 %v4721, %v3680
        %v4724 = vadd.f32 %v4722, %v3684
        %v4725 = vsel %vm3046, %v4723, -inf
        %4726 = vmax.xlane.f32.xlu0 %v4725
        %v4727 = vpop.xlane.xlu0 %4726
        %v4728 = vsel %vm3046, %v4724, -inf
        %4729 = vmax.xlane.f32.xlu0 %v4728
        %v4730 = vpop.xlane.xlu0 %4729
        %v4731 = vsub.f32 %v4723, %v4727
        %v4732 = vsub.f32 %v4724, %v4730
        %v4733 = vmul.f32 %v4731, 1.442695
        %v4734 = vpow.pop %v4733
        %v4735 = vmul.f32 %v4732, 1.442695
        %v4736 = vpow.pop %v4735
        %v4737 = vsel %vm3046, %v4734, 0.0
        %4738 = vadd.xlane.f32.xlu0 %v4737
        %v4739 = vpop.xlane.xlu0 %4738
        %v4740 = vsel %vm3046, %v4736, 0.0
        %4741 = vadd.xlane.f32.xlu0 %v4740
        %v4742 = vpop.xlane.xlu0 %4741
        %v4743 = vrcp.pop %v4739
        %v4744 = vrcp.pop %v4742
        %v4745 = vmul.f32 %v4734, %v4743
        %v4746 = vmul.f32 %v4736, %v4744
        %4747 = vrot.lane.b32.xlu0 %v3497, 104
        %v4748 = vpop.permute.xlu0 %4747
        %4749 = vrot.lane.b32.xlu0 %v3502, 104
        %v4750 = vpop.permute.xlu0 %4749
        %v4754 = vsel %vm3046, %v4745, 0
        %4756 = vmatprep.subr.mxu0 0.0
        %4757 = vmatpush1.msra.mxu0 0.0
        %4758 = vmatprep.subr.mxu0 0.0
        %4759 = vmatpush1.msra.mxu0 0.0
        %4760 = vmatprep.subr.mxu0 0.0
        %4761 = vmatpush1.msra.mxu0 0.0
        %4762 = vmatprep.subr.mxu0 0.0
        %4763 = vmatpush1.msra.mxu0 0.0
        %4764 = vmatprep.subr.mxu0 0.0
        %4765 = vmatpush1.msra.mxu0 0.0
        %4766 = vmatprep.subr.mxu0 0.0
        %4767 = vmatpush1.msra.mxu0 0.0
        %4768 = vmatprep.subr.mxu0 0.0
        %4769 = vmatpush1.msra.mxu0 0.0
        %4770 = vmatprep.subr.mxu0 0.0
        %4771 = vmatpush1.msra.mxu0 0.0
        %4772 = vmatprep.subr.mxu0 0.0
        %4773 = vmatpush1.msra.mxu0 0.0
        %4774 = vmatprep.subr.mxu0 0.0
        %4775 = vmatpush1.msra.mxu0 0.0
        %4776 = vmatprep.subr.mxu0 0.0
        %4777 = vmatpush1.msra.mxu0 0.0
        %4778 = vmatprep.subr.mxu0 0.0
        %4779 = vmatpush1.msra.mxu0 0.0
        %4780 = vmatprep.subr.mxu0 0.0
        %4781 = vmatpush1.msra.mxu0 0.0
        %4782 = vmatprep.subr.mxu0 0.0
        %4783 = vmatpush1.msra.mxu0 0.0
        %4784 = vmatprep.subr.mxu0 0.0
        %4785 = vmatpush1.msra.mxu0 %v4750
        %4786 = vmatprep.subr.mxu0 0.0
        %4787 = vmatpush1.msra.mxu0 %v4748
        %4788 = vmatprep.subr.mxu0 0.0
        %4789 = vmatpush2.msra.mxu0 0.0
        %4790 = vmatprep.subr.mxu0 0.0
        %4791 = vmatpush2.msra.mxu0 0.0
        %4792 = vmatprep.subr.mxu0 0.0
        %4793 = vmatpush2.msra.mxu0 0.0
        %4794 = vmatprep.subr.mxu0 0.0
        %4795 = vmatpush2.msra.mxu0 0.0
        %4796 = vmatprep.subr.mxu0 0.0
        %4797 = vmatpush2.msra.mxu0 0.0
        %4798 = vmatprep.subr.mxu0 0.0
        %4799 = vmatpush2.msra.mxu0 0.0
        %4800 = vmatprep.subr.mxu0 0.0
        %4801 = vmatpush2.msra.mxu0 0.0
        %4802 = vmatprep.subr.mxu0 0.0
        %4803 = vmatpush2.msra.mxu0 0.0
        %4804 = vmatprep.subr.mxu0 0.0
        %4805 = vmatpush2.msra.mxu0 0.0
        %4806 = vmatprep.subr.mxu0 0.0
        %4807 = vmatpush2.msra.mxu0 0.0
        %4808 = vmatprep.subr.mxu0 0.0
        %4809 = vmatpush2.msra.mxu0 0.0
        %4810 = vmatprep.subr.mxu0 0.0
        %4811 = vmatpush2.msra.mxu0 0.0
        %4812 = vmatprep.subr.mxu0 0.0
        %4813 = vmatpush2.msra.mxu0 0.0
        %4814 = vmatprep.subr.mxu0 0.0
        %4815 = vmatpush2.msra.mxu0 0.0
        %4816 = vmatprep.subr.mxu0 0.0
        %4817 = vmatpush2.msra.mxu0 0.0
        %4818 = vmatprep.subr.mxu0 0.0
        %4819 = vmatpush2.msra.mxu0 0.0
        %4820 = vmatprep.mubr.f32.mxu0 0.0
        %4821 = vmatmul.mubr.f32.gmra.mxu0 %v4754
        %v4822 = vpop.f32.mrf.mxu0
        %v4823 = vadd.f32 0.0, %v4822
        %v4824 = vpop.f32.mrf.mxu0
        %4825 = vdwg.mxu0
        %4826 = vrot.lane.b32.xlu0 %v3507, 104
        %v4827 = vpop.permute.xlu0 %4826
        %4828 = vrot.lane.b32.xlu0 %v3512, 104
        %v4829 = vpop.permute.xlu0 %4828
        %v4833 = vsel %vm3046, %v4746, 0
        %4835 = vmatprep.subr.mxu0 0.0
        %4836 = vmatpush1.msra.mxu0 0.0
        %4837 = vmatprep.subr.mxu0 0.0
        %4838 = vmatpush1.msra.mxu0 0.0
        %4839 = vmatprep.subr.mxu0 0.0
        %4840 = vmatpush1.msra.mxu0 0.0
        %4841 = vmatprep.subr.mxu0 0.0
        %4842 = vmatpush1.msra.mxu0 0.0
        %4843 = vmatprep.subr.mxu0 0.0
        %4844 = vmatpush1.msra.mxu0 0.0
        %4845 = vmatprep.subr.mxu0 0.0
        %4846 = vmatpush1.msra.mxu0 0.0
        %4847 = vmatprep.subr.mxu0 0.0
        %4848 = vmatpush1.msra.mxu0 0.0
        %4849 = vmatprep.subr.mxu0 0.0
        %4850 = vmatpush1.msra.mxu0 0.0
        %4851 = vmatprep.subr.mxu0 0.0
        %4852 = vmatpush1.msra.mxu0 0.0
        %4853 = vmatprep.subr.mxu0 0.0
        %4854 = vmatpush1.msra.mxu0 0.0
        %4855 = vmatprep.subr.mxu0 0.0
        %4856 = vmatpush1.msra.mxu0 0.0
        %4857 = vmatprep.subr.mxu0 0.0
        %4858 = vmatpush1.msra.mxu0 0.0
        %4859 = vmatprep.subr.mxu0 0.0
        %4860 = vmatpush1.msra.mxu0 0.0
        %4861 = vmatprep.subr.mxu0 0.0
        %4862 = vmatpush1.msra.mxu0 0.0
        %4863 = vmatprep.subr.mxu0 0.0
        %4864 = vmatpush1.msra.mxu0 %v4829
        %4865 = vmatprep.subr.mxu0 0.0
        %4866 = vmatpush1.msra.mxu0 %v4827
        %4867 = vmatprep.subr.mxu0 0.0
        %4868 = vmatpush2.msra.mxu0 0.0
        %4869 = vmatprep.subr.mxu0 0.0
        %4870 = vmatpush2.msra.mxu0 0.0
        %4871 = vmatprep.subr.mxu0 0.0
        %4872 = vmatpush2.msra.mxu0 0.0
        %4873 = vmatprep.subr.mxu0 0.0
        %4874 = vmatpush2.msra.mxu0 0.0
        %4875 = vmatprep.subr.mxu0 0.0
        %4876 = vmatpush2.msra.mxu0 0.0
        %4877 = vmatprep.subr.mxu0 0.0
        %4878 = vmatpush2.msra.mxu0 0.0
        %4879 = vmatprep.subr.mxu0 0.0
        %4880 = vmatpush2.msra.mxu0 0.0
        %4881 = vmatprep.subr.mxu0 0.0
        %4882 = vmatpush2.msra.mxu0 0.0
        %4883 = vmatprep.subr.mxu0 0.0
        %4884 = vmatpush2.msra.mxu0 0.0
        %4885 = vmatprep.subr.mxu0 0.0
        %4886 = vmatpush2.msra.mxu0 0.0
        %4887 = vmatprep.subr.mxu0 0.0
        %4888 = vmatpush2.msra.mxu0 0.0
        %4889 = vmatprep.subr.mxu0 0.0
        %4890 = vmatpush2.msra.mxu0 0.0
        %4891 = vmatprep.subr.mxu0 0.0
        %4892 = vmatpush2.msra.mxu0 0.0
        %4893 = vmatprep.subr.mxu0 0.0
        %4894 = vmatpush2.msra.mxu0 0.0
        %4895 = vmatprep.subr.mxu0 0.0
        %4896 = vmatpush2.msra.mxu0 0.0
        %4897 = vmatprep.subr.mxu0 0.0
        %4898 = vmatpush2.msra.mxu0 0.0
        %4899 = vmatprep.mubr.f32.mxu0 0.0
        %4900 = vmatmul.mubr.f32.gmra.mxu0 %v4833
        %v4901 = vpop.f32.mrf.mxu0
        %v4902 = vadd.f32 0.0, %v4901
        %v4903 = vpop.f32.mrf.mxu0
        %4904 = vdwg.mxu0
        %4907 = vrot.lane.b32.xlu0 %v4125, 8
        %v4908 = vpop.permute.xlu0 %4907
        %4909 = vrot.lane.b32.xlu0 %v4206, 8
        %v4910 = vpop.permute.xlu0 %4909
        %4915 = vrot.lane.b32.xlu0 %v4475, 16
        %v4916 = vpop.permute.xlu0 %4915
        %4917 = vrot.lane.b32.xlu0 %v4554, 16
        %v4918 = vpop.permute.xlu0 %4917
        %4923 = vrot.lane.b32.xlu0 %v4823, 24
        %v4924 = vpop.permute.xlu0 %4923
        %4925 = vrot.lane.b32.xlu0 %v4902, 24
        %v4926 = vpop.permute.xlu0 %4925
        %v4929 = vsel %vm1679, %v3781, %v4908
        %v4930 = vsel %vm1679, %v3854, %v4910
        %v4931 = vsel %vm3046, %v4929, %v4916
        %v4932 = vsel %vm3046, %v4930, %v4918
        %v4933 = vsel %vm3049, %v4931, %v4924
        %v4934 = vsel %vm3049, %v4932, %v4926
        %v4936 = vlaneseq
        %v4937 = vshrl.u32 %v4936, 7
        %v4938 = vsub.s32 0, %v4937
        %v4939 = vrot.slane %v3221, %v4938
        %v4942 = vsel %vm1423, %v4933, 0
        %v4945 = vsel %vm1423, %v4934, 0
        %4947 = vmatprep.subr.mxu0 0.0
        %4948 = vmatpush1.msra.mxu0 0.0
        %4949 = vmatprep.subr.mxu0 0.0
        %4950 = vmatpush1.msra.mxu0 0.0
        %4951 = vmatprep.subr.mxu0 0.0
        %4952 = vmatpush1.msra.mxu0 0.0
        %4953 = vmatprep.subr.mxu0 0.0
        %4954 = vmatpush1.msra.mxu0 0.0
        %4955 = vmatprep.subr.mxu0 0.0
        %4956 = vmatpush1.msra.mxu0 0.0
        %4957 = vmatprep.subr.mxu0 0.0
        %4958 = vmatpush1.msra.mxu0 0.0
        %4959 = vmatprep.subr.mxu0 0.0
        %4960 = vmatpush1.msra.mxu0 0.0
        %4961 = vmatprep.subr.mxu0 0.0
        %4962 = vmatpush1.msra.mxu0 0.0
        %4963 = vmatprep.subr.mxu0 0.0
        %4964 = vmatpush1.msra.mxu0 0.0
        %4965 = vmatprep.subr.mxu0 0.0
        %4966 = vmatpush1.msra.mxu0 0.0
        %4967 = vmatprep.subr.mxu0 0.0
        %4968 = vmatpush1.msra.mxu0 0.0
        %4969 = vmatprep.subr.mxu0 0.0
        %4970 = vmatpush1.msra.mxu0 0.0
        %4971 = vmatprep.subr.mxu0 0.0
        %4972 = vmatpush1.msra.mxu0 %v3220
        %4973 = vmatprep.subr.mxu0 0.0
        %4974 = vmatpush1.msra.mxu0 %v3219
        %4975 = vmatprep.subr.mxu0 0.0
        %4976 = vmatpush1.msra.mxu0 %v3218
        %4977 = vmatprep.subr.mxu0 0.0
        %4978 = vmatpush1.msra.mxu0 %v3217
        %4979 = vmatprep.subr.mxu0 0.0
        %4980 = vmatpush2.msra.mxu0 0.0
        %4981 = vmatprep.subr.mxu0 0.0
        %4982 = vmatpush2.msra.mxu0 0.0
        %4983 = vmatprep.subr.mxu0 0.0
        %4984 = vmatpush2.msra.mxu0 0.0
        %4985 = vmatprep.subr.mxu0 0.0
        %4986 = vmatpush2.msra.mxu0 0.0
        %4987 = vmatprep.subr.mxu0 0.0
        %4988 = vmatpush2.msra.mxu0 0.0
        %4989 = vmatprep.subr.mxu0 0.0
        %4990 = vmatpush2.msra.mxu0 0.0
        %4991 = vmatprep.subr.mxu0 0.0
        %4992 = vmatpush2.msra.mxu0 0.0
        %4993 = vmatprep.subr.mxu0 0.0
        %4994 = vmatpush2.msra.mxu0 0.0
        %4995 = vmatprep.subr.mxu0 0.0
        %4996 = vmatpush2.msra.mxu0 0.0
        %4997 = vmatprep.subr.mxu0 0.0
        %4998 = vmatpush2.msra.mxu0 0.0
        %4999 = vmatprep.subr.mxu0 0.0
        %5000 = vmatpush2.msra.mxu0 0.0
        %5001 = vmatprep.subr.mxu0 0.0
        %5002 = vmatpush2.msra.mxu0 0.0
        %5003 = vmatprep.subr.mxu0 0.0
        %5004 = vmatpush2.msra.mxu0 0.0
        %5005 = vmatprep.subr.mxu0 0.0
        %5006 = vmatpush2.msra.mxu0 0.0
        %5007 = vmatprep.subr.mxu0 0.0
        %5008 = vmatpush2.msra.mxu0 0.0
        %5009 = vmatprep.subr.mxu0 0.0
        %5010 = vmatpush2.msra.mxu0 0.0
        %5011 = vmatprep.mubr.f32.mxu0 0.0
        %5012 = vmatmul.mubr.f32.gmra.mxu0 %v4942
        %v5013 = vpop.f32.mrf.mxu0
        %v5014 = vadd.f32 %v4939, %v5013
        %v5015 = vpop.f32.mrf.mxu0
        %5016 = vmatprep.mubr.f32.mxu0 0.0
        %5017 = vmatmul.mubr.f32.gmra.mxu0 %v4945
        %v5018 = vpop.f32.mrf.mxu0
        %v5019 = vadd.f32 %v4939, %v5018
        %v5020 = vpop.f32.mrf.mxu0
        %5021 = vdwg.mxu0
        %v5022 = vadd.f32 %v1383, %v5014
        %v5023 = vadd.f32 %v1384, %v5019
        %v5024 = vld [vmem:[%s61] sm:$0x1]
        %v5025 = vld [vmem:[%s63] sm:$0x1]
        %v5026 = vsel %vm1423, %v5022, 0.0
        %5027 = vadd.xlane.f32.xlu0 %v5026
        %v5028 = vpop.xlane.xlu0 %5027
        %v5029 = vsel %vm1423, %v5023, 0.0
        %5030 = vadd.xlane.f32.xlu0 %v5029
        %v5031 = vpop.xlane.xlu0 %5030
        %v5032 = vmul.f32 %v5028, %v3147
        %v5033 = vmul.f32 %v5031, %v3147
        %v5034 = vsub.f32 %v5022, %v5032
        %v5035 = vsub.f32 %v5023, %v5033
        %v5036 = vmul.f32 %v5034, %v5034
        %v5037 = vmul.f32 %v5035, %v5035
        %v5038 = vsel %vm1423, %v5036, 0.0
        %5039 = vadd.xlane.f32.xlu0 %v5038
        %v5040 = vpop.xlane.xlu0 %5039
        %v5041 = vsel %vm1423, %v5037, 0.0
        %5042 = vadd.xlane.f32.xlu0 %v5041
        %v5043 = vpop.xlane.xlu0 %5042
        %v5044 = vmul.f32 %v5040, %v3147
        %v5045 = vmul.f32 %v5043, %v3147
        %v5046 = vadd.f32 %v5044, 1e-05
        %v5047 = vadd.f32 %v5045, 1e-05
        %v5048 = vrsqrt.pop %v5046
        %v5049 = vrsqrt.pop %v5047
        %v5050 = vmul.f32 %v5034, %v5048
        %v5051 = vmul.f32 %v5035, %v5049
        %v5053 = vlaneseq
        %v5054 = vshrl.u32 %v5053, 7
        %v5055 = vsub.s32 0, %v5054
        %v5056 = vrot.slane %v5024, %v5055
        %v5058 = vmul.f32 %v5050, %v5056
        %v5059 = vmul.f32 %v5051, %v5056
        %v5061 = vlaneseq
        %v5062 = vshrl.u32 %v5061, 7
        %v5063 = vsub.s32 0, %v5062
        %v5064 = vrot.slane %v5025, %v5063
        %v5066 = vadd.f32 %v5058, %v5064
        %v5067 = vadd.f32 %v5059, %v5064
        %v5068 = vld [vmem:[#allocation22] sm:$0xff]
        %v5069 = vld [vmem:[#allocation22 + $0x8] sm:$0xff]
        %v5070 = vld [vmem:[#allocation22 + $0x10] sm:$0xff]
        %v5071 = vld [vmem:[#allocation22 + $0x18] sm:$0xff]
        %v5072 = vld [vmem:[%s51] sm:$0x1]
        %v5074 = vlaneseq
        %v5075 = vshrl.u32 %v5074, 7
        %v5076 = vsub.s32 0, %v5075
        %v5077 = vrot.slane %v5072, %v5076
        %v5080 = vsel %vm1423, %v5066, 0
        %v5083 = vsel %vm1423, %v5067, 0
        %5085 = vmatprep.subr.mxu0 0.0
        %5086 = vmatpush1.msra.mxu0 0.0
        %5087 = vmatprep.subr.mxu0 0.0
        %5088 = vmatpush1.msra.mxu0 0.0
        %5089 = vmatprep.subr.mxu0 0.0
        %5090 = vmatpush1.msra.mxu0 0.0
        %5091 = vmatprep.subr.mxu0 0.0
        %5092 = vmatpush1.msra.mxu0 0.0
        %5093 = vmatprep.subr.mxu0 0.0
        %5094 = vmatpush1.msra.mxu0 0.0
        %5095 = vmatprep.subr.mxu0 0.0
        %5096 = vmatpush1.msra.mxu0 0.0
        %5097 = vmatprep.subr.mxu0 0.0
        %5098 = vmatpush1.msra.mxu0 0.0
        %5099 = vmatprep.subr.mxu0 0.0
        %5100 = vmatpush1.msra.mxu0 0.0
        %5101 = vmatprep.subr.mxu0 0.0
        %5102 = vmatpush1.msra.mxu0 0.0
        %5103 = vmatprep.subr.mxu0 0.0
        %5104 = vmatpush1.msra.mxu0 0.0
        %5105 = vmatprep.subr.mxu0 0.0
        %5106 = vmatpush1.msra.mxu0 0.0
        %5107 = vmatprep.subr.mxu0 0.0
        %5108 = vmatpush1.msra.mxu0 0.0
        %5109 = vmatprep.subr.mxu0 0.0
        %5110 = vmatpush1.msra.mxu0 %v5071
        %5111 = vmatprep.subr.mxu0 0.0
        %5112 = vmatpush1.msra.mxu0 %v5070
        %5113 = vmatprep.subr.mxu0 0.0
        %5114 = vmatpush1.msra.mxu0 %v5069
        %5115 = vmatprep.subr.mxu0 0.0
        %5116 = vmatpush1.msra.mxu0 %v5068
        %5117 = vmatprep.subr.mxu0 0.0
        %5118 = vmatpush2.msra.mxu0 0.0
        %5119 = vmatprep.subr.mxu0 0.0
        %5120 = vmatpush2.msra.mxu0 0.0
        %5121 = vmatprep.subr.mxu0 0.0
        %5122 = vmatpush2.msra.mxu0 0.0
        %5123 = vmatprep.subr.mxu0 0.0
        %5124 = vmatpush2.msra.mxu0 0.0
        %5125 = vmatprep.subr.mxu0 0.0
        %5126 = vmatpush2.msra.mxu0 0.0
        %5127 = vmatprep.subr.mxu0 0.0
        %5128 = vmatpush2.msra.mxu0 0.0
        %5129 = vmatprep.subr.mxu0 0.0
        %5130 = vmatpush2.msra.mxu0 0.0
        %5131 = vmatprep.subr.mxu0 0.0
        %5132 = vmatpush2.msra.mxu0 0.0
        %5133 = vmatprep.subr.mxu0 0.0
        %5134 = vmatpush2.msra.mxu0 0.0
        %5135 = vmatprep.subr.mxu0 0.0
        %5136 = vmatpush2.msra.mxu0 0.0
        %5137 = vmatprep.subr.mxu0 0.0
        %5138 = vmatpush2.msra.mxu0 0.0
        %5139 = vmatprep.subr.mxu0 0.0
        %5140 = vmatpush2.msra.mxu0 0.0
        %5141 = vmatprep.subr.mxu0 0.0
        %5142 = vmatpush2.msra.mxu0 0.0
        %5143 = vmatprep.subr.mxu0 0.0
        %5144 = vmatpush2.msra.mxu0 0.0
        %5145 = vmatprep.subr.mxu0 0.0
        %5146 = vmatpush2.msra.mxu0 0.0
        %5147 = vmatprep.subr.mxu0 0.0
        %5148 = vmatpush2.msra.mxu0 0.0
        %5149 = vmatprep.mubr.f32.mxu0 0.0
        %5150 = vmatmul.mubr.f32.gmra.mxu0 %v5080
        %v5151 = vpop.f32.mrf.mxu0
        %v5152 = vadd.f32 %v5077, %v5151
        %v5153 = vpop.f32.mrf.mxu0
        %5154 = vmatprep.mubr.f32.mxu0 0.0
        %5155 = vmatmul.mubr.f32.gmra.mxu0 %v5083
        %v5156 = vpop.f32.mrf.mxu0
        %v5157 = vadd.f32 %v5077, %v5156
        %v5158 = vpop.f32.mrf.mxu0
        %5159 = vdwg.mxu0
        %v5160 = vmax.f32 %v5152, 0.0
        %v5161 = vmax.f32 %v5157, 0.0
        %v5162 = vld [vmem:[%s53] sm:$0xff]
        %v5163 = vld [vmem:[%s53 + $0x8] sm:$0xff]
        %v5164 = vld [vmem:[%s53 + $0x10] sm:$0xff]
        %v5165 = vld [vmem:[%s53 + $0x18] sm:$0xff]
        %v5166 = vld [vmem:[%s53 + $0x20] sm:$0xff]
        %v5167 = vld [vmem:[%s53 + $0x28] sm:$0xff]
        %v5168 = vld [vmem:[%s53 + $0x30] sm:$0xff]
        %v5169 = vld [vmem:[%s53 + $0x38] sm:$0xff]
        %v5170 = vld [vmem:[%s55] sm:$0x1]
        %v5172 = vlaneseq
        %v5173 = vshrl.u32 %v5172, 7
        %v5174 = vsub.s32 0, %v5173
        %v5175 = vrot.slane %v5170, %v5174
        %vm5177 = vcmask 523264
        %v5179 = vsel %vm5177, %v5160, 0
        %v5182 = vsel %vm5177, %v5161, 0
        %5184 = vmatprep.subr.mxu0 0.0
        %5185 = vmatpush1.msra.mxu0 0.0
        %5186 = vmatprep.subr.mxu0 0.0
        %5187 = vmatpush1.msra.mxu0 0.0
        %5188 = vmatprep.subr.mxu0 0.0
        %5189 = vmatpush1.msra.mxu0 0.0
        %5190 = vmatprep.subr.mxu0 0.0
        %5191 = vmatpush1.msra.mxu0 0.0
        %5192 = vmatprep.subr.mxu0 0.0
        %5193 = vmatpush1.msra.mxu0 0.0
        %5194 = vmatprep.subr.mxu0 0.0
        %5195 = vmatpush1.msra.mxu0 0.0
        %5196 = vmatprep.subr.mxu0 0.0
        %5197 = vmatpush1.msra.mxu0 0.0
        %5198 = vmatprep.subr.mxu0 0.0
        %5199 = vmatpush1.msra.mxu0 0.0
        %5200 = vmatprep.subr.mxu0 0.0
        %5201 = vmatpush1.msra.mxu0 %v5169
        %5202 = vmatprep.subr.mxu0 0.0
        %5203 = vmatpush1.msra.mxu0 %v5168
        %5204 = vmatprep.subr.mxu0 0.0
        %5205 = vmatpush1.msra.mxu0 %v5167
        %5206 = vmatprep.subr.mxu0 0.0
        %5207 = vmatpush1.msra.mxu0 %v5166
        %5208 = vmatprep.subr.mxu0 0.0
        %5209 = vmatpush1.msra.mxu0 %v5165
        %5210 = vmatprep.subr.mxu0 0.0
        %5211 = vmatpush1.msra.mxu0 %v5164
        %5212 = vmatprep.subr.mxu0 0.0
        %5213 = vmatpush1.msra.mxu0 %v5163
        %5214 = vmatprep.subr.mxu0 0.0
        %5215 = vmatpush1.msra.mxu0 %v5162
        %5216 = vmatprep.subr.mxu0 0.0
        %5217 = vmatpush2.msra.mxu0 0.0
        %5218 = vmatprep.subr.mxu0 0.0
        %5219 = vmatpush2.msra.mxu0 0.0
        %5220 = vmatprep.subr.mxu0 0.0
        %5221 = vmatpush2.msra.mxu0 0.0
        %5222 = vmatprep.subr.mxu0 0.0
        %5223 = vmatpush2.msra.mxu0 0.0
        %5224 = vmatprep.subr.mxu0 0.0
        %5225 = vmatpush2.msra.mxu0 0.0
        %5226 = vmatprep.subr.mxu0 0.0
        %5227 = vmatpush2.msra.mxu0 0.0
        %5228 = vmatprep.subr.mxu0 0.0
        %5229 = vmatpush2.msra.mxu0 0.0
        %5230 = vmatprep.subr.mxu0 0.0
        %5231 = vmatpush2.msra.mxu0 0.0
        %5232 = vmatprep.subr.mxu0 0.0
        %5233 = vmatpush2.msra.mxu0 0.0
        %5234 = vmatprep.subr.mxu0 0.0
        %5235 = vmatpush2.msra.mxu0 0.0
        %5236 = vmatprep.subr.mxu0 0.0
        %5237 = vmatpush2.msra.mxu0 0.0
        %5238 = vmatprep.subr.mxu0 0.0
        %5239 = vmatpush2.msra.mxu0 0.0
        %5240 = vmatprep.subr.mxu0 0.0
        %5241 = vmatpush2.msra.mxu0 0.0
        %5242 = vmatprep.subr.mxu0 0.0
        %5243 = vmatpush2.msra.mxu0 0.0
        %5244 = vmatprep.subr.mxu0 0.0
        %5245 = vmatpush2.msra.mxu0 0.0
        %5246 = vmatprep.subr.mxu0 0.0
        %5247 = vmatpush2.msra.mxu0 0.0
        %5248 = vmatprep.mubr.f32.mxu0 0.0
        %5249 = vmatmul.mubr.f32.gmra.mxu0 %v5179
        %v5250 = vpop.f32.mrf.mxu0
        %v5251 = vadd.f32 %v5175, %v5250
        %v5252 = vpop.f32.mrf.mxu0
        %5253 = vmatprep.mubr.f32.mxu0 0.0
        %5254 = vmatmul.mubr.f32.gmra.mxu0 %v5182
        %v5255 = vpop.f32.mrf.mxu0
        %v5256 = vadd.f32 %v5175, %v5255
        %v5257 = vpop.f32.mrf.mxu0
        %5258 = vdwg.mxu0
        %v5259 = vadd.f32 %v5066, %v5251
        %v5260 = vadd.f32 %v5067, %v5256
        %v5261 = vld [vmem:[%s65] sm:$0x1]
        %v5262 = vld [vmem:[%s67] sm:$0x1]
        %v5263 = vsel %vm1423, %v5259, 0.0
        %5264 = vadd.xlane.f32.xlu0 %v5263
        %v5265 = vpop.xlane.xlu0 %5264
        %v5266 = vsel %vm1423, %v5260, 0.0
        %5267 = vadd.xlane.f32.xlu0 %v5266
        %v5268 = vpop.xlane.xlu0 %5267
        %v5269 = vmul.f32 %v5265, %v3147
        %v5270 = vmul.f32 %v5268, %v3147
        %v5271 = vsub.f32 %v5259, %v5269
        %v5272 = vsub.f32 %v5260, %v5270
        %v5273 = vmul.f32 %v5271, %v5271
        %v5274 = vmul.f32 %v5272, %v5272
        %v5275 = vsel %vm1423, %v5273, 0.0
        %5276 = vadd.xlane.f32.xlu0 %v5275
        %v5277 = vpop.xlane.xlu0 %5276
        %v5278 = vsel %vm1423, %v5274, 0.0
        %5279 = vadd.xlane.f32.xlu0 %v5278
        %v5280 = vpop.xlane.xlu0 %5279
        %v5281 = vmul.f32 %v5277, %v3147
        %v5282 = vmul.f32 %v5280, %v3147
        %v5283 = vadd.f32 %v5281, 1e-05
        %v5284 = vadd.f32 %v5282, 1e-05
        %v5285 = vrsqrt.pop %v5283
        %v5286 = vrsqrt.pop %v5284
        %v5287 = vmul.f32 %v5271, %v5285
        %v5288 = vmul.f32 %v5272, %v5286
        %v5290 = vlaneseq
        %v5291 = vshrl.u32 %v5290, 7
        %v5292 = vsub.s32 0, %v5291
        %v5293 = vrot.slane %v5261, %v5292
        %v5295 = vmul.f32 %v5287, %v5293
        %v5296 = vmul.f32 %v5288, %v5293
        %v5298 = vlaneseq
        %v5299 = vshrl.u32 %v5298, 7
        %v5300 = vsub.s32 0, %v5299
        %v5301 = vrot.slane %v5262, %v5300
        %v5303 = vadd.f32 %v5295, %v5301
        %v5304 = vadd.f32 %v5296, %v5301
        %5305 = vst.msk [vmem:[%s1343] sm:$0xff] %vm1423, %v5303
        %5306 = vst.msk [vmem:[%s1343 + $0x8] sm:$0xff] %vm1423, %v5304
        %s5307 = sand.u32 %s856, 1
        %s5308 = scalar_lea.sflag [#allocation4], %s5307
        %s5309 = sand.u32 %s856, 1
        %s5310 = smul.addr %s5309, 16
        %s5311 = scalar_lea.vmem [#allocation23], %s5310
        // Predicated region
        $region209: #{tpu_custom_call.1} parent=155 // pred_check
          %p5312 = pneg %p866
        $region210: #{tpu_custom_call.1} parent=155 // pred_check_branch
          %5314 = sbr.rel (%p5312) target = $region212
        $region211: #{tpu_custom_call.1} parent=155 // pred_region
          %s5315 = smul.u32 2, %s94
          %s5317 = ssub.s32 256, 256
          %5318 = vsyncadd %s5308, %s5317
          %s5319 = smul.addr %s5315, 128
          %s5320 = scalar_lea.hbm %s69, %s5319
          %s5321 = sshll.u32 %s5311, 4
          %s5322 = int_to_ptr.vmem [resolvable:$true] %s5321
          %5327 = dma.vmem_to_hbm [thread:$0]  %s5322, 256, %s5320, %s5308, 128, 128, 8
        $region212: #{tpu_custom_call.1} parent=155 // pred_fallthru
          _
      $region156: #{tpu_custom_call.1} parent=5 // pred_fallthru
        _
      %p5328 = scmp.le.s32.totalorder 2, %s89
      // Predicated region
      $region213: #{tpu_custom_call.1} parent=5 // pred_check
        %p5329 = pneg %p5328
      $region214: #{tpu_custom_call.1} parent=5 // pred_check_branch
        %5331 = sbr.rel (%p5329) target = $region216
      $region215: #{tpu_custom_call.1} parent=5 // pred_region
        %s5332 = ssub.s32 %s89, 2
        // Predicated region
        $region217: #{tpu_custom_call.1} parent=215 // pred_check
          %p5333 = pneg %p872
        $region218: #{tpu_custom_call.1} parent=215 // pred_check_branch
          %5335 = sbr.rel (%p5333) target = $region220
        $region219: #{tpu_custom_call.1} parent=215 // pred_region
          %s5336 = sand.u32 %s857, 1
          %s5337 = scalar_lea.sflag [#allocation4], %s5336
          %s5338 = sand.u32 %s857, 1
          %s5339 = smul.addr %s5338, 16
          %s5340 = scalar_lea.vmem [#allocation23], %s5339
          %5341 = dma.done %s5337, 256
        $region220: #{tpu_custom_call.1} parent=215 // pred_fallthru
          _
      $region216: #{tpu_custom_call.1} parent=5 // pred_fallthru
        _
    $region6: #{tpu_custom_call.1} parent=1 // loop_footer
      %s93 = sadd.s32 1, %s89
    $region7: #{tpu_custom_call.1} parent=1 // loop_footer_branch
      %88 = sbr.rel target = $region3
    $region8: #{tpu_custom_call.1} parent=1 // loop_exit
      _
    %5342 = vsyncpa [#allocation3], 1
    %s5343 = scalar_lea.sflag [#allocation3], 1
    %5344 = vsyncpa %s5343, 1
    %5345 = vsyncpa [#allocation6], 1
    %s5346 = scalar_lea.sflag [#allocation6], 1
    %5347 = vsyncpa %s5346, 1
    %5348 = vsyncpa [#allocation9], 1
    %5349 = vsyncpa [#allocation12], 1
    %5350 = vsyncpa [#allocation15], 1
    %5351 = vsyncpa [#allocation18], 1
    %5352 = vsyncpa [#allocation21], 1
    %5353 = vsyncpa [#allocation4], 1
    %s5354 = scalar_lea.sflag [#allocation4], 1
    %5355 = vsyncpa %s5354, 1

</llo_original>
